<compile_context>
chip_gen: v7x
topology: tpu7x:2x2x1
jax: 0.10.0
libtpu: 0.0.40
codegen_flags: <defaults>
</compile_context>

<pallas_src>
import math
import functools

import jax
import jax.numpy as jnp
from jax.experimental import pallas as pl
from jax.experimental.pallas import tpu as pltpu


# ---------------------------------------------------------------------------
# Fused forward kernel (embedding + all encoder blocks + classifier)
# ---------------------------------------------------------------------------

def fused_forward_kernel(
        valid_ref,                                    # SMEM (B,) int32
        x_in_ref, w_emb_ref, b_emb_ref, pos_ref,      # shared
        w_qkv_ref, w_o_ref, ln1w_ref, ln1b_ref,       # stacked (L, ...)
        w1_ref, b1_ref, w2_ref, b2_ref, ln2w_ref, ln2b_ref,
        fcw_ref, fcb_ref,                             # classifier (lane-padded)
        out_ref,                                      # (B, Cpad)
        *, batch, seq, hidden, num_heads, num_layers, eps):
    B, S, H, nh = batch, seq, hidden, num_heads
    hd = H // nh
    scale = 1.0 / math.sqrt(hd)

    # --- embedding: relu(X @ W_emb + b) * sqrt(H) + positional encoding -----
    x_in = x_in_ref[...].astype(jnp.float32).reshape(B * S, H)
    x = jnp.dot(x_in, w_emb_ref[...], preferred_element_type=jnp.float32) + b_emb_ref[...]
    x = jnp.maximum(x, 0.0) * math.sqrt(H)
    x = x + pos_ref[...]                                                 # (B*S, H)

    # --- key mask (d2l masked_softmax, fill -1e6); built once, reused -------
    # fused batch dim ordering is (head, batch): index = h*B + b
    key_idx3 = jax.lax.broadcasted_iota(jnp.int32, (nh * B, S, S), 2)
    valid3 = jnp.concatenate(
        [jnp.full((1, S, S), valid_ref[b], jnp.int32)
         for _h in range(nh) for b in range(B)], axis=0)                 # (nh*B, S, S)
    key_mask = key_idx3 < valid3

    # --- encoder blocks (static unroll, weights indexed by layer) -----------
    for l in range(num_layers):
        # Fused Q/K/V projection: one (B*S, H) @ (H, 3H) matmul (use_bias=False).
        qkv = jnp.dot(x, w_qkv_ref[l], preferred_element_type=jnp.float32)

        def gather_heads(base):
            # (B*S, H) lane block -> (nh*B, S, hd), leading index = h*B + b
            parts = []
            for h in range(nh):
                c0 = base + h * hd
                parts.append(qkv[:, c0:c0 + hd].reshape(B, S, hd))
            return jnp.concatenate(parts, axis=0)

        q = gather_heads(0)
        k = gather_heads(H)
        v = gather_heads(2 * H)

        # Batched scores / softmax / context over the fused (head, batch) dim.
        sc = jnp.einsum('bqd,bkd->bqk', q, k,
                        preferred_element_type=jnp.float32) * scale      # (nh*B, S, S)
        sc = jnp.where(key_mask, sc, -1e6)
        sc = sc - jnp.max(sc, axis=-1, keepdims=True)
        p = jnp.exp(sc)
        p = p * pl.reciprocal(jnp.sum(p, axis=-1, keepdims=True), approx=True)
        ctx = jnp.einsum('bqk,bkd->bqd', p, v,
                         preferred_element_type=jnp.float32)             # (nh*B, S, hd)

        # Back to (B*S, H): heads concatenated along the feature dim.
        ctx2d = jnp.concatenate(
            [ctx[h * B:(h + 1) * B].reshape(B * S, hd) for h in range(nh)], axis=1)
        attn = jnp.dot(ctx2d, w_o_ref[l], preferred_element_type=jnp.float32)

        # AddNorm 1: LayerNorm over the joint (S, H) slab of each batch element.
        y = x + attn
        ln1w = ln1w_ref[l]
        ln1b = ln1b_ref[l]
        yn_rows = []
        for b in range(B):
            slab = y[b * S:(b + 1) * S, :]
            m = jnp.mean(slab)
            var = jnp.mean((slab - m) ** 2)
            yn_rows.append((slab - m) * jax.lax.rsqrt(var + eps) * ln1w + ln1b)
        yn = jnp.concatenate(yn_rows, axis=0)

        # Position-wise FFN on the whole (B*S, H) slab.
        hmid = jnp.dot(yn, w1_ref[l], preferred_element_type=jnp.float32) + b1_ref[l]
        hmid = jnp.maximum(hmid, 0.0)
        f = jnp.dot(hmid, w2_ref[l], preferred_element_type=jnp.float32) + b2_ref[l]

        # AddNorm 2
        z = yn + f
        ln2w = ln2w_ref[l]
        ln2b = ln2b_ref[l]
        zn_rows = []
        for b in range(B):
            slab = z[b * S:(b + 1) * S, :]
            m = jnp.mean(slab)
            var = jnp.mean((slab - m) ** 2)
            zn_rows.append((slab - m) * jax.lax.rsqrt(var + eps) * ln2w + ln2b)
        x = jnp.concatenate(zn_rows, axis=0)

    # --- classifier: softmax(flatten(X) @ W_fc + b_fc), one big matmul ------
    # flatten(start_dim=1): row b = [x[b,0,:], x[b,1,:], ..., x[b,S-1,:]]
    flat_rows = []
    for b in range(B):
        flat_rows.append(jnp.concatenate(
            [x[b * S + s:b * S + s + 1, :] for s in range(S)], axis=1))  # (1, S*H)
    x_flat = jnp.concatenate(flat_rows, axis=0)                          # (B, S*H)

    logits = (jnp.dot(x_flat, fcw_ref[...], preferred_element_type=jnp.float32)
              + fcb_ref[...])                                            # (B, Cpad)
    logits = logits - jnp.max(logits, axis=-1, keepdims=True)
    e = jnp.exp(logits)              # padded lanes carry -1e30 bias -> exp == 0
    probs = e * pl.reciprocal(jnp.sum(e, axis=-1, keepdims=True), approx=True)
    out_ref[...] = probs.astype(out_ref.dtype)


# ---------------------------------------------------------------------------
# Host-side helpers
# ---------------------------------------------------------------------------

def positional_encoding(seq_len, num_hiddens):
    """d2l.PositionalEncoding table P[:seq_len, :num_hiddens]."""
    pos = jnp.arange(seq_len, dtype=jnp.float32)[:, None]
    denom = jnp.power(10000.0,
                      jnp.arange(0, num_hiddens, 2, dtype=jnp.float32) / num_hiddens)
    angles = pos / denom
    p = jnp.zeros((seq_len, num_hiddens), jnp.float32)
    p = p.at[:, 0::2].set(jnp.sin(angles))
    p = p.at[:, 1::2].set(jnp.cos(angles))
    return p


def init_params(key, *, temporal_seq_len, packet_len, num_layers, num_classes):
    """Synthetic deterministic parameters; per-layer weights stacked on dim 0."""
    H, S = packet_len, temporal_seq_len
    keys = jax.random.split(key, 2 + num_layers)

    def lin(k_, fan_in, fan_out):
        return (jax.random.normal(k_, (fan_in, fan_out), jnp.float32)
                * (1.0 / math.sqrt(fan_in)))

    wqkv, wo, w1, b1, w2, b2 = [], [], [], [], [], []
    ln1w, ln1b, ln2w, ln2b = [], [], [], []
    for i in range(num_layers):
        lk = jax.random.split(keys[2 + i], 6)
        wqkv.append(jnp.concatenate(
            [lin(lk[0], H, H), lin(lk[1], H, H), lin(lk[2], H, H)], axis=1))
        wo.append(lin(lk[3], H, H))
        w1.append(lin(lk[4], H, 2 * H)); b1.append(jnp.zeros((1, 2 * H), jnp.float32))
        w2.append(lin(lk[5], 2 * H, H)); b2.append(jnp.zeros((1, H), jnp.float32))
        ln1w.append(jnp.ones((S, H), jnp.float32)); ln1b.append(jnp.zeros((S, H), jnp.float32))
        ln2w.append(jnp.ones((S, H), jnp.float32)); ln2b.append(jnp.zeros((S, H), jnp.float32))

    return {
        "w_emb": lin(keys[0], H, H),
        "b_emb": jnp.zeros((1, H), jnp.float32),
        "fc_w": lin(keys[1], S * H, num_classes),
        "fc_b": jnp.zeros((num_classes,), jnp.float32),
        "w_qkv": jnp.stack(wqkv), "w_o": jnp.stack(wo),
        "ln1_w": jnp.stack(ln1w), "ln1_b": jnp.stack(ln1b),
        "ffn_w1": jnp.stack(w1), "ffn_b1": jnp.stack(b1),
        "ffn_w2": jnp.stack(w2), "ffn_b2": jnp.stack(b2),
        "ln2_w": jnp.stack(ln2w), "ln2_b": jnp.stack(ln2b),
    }


def prepare_inference(params, *, batch, seq, hidden, num_classes):
    """One-time host prep: tiled positional table, lane-padded classifier weights."""
    c_pad = ((num_classes + 127) // 128) * 128
    pos_tiled = jnp.tile(positional_encoding(seq, hidden), (batch, 1))   # (B*S, H)
    fc_w_pad = jnp.zeros((seq * hidden, c_pad), jnp.float32)
    fc_w_pad = fc_w_pad.at[:, :num_classes].set(params["fc_w"])
    fc_b_pad = jnp.full((1, c_pad), -1e30, jnp.float32)
    fc_b_pad = fc_b_pad.at[0, :num_classes].set(params["fc_b"])
    return {"pos_tiled": pos_tiled, "fc_w_pad": fc_w_pad, "fc_b_pad": fc_b_pad,
            "c_pad": c_pad}


def traffic_scope_temporal_forward(temporal_data, temporal_valid_len, params, prep,
                                   *, num_heads, num_classes):
    B, S, H = temporal_data.shape          # num_hiddens == packet_len == H
    L = params["w_qkv"].shape[0]
    c_pad = prep["c_pad"]

    kernel = functools.partial(fused_forward_kernel, batch=B, seq=S, hidden=H,
                               num_heads=num_heads, num_layers=L, eps=1e-5)

    smem_spec = pl.BlockSpec(memory_space=pltpu.MemorySpace.SMEM)
    vmem_spec = pl.BlockSpec(memory_space=pltpu.MemorySpace.VMEM)

    # Single-invocation kernel: no grid, whole arrays resident in VMEM.
    # TODO(synk): expose a 'parallel' batch grid axis for the v7x second
    # TensorCore if batch ever grows beyond a trivial size.
    out_pad = pl.pallas_call(
        kernel,
        out_shape=jax.ShapeDtypeStruct((B, c_pad), jnp.float32),
        in_specs=[smem_spec] + [vmem_spec] * 16,
        out_specs=vmem_spec,
    )(temporal_valid_len.astype(jnp.int32), temporal_data,
      params["w_emb"], params["b_emb"], prep["pos_tiled"],
      params["w_qkv"], params["w_o"], params["ln1_w"], params["ln1_b"],
      params["ffn_w1"], params["ffn_b1"], params["ffn_w2"], params["ffn_b2"],
      params["ln2_w"], params["ln2_b"], prep["fc_w_pad"], prep["fc_b_pad"])

    return out_pad[:, :num_classes]


# ---------------------------------------------------------------------------
# Demo
# ---------------------------------------------------------------------------

if __name__ == "__main__":
    # Shapes implied by the module: temporal_seq_len=8, packet_len(=num_hiddens)=32,
    # num_heads=2, num_layers=2, num_classes=5, batch=2.
    temporal_seq_len = 8
    packet_len = 32
    num_heads = 2
    num_layers = 2
    num_classes = 5
    batch = 2

    key = jax.random.PRNGKey(0)
    k_x, k_p = jax.random.split(key, 2)

    temporal_data = jax.random.normal(
        k_x, (batch, temporal_seq_len, packet_len), jnp.float32)
    temporal_valid_len = jnp.array([temporal_seq_len, temporal_seq_len - 2], jnp.int32)

    params = init_params(k_p, temporal_seq_len=temporal_seq_len,
                         packet_len=packet_len, num_layers=num_layers,
                         num_classes=num_classes)
    prep = prepare_inference(params, batch=batch, seq=temporal_seq_len,
                             hidden=packet_len, num_classes=num_classes)

    out = traffic_scope_temporal_forward(
        temporal_data, temporal_valid_len, params, prep,
        num_heads=num_heads, num_classes=num_classes)
    out = jax.block_until_ready(out)

    assert out.shape == (batch, num_classes)
    assert bool(jnp.all(jnp.isfinite(out)))
    # softmax rows should sum to ~1 (approx reciprocal on the EUP -> small slack)
    assert bool(jnp.allclose(jnp.sum(out, axis=-1), 1.0, atol=5e-3))

    print("KERNEL_OK")
</pallas_src>

<mosaic_0001>
module attributes {stable_mosaic.version = 11 : i64} {
  func.func @fused_forward_kernel(%arg0: memref<2xi32, #tpu.memory_space<smem>>, %arg1: memref<2x8x32xf32, #tpu.memory_space<vmem>>, %arg2: memref<32x32xf32, #tpu.memory_space<vmem>>, %arg3: memref<1x32xf32, #tpu.memory_space<vmem>>, %arg4: memref<16x32xf32, #tpu.memory_space<vmem>>, %arg5: memref<2x32x96xf32, #tpu.memory_space<vmem>>, %arg6: memref<2x32x32xf32, #tpu.memory_space<vmem>>, %arg7: memref<2x8x32xf32, #tpu.memory_space<vmem>>, %arg8: memref<2x8x32xf32, #tpu.memory_space<vmem>>, %arg9: memref<2x32x64xf32, #tpu.memory_space<vmem>>, %arg10: memref<2x1x64xf32, #tpu.memory_space<vmem>>, %arg11: memref<2x64x32xf32, #tpu.memory_space<vmem>>, %arg12: memref<2x1x32xf32, #tpu.memory_space<vmem>>, %arg13: memref<2x8x32xf32, #tpu.memory_space<vmem>>, %arg14: memref<2x8x32xf32, #tpu.memory_space<vmem>>, %arg15: memref<256x128xf32, #tpu.memory_space<vmem>>, %arg16: memref<1x128xf32, #tpu.memory_space<vmem>>, %arg17: memref<2x128xf32, #tpu.memory_space<vmem>>) attributes {dimension_semantics = [], scalar_prefetch = 0 : i64, scratch_operands = 0 : i64, tpu.core_type = #tpu.core_type<tc>} {
    %c0 = arith.constant 0 : index
    %c0_0 = arith.constant 0 : index
    %c0_1 = arith.constant 0 : index
    %0 = vector.load %arg1[%c0, %c0_0, %c0_1] : memref<2x8x32xf32, #tpu.memory_space<vmem>>, vector<2x8x32xf32>
    %1 = vector.shape_cast %0 : vector<2x8x32xf32> to vector<16x32xf32>
    %c0_2 = arith.constant 0 : index
    %c0_3 = arith.constant 0 : index
    %2 = vector.load %arg2[%c0_2, %c0_3] : memref<32x32xf32, #tpu.memory_space<vmem>>, vector<32x32xf32>
    %cst = arith.constant dense<0.000000e+00> : vector<16x32xf32>
    %3 = tpu.matmul %1, %2, %cst {dimension_numbers = #tpu.dot_dimension_numbers<[1], [0], [0], [1], [0, 0, 1, 1], [], []>} : vector<16x32xf32>, vector<32x32xf32>, vector<16x32xf32> -> vector<16x32xf32>
    %c0_4 = arith.constant 0 : index
    %c0_5 = arith.constant 0 : index
    %4 = vector.load %arg3[%c0_4, %c0_5] : memref<1x32xf32, #tpu.memory_space<vmem>>, vector<1x32xf32>
    %5 = vector.broadcast %4 : vector<1x32xf32> to vector<16x32xf32>
    %6 = arith.addf %3, %5 : vector<16x32xf32>
    %cst_6 = arith.constant 0.000000e+00 : f32
    %7 = vector.broadcast %cst_6 : f32 to vector<16x32xf32>
    %8 = arith.maximumf %6, %7 : vector<16x32xf32>
    %cst_7 = arith.constant 5.65685415 : f32
    %9 = vector.broadcast %cst_7 : f32 to vector<16x32xf32>
    %10 = arith.mulf %8, %9 : vector<16x32xf32>
    %c0_8 = arith.constant 0 : index
    %c0_9 = arith.constant 0 : index
    %11 = vector.load %arg4[%c0_8, %c0_9] : memref<16x32xf32, #tpu.memory_space<vmem>>, vector<16x32xf32>
    %12 = arith.addf %10, %11 : vector<16x32xf32>
    %13 = tpu.iota {dimensions = array<i32: 2>} : vector<4x8x8xi32>
    %c0_10 = arith.constant 0 : index
    %14 = memref.load %arg0[%c0_10] : memref<2xi32, #tpu.memory_space<smem>>
    %15 = vector.broadcast %14 : i32 to vector<1x8x8xi32>
    %c1 = arith.constant 1 : index
    %16 = memref.load %arg0[%c1] : memref<2xi32, #tpu.memory_space<smem>>
    %17 = vector.broadcast %16 : i32 to vector<1x8x8xi32>
    %c0_11 = arith.constant 0 : index
    %18 = memref.load %arg0[%c0_11] : memref<2xi32, #tpu.memory_space<smem>>
    %19 = vector.broadcast %18 : i32 to vector<1x8x8xi32>
    %c1_12 = arith.constant 1 : index
    %20 = memref.load %arg0[%c1_12] : memref<2xi32, #tpu.memory_space<smem>>
    %21 = vector.broadcast %20 : i32 to vector<1x8x8xi32>
    %22 = tpu.concatenate %15, %17, %19, %21 in 0 : vector<1x8x8xi32>, vector<1x8x8xi32>, vector<1x8x8xi32>, vector<1x8x8xi32> -> vector<4x8x8xi32>
    %23 = arith.cmpi slt, %13, %22 : vector<4x8x8xi32>
    %c0_13 = arith.constant 0 : index
    %c0_14 = arith.constant 0 : index
    %c0_15 = arith.constant 0 : index
    %24 = vector.load %arg5[%c0_13, %c0_14, %c0_15] : memref<2x32x96xf32, #tpu.memory_space<vmem>>, vector<1x32x96xf32>
    %25 = vector.shape_cast %24 : vector<1x32x96xf32> to vector<32x96xf32>
    %cst_16 = arith.constant dense<0.000000e+00> : vector<16x96xf32>
    %26 = tpu.matmul %12, %25, %cst_16 {dimension_numbers = #tpu.dot_dimension_numbers<[1], [0], [0], [1], [0, 0, 1, 1], [], []>} : vector<16x32xf32>, vector<32x96xf32>, vector<16x96xf32> -> vector<16x96xf32>
    %27 = vector.extract_strided_slice %26 {offsets = [0, 0], sizes = [16, 16], strides = [1, 1]} : vector<16x96xf32> to vector<16x16xf32>
    %28 = vector.shape_cast %27 : vector<16x16xf32> to vector<2x8x16xf32>
    %29 = vector.extract_strided_slice %26 {offsets = [0, 16], sizes = [16, 16], strides = [1, 1]} : vector<16x96xf32> to vector<16x16xf32>
    %30 = vector.shape_cast %29 : vector<16x16xf32> to vector<2x8x16xf32>
    %31 = tpu.concatenate %28, %30 in 0 : vector<2x8x16xf32>, vector<2x8x16xf32> -> vector<4x8x16xf32>
    %32 = vector.extract_strided_slice %26 {offsets = [0, 32], sizes = [16, 16], strides = [1, 1]} : vector<16x96xf32> to vector<16x16xf32>
    %33 = vector.shape_cast %32 : vector<16x16xf32> to vector<2x8x16xf32>
    %34 = vector.extract_strided_slice %26 {offsets = [0, 48], sizes = [16, 16], strides = [1, 1]} : vector<16x96xf32> to vector<16x16xf32>
    %35 = vector.shape_cast %34 : vector<16x16xf32> to vector<2x8x16xf32>
    %36 = tpu.concatenate %33, %35 in 0 : vector<2x8x16xf32>, vector<2x8x16xf32> -> vector<4x8x16xf32>
    %37 = vector.extract_strided_slice %26 {offsets = [0, 64], sizes = [16, 16], strides = [1, 1]} : vector<16x96xf32> to vector<16x16xf32>
    %38 = vector.shape_cast %37 : vector<16x16xf32> to vector<2x8x16xf32>
    %39 = vector.extract_strided_slice %26 {offsets = [0, 80], sizes = [16, 16], strides = [1, 1]} : vector<16x96xf32> to vector<16x16xf32>
    %40 = vector.shape_cast %39 : vector<16x16xf32> to vector<2x8x16xf32>
    %41 = tpu.concatenate %38, %40 in 0 : vector<2x8x16xf32>, vector<2x8x16xf32> -> vector<4x8x16xf32>
    "tpu.trace_start"() <{level = 10 : i32, message = "bqd,bkd->bqk"}> : () -> ()
    %cst_17 = arith.constant dense<0.000000e+00> : vector<4x8x8xf32>
    %42 = tpu.matmul %31, %36, %cst_17 {dimension_numbers = #tpu.dot_dimension_numbers<[2], [2], [1], [1], [0, 0, 0, 1, 1, 1], [0], [0]>} : vector<4x8x16xf32>, vector<4x8x16xf32>, vector<4x8x8xf32> -> vector<4x8x8xf32>
    "tpu.trace_stop"() : () -> ()
    %cst_18 = arith.constant 2.500000e-01 : f32
    %43 = vector.broadcast %cst_18 : f32 to vector<4x8x8xf32>
    %44 = arith.mulf %42, %43 : vector<4x8x8xf32>
    %cst_19 = arith.constant -1.000000e+06 : f32
    %45 = vector.broadcast %cst_19 : f32 to vector<4x8x8xf32>
    %46 = arith.select %23, %44, %45 : vector<4x8x8xi1>, vector<4x8x8xf32>
    %cst_20 = arith.constant dense<0xFF800000> : vector<4x8xf32>
    %47 = vector.multi_reduction <maximumf>, %46, %cst_20 [2] : vector<4x8x8xf32> to vector<4x8xf32>
    %48 = vector.shape_cast %47 : vector<4x8xf32> to vector<4x8x1xf32>
    %49 = vector.broadcast %48 : vector<4x8x1xf32> to vector<4x8x8xf32>
    %50 = arith.subf %46, %49 : vector<4x8x8xf32>
    %51 = math.exp %50 : vector<4x8x8xf32>
    %cst_21 = arith.constant dense<0.000000e+00> : vector<4x8xf32>
    %52 = vector.multi_reduction <add>, %51, %cst_21 [2] : vector<4x8x8xf32> to vector<4x8xf32>
    %53 = vector.shape_cast %52 : vector<4x8xf32> to vector<4x8x1xf32>
    %54 = tpu.reciprocal %53 {approx = true} : vector<4x8x1xf32> -> vector<4x8x1xf32>
    %55 = vector.broadcast %54 : vector<4x8x1xf32> to vector<4x8x8xf32>
    %56 = arith.mulf %51, %55 : vector<4x8x8xf32>
    "tpu.trace_start"() <{level = 10 : i32, message = "bqk,bkd->bqd"}> : () -> ()
    %cst_22 = arith.constant dense<0.000000e+00> : vector<4x8x16xf32>
    %57 = tpu.matmul %56, %41, %cst_22 {dimension_numbers = #tpu.dot_dimension_numbers<[2], [1], [1], [2], [0, 0, 0, 1, 1, 2], [0], [0]>} : vector<4x8x8xf32>, vector<4x8x16xf32>, vector<4x8x16xf32> -> vector<4x8x16xf32>
    "tpu.trace_stop"() : () -> ()
    %58 = vector.extract_strided_slice %57 {offsets = [0, 0, 0], sizes = [2, 8, 16], strides = [1, 1, 1]} : vector<4x8x16xf32> to vector<2x8x16xf32>
    %59 = vector.shape_cast %58 : vector<2x8x16xf32> to vector<16x16xf32>
    %60 = vector.extract_strided_slice %57 {offsets = [2, 0, 0], sizes = [2, 8, 16], strides = [1, 1, 1]} : vector<4x8x16xf32> to vector<2x8x16xf32>
    %61 = vector.shape_cast %60 : vector<2x8x16xf32> to vector<16x16xf32>
    %62 = tpu.concatenate %59, %61 in 1 : vector<16x16xf32>, vector<16x16xf32> -> vector<16x32xf32>
    %c0_23 = arith.constant 0 : index
    %c0_24 = arith.constant 0 : index
    %c0_25 = arith.constant 0 : index
    %63 = vector.load %arg6[%c0_23, %c0_24, %c0_25] : memref<2x32x32xf32, #tpu.memory_space<vmem>>, vector<1x32x32xf32>
    %64 = vector.shape_cast %63 : vector<1x32x32xf32> to vector<32x32xf32>
    %cst_26 = arith.constant dense<0.000000e+00> : vector<16x32xf32>
    %65 = tpu.matmul %62, %64, %cst_26 {dimension_numbers = #tpu.dot_dimension_numbers<[1], [0], [0], [1], [0, 0, 1, 1], [], []>} : vector<16x32xf32>, vector<32x32xf32>, vector<16x32xf32> -> vector<16x32xf32>
    %66 = arith.addf %12, %65 : vector<16x32xf32>
    %c0_27 = arith.constant 0 : index
    %c0_28 = arith.constant 0 : index
    %c0_29 = arith.constant 0 : index
    %67 = vector.load %arg7[%c0_27, %c0_28, %c0_29] : memref<2x8x32xf32, #tpu.memory_space<vmem>>, vector<1x8x32xf32>
    %68 = vector.shape_cast %67 : vector<1x8x32xf32> to vector<8x32xf32>
    %c0_30 = arith.constant 0 : index
    %c0_31 = arith.constant 0 : index
    %c0_32 = arith.constant 0 : index
    %69 = vector.load %arg8[%c0_30, %c0_31, %c0_32] : memref<2x8x32xf32, #tpu.memory_space<vmem>>, vector<1x8x32xf32>
    %70 = vector.shape_cast %69 : vector<1x8x32xf32> to vector<8x32xf32>
    %71 = vector.extract_strided_slice %66 {offsets = [0, 0], sizes = [8, 32], strides = [1, 1]} : vector<16x32xf32> to vector<8x32xf32>
    %72 = vector.shape_cast %71 : vector<8x32xf32> to vector<1x8x32xf32>
    %cst_33 = arith.constant dense<0.000000e+00> : vector<1xf32>
    %73 = vector.multi_reduction <add>, %72, %cst_33 [1, 2] : vector<1x8x32xf32> to vector<1xf32>
    %74 = vector.shape_cast %73 : vector<1xf32> to vector<1x1x1xf32>
    %75 = vector.extract %74[0, 0, 0] : f32 from vector<1x1x1xf32>
    %cst_34 = arith.constant 2.560000e+02 : f32
    %76 = arith.divf %75, %cst_34 : f32
    %77 = vector.broadcast %76 : f32 to vector<8x32xf32>
    %78 = arith.subf %71, %77 : vector<8x32xf32>
    %79 = arith.mulf %78, %78 : vector<8x32xf32>
    %80 = vector.shape_cast %79 : vector<8x32xf32> to vector<1x8x32xf32>
    %cst_35 = arith.constant dense<0.000000e+00> : vector<1xf32>
    %81 = vector.multi_reduction <add>, %80, %cst_35 [1, 2] : vector<1x8x32xf32> to vector<1xf32>
    %82 = vector.shape_cast %81 : vector<1xf32> to vector<1x1x1xf32>
    %83 = vector.extract %82[0, 0, 0] : f32 from vector<1x1x1xf32>
    %cst_36 = arith.constant 2.560000e+02 : f32
    %84 = arith.divf %83, %cst_36 : f32
    %85 = vector.broadcast %76 : f32 to vector<8x32xf32>
    %86 = arith.subf %71, %85 : vector<8x32xf32>
    %cst_37 = arith.constant 9.99999974E-6 : f32
    %87 = arith.addf %84, %cst_37 : f32
    %88 = math.rsqrt %87 : f32
    %89 = vector.broadcast %88 : f32 to vector<8x32xf32>
    %90 = arith.mulf %86, %89 : vector<8x32xf32>
    %91 = arith.mulf %90, %68 : vector<8x32xf32>
    %92 = arith.addf %91, %70 : vector<8x32xf32>
    %93 = vector.extract_strided_slice %66 {offsets = [8, 0], sizes = [8, 32], strides = [1, 1]} : vector<16x32xf32> to vector<8x32xf32>
    %94 = vector.shape_cast %93 : vector<8x32xf32> to vector<1x8x32xf32>
    %cst_38 = arith.constant dense<0.000000e+00> : vector<1xf32>
    %95 = vector.multi_reduction <add>, %94, %cst_38 [1, 2] : vector<1x8x32xf32> to vector<1xf32>
    %96 = vector.shape_cast %95 : vector<1xf32> to vector<1x1x1xf32>
    %97 = vector.extract %96[0, 0, 0] : f32 from vector<1x1x1xf32>
    %cst_39 = arith.constant 2.560000e+02 : f32
    %98 = arith.divf %97, %cst_39 : f32
    %99 = vector.broadcast %98 : f32 to vector<8x32xf32>
    %100 = arith.subf %93, %99 : vector<8x32xf32>
    %101 = arith.mulf %100, %100 : vector<8x32xf32>
    %102 = vector.shape_cast %101 : vector<8x32xf32> to vector<1x8x32xf32>
    %cst_40 = arith.constant dense<0.000000e+00> : vector<1xf32>
    %103 = vector.multi_reduction <add>, %102, %cst_40 [1, 2] : vector<1x8x32xf32> to vector<1xf32>
    %104 = vector.shape_cast %103 : vector<1xf32> to vector<1x1x1xf32>
    %105 = vector.extract %104[0, 0, 0] : f32 from vector<1x1x1xf32>
    %cst_41 = arith.constant 2.560000e+02 : f32
    %106 = arith.divf %105, %cst_41 : f32
    %107 = vector.broadcast %98 : f32 to vector<8x32xf32>
    %108 = arith.subf %93, %107 : vector<8x32xf32>
    %cst_42 = arith.constant 9.99999974E-6 : f32
    %109 = arith.addf %106, %cst_42 : f32
    %110 = math.rsqrt %109 : f32
    %111 = vector.broadcast %110 : f32 to vector<8x32xf32>
    %112 = arith.mulf %108, %111 : vector<8x32xf32>
    %113 = arith.mulf %112, %68 : vector<8x32xf32>
    %114 = arith.addf %113, %70 : vector<8x32xf32>
    %115 = tpu.concatenate %92, %114 in 0 : vector<8x32xf32>, vector<8x32xf32> -> vector<16x32xf32>
    %c0_43 = arith.constant 0 : index
    %c0_44 = arith.constant 0 : index
    %c0_45 = arith.constant 0 : index
    %116 = vector.load %arg9[%c0_43, %c0_44, %c0_45] : memref<2x32x64xf32, #tpu.memory_space<vmem>>, vector<1x32x64xf32>
    %117 = vector.shape_cast %116 : vector<1x32x64xf32> to vector<32x64xf32>
    %cst_46 = arith.constant dense<0.000000e+00> : vector<16x64xf32>
    %118 = tpu.matmul %115, %117, %cst_46 {dimension_numbers = #tpu.dot_dimension_numbers<[1], [0], [0], [1], [0, 0, 1, 1], [], []>} : vector<16x32xf32>, vector<32x64xf32>, vector<16x64xf32> -> vector<16x64xf32>
    %c0_47 = arith.constant 0 : index
    %c0_48 = arith.constant 0 : index
    %c0_49 = arith.constant 0 : index
    %119 = vector.load %arg10[%c0_47, %c0_48, %c0_49] : memref<2x1x64xf32, #tpu.memory_space<vmem>>, vector<1x1x64xf32>
    %120 = vector.shape_cast %119 : vector<1x1x64xf32> to vector<1x64xf32>
    %121 = vector.broadcast %120 : vector<1x64xf32> to vector<16x64xf32>
    %122 = arith.addf %118, %121 : vector<16x64xf32>
    %cst_50 = arith.constant 0.000000e+00 : f32
    %123 = vector.broadcast %cst_50 : f32 to vector<16x64xf32>
    %124 = arith.maximumf %122, %123 : vector<16x64xf32>
    %c0_51 = arith.constant 0 : index
    %c0_52 = arith.constant 0 : index
    %c0_53 = arith.constant 0 : index
    %125 = vector.load %arg11[%c0_51, %c0_52, %c0_53] : memref<2x64x32xf32, #tpu.memory_space<vmem>>, vector<1x64x32xf32>
    %126 = vector.shape_cast %125 : vector<1x64x32xf32> to vector<64x32xf32>
    %cst_54 = arith.constant dense<0.000000e+00> : vector<16x32xf32>
    %127 = tpu.matmul %124, %126, %cst_54 {dimension_numbers = #tpu.dot_dimension_numbers<[1], [0], [0], [1], [0, 0, 1, 1], [], []>} : vector<16x64xf32>, vector<64x32xf32>, vector<16x32xf32> -> vector<16x32xf32>
    %c0_55 = arith.constant 0 : index
    %c0_56 = arith.constant 0 : index
    %c0_57 = arith.constant 0 : index
    %128 = vector.load %arg12[%c0_55, %c0_56, %c0_57] : memref<2x1x32xf32, #tpu.memory_space<vmem>>, vector<1x1x32xf32>
    %129 = vector.shape_cast %128 : vector<1x1x32xf32> to vector<1x32xf32>
    %130 = vector.broadcast %129 : vector<1x32xf32> to vector<16x32xf32>
    %131 = arith.addf %127, %130 : vector<16x32xf32>
    %132 = arith.addf %115, %131 : vector<16x32xf32>
    %c0_58 = arith.constant 0 : index
    %c0_59 = arith.constant 0 : index
    %c0_60 = arith.constant 0 : index
    %133 = vector.load %arg13[%c0_58, %c0_59, %c0_60] : memref<2x8x32xf32, #tpu.memory_space<vmem>>, vector<1x8x32xf32>
    %134 = vector.shape_cast %133 : vector<1x8x32xf32> to vector<8x32xf32>
    %c0_61 = arith.constant 0 : index
    %c0_62 = arith.constant 0 : index
    %c0_63 = arith.constant 0 : index
    %135 = vector.load %arg14[%c0_61, %c0_62, %c0_63] : memref<2x8x32xf32, #tpu.memory_space<vmem>>, vector<1x8x32xf32>
    %136 = vector.shape_cast %135 : vector<1x8x32xf32> to vector<8x32xf32>
    %137 = vector.extract_strided_slice %132 {offsets = [0, 0], sizes = [8, 32], strides = [1, 1]} : vector<16x32xf32> to vector<8x32xf32>
    %138 = vector.shape_cast %137 : vector<8x32xf32> to vector<1x8x32xf32>
    %cst_64 = arith.constant dense<0.000000e+00> : vector<1xf32>
    %139 = vector.multi_reduction <add>, %138, %cst_64 [1, 2] : vector<1x8x32xf32> to vector<1xf32>
    %140 = vector.shape_cast %139 : vector<1xf32> to vector<1x1x1xf32>
    %141 = vector.extract %140[0, 0, 0] : f32 from vector<1x1x1xf32>
    %cst_65 = arith.constant 2.560000e+02 : f32
    %142 = arith.divf %141, %cst_65 : f32
    %143 = vector.broadcast %142 : f32 to vector<8x32xf32>
    %144 = arith.subf %137, %143 : vector<8x32xf32>
    %145 = arith.mulf %144, %144 : vector<8x32xf32>
    %146 = vector.shape_cast %145 : vector<8x32xf32> to vector<1x8x32xf32>
    %cst_66 = arith.constant dense<0.000000e+00> : vector<1xf32>
    %147 = vector.multi_reduction <add>, %146, %cst_66 [1, 2] : vector<1x8x32xf32> to vector<1xf32>
    %148 = vector.shape_cast %147 : vector<1xf32> to vector<1x1x1xf32>
    %149 = vector.extract %148[0, 0, 0] : f32 from vector<1x1x1xf32>
    %cst_67 = arith.constant 2.560000e+02 : f32
    %150 = arith.divf %149, %cst_67 : f32
    %151 = vector.broadcast %142 : f32 to vector<8x32xf32>
    %152 = arith.subf %137, %151 : vector<8x32xf32>
    %cst_68 = arith.constant 9.99999974E-6 : f32
    %153 = arith.addf %150, %cst_68 : f32
    %154 = math.rsqrt %153 : f32
    %155 = vector.broadcast %154 : f32 to vector<8x32xf32>
    %156 = arith.mulf %152, %155 : vector<8x32xf32>
    %157 = arith.mulf %156, %134 : vector<8x32xf32>
    %158 = arith.addf %157, %136 : vector<8x32xf32>
    %159 = vector.extract_strided_slice %132 {offsets = [8, 0], sizes = [8, 32], strides = [1, 1]} : vector<16x32xf32> to vector<8x32xf32>
    %160 = vector.shape_cast %159 : vector<8x32xf32> to vector<1x8x32xf32>
    %cst_69 = arith.constant dense<0.000000e+00> : vector<1xf32>
    %161 = vector.multi_reduction <add>, %160, %cst_69 [1, 2] : vector<1x8x32xf32> to vector<1xf32>
    %162 = vector.shape_cast %161 : vector<1xf32> to vector<1x1x1xf32>
    %163 = vector.extract %162[0, 0, 0] : f32 from vector<1x1x1xf32>
    %cst_70 = arith.constant 2.560000e+02 : f32
    %164 = arith.divf %163, %cst_70 : f32
    %165 = vector.broadcast %164 : f32 to vector<8x32xf32>
    %166 = arith.subf %159, %165 : vector<8x32xf32>
    %167 = arith.mulf %166, %166 : vector<8x32xf32>
    %168 = vector.shape_cast %167 : vector<8x32xf32> to vector<1x8x32xf32>
    %cst_71 = arith.constant dense<0.000000e+00> : vector<1xf32>
    %169 = vector.multi_reduction <add>, %168, %cst_71 [1, 2] : vector<1x8x32xf32> to vector<1xf32>
    %170 = vector.shape_cast %169 : vector<1xf32> to vector<1x1x1xf32>
    %171 = vector.extract %170[0, 0, 0] : f32 from vector<1x1x1xf32>
    %cst_72 = arith.constant 2.560000e+02 : f32
    %172 = arith.divf %171, %cst_72 : f32
    %173 = vector.broadcast %164 : f32 to vector<8x32xf32>
    %174 = arith.subf %159, %173 : vector<8x32xf32>
    %cst_73 = arith.constant 9.99999974E-6 : f32
    %175 = arith.addf %172, %cst_73 : f32
    %176 = math.rsqrt %175 : f32
    %177 = vector.broadcast %176 : f32 to vector<8x32xf32>
    %178 = arith.mulf %174, %177 : vector<8x32xf32>
    %179 = arith.mulf %178, %134 : vector<8x32xf32>
    %180 = arith.addf %179, %136 : vector<8x32xf32>
    %181 = tpu.concatenate %158, %180 in 0 : vector<8x32xf32>, vector<8x32xf32> -> vector<16x32xf32>
    %c1_74 = arith.constant 1 : index
    %c0_75 = arith.constant 0 : index
    %c0_76 = arith.constant 0 : index
    %182 = vector.load %arg5[%c1_74, %c0_75, %c0_76] : memref<2x32x96xf32, #tpu.memory_space<vmem>>, vector<1x32x96xf32>
    %183 = vector.shape_cast %182 : vector<1x32x96xf32> to vector<32x96xf32>
    %cst_77 = arith.constant dense<0.000000e+00> : vector<16x96xf32>
    %184 = tpu.matmul %181, %183, %cst_77 {dimension_numbers = #tpu.dot_dimension_numbers<[1], [0], [0], [1], [0, 0, 1, 1], [], []>} : vector<16x32xf32>, vector<32x96xf32>, vector<16x96xf32> -> vector<16x96xf32>
    %185 = vector.extract_strided_slice %184 {offsets = [0, 0], sizes = [16, 16], strides = [1, 1]} : vector<16x96xf32> to vector<16x16xf32>
    %186 = vector.shape_cast %185 : vector<16x16xf32> to vector<2x8x16xf32>
    %187 = vector.extract_strided_slice %184 {offsets = [0, 16], sizes = [16, 16], strides = [1, 1]} : vector<16x96xf32> to vector<16x16xf32>
    %188 = vector.shape_cast %187 : vector<16x16xf32> to vector<2x8x16xf32>
    %189 = tpu.concatenate %186, %188 in 0 : vector<2x8x16xf32>, vector<2x8x16xf32> -> vector<4x8x16xf32>
    %190 = vector.extract_strided_slice %184 {offsets = [0, 32], sizes = [16, 16], strides = [1, 1]} : vector<16x96xf32> to vector<16x16xf32>
    %191 = vector.shape_cast %190 : vector<16x16xf32> to vector<2x8x16xf32>
    %192 = vector.extract_strided_slice %184 {offsets = [0, 48], sizes = [16, 16], strides = [1, 1]} : vector<16x96xf32> to vector<16x16xf32>
    %193 = vector.shape_cast %192 : vector<16x16xf32> to vector<2x8x16xf32>
    %194 = tpu.concatenate %191, %193 in 0 : vector<2x8x16xf32>, vector<2x8x16xf32> -> vector<4x8x16xf32>
    %195 = vector.extract_strided_slice %184 {offsets = [0, 64], sizes = [16, 16], strides = [1, 1]} : vector<16x96xf32> to vector<16x16xf32>
    %196 = vector.shape_cast %195 : vector<16x16xf32> to vector<2x8x16xf32>
    %197 = vector.extract_strided_slice %184 {offsets = [0, 80], sizes = [16, 16], strides = [1, 1]} : vector<16x96xf32> to vector<16x16xf32>
    %198 = vector.shape_cast %197 : vector<16x16xf32> to vector<2x8x16xf32>
    %199 = tpu.concatenate %196, %198 in 0 : vector<2x8x16xf32>, vector<2x8x16xf32> -> vector<4x8x16xf32>
    "tpu.trace_start"() <{level = 10 : i32, message = "bqd,bkd->bqk"}> : () -> ()
    %cst_78 = arith.constant dense<0.000000e+00> : vector<4x8x8xf32>
    %200 = tpu.matmul %189, %194, %cst_78 {dimension_numbers = #tpu.dot_dimension_numbers<[2], [2], [1], [1], [0, 0, 0, 1, 1, 1], [0], [0]>} : vector<4x8x16xf32>, vector<4x8x16xf32>, vector<4x8x8xf32> -> vector<4x8x8xf32>
    "tpu.trace_stop"() : () -> ()
    %cst_79 = arith.constant 2.500000e-01 : f32
    %201 = vector.broadcast %cst_79 : f32 to vector<4x8x8xf32>
    %202 = arith.mulf %200, %201 : vector<4x8x8xf32>
    %cst_80 = arith.constant -1.000000e+06 : f32
    %203 = vector.broadcast %cst_80 : f32 to vector<4x8x8xf32>
    %204 = arith.select %23, %202, %203 : vector<4x8x8xi1>, vector<4x8x8xf32>
    %cst_81 = arith.constant dense<0xFF800000> : vector<4x8xf32>
    %205 = vector.multi_reduction <maximumf>, %204, %cst_81 [2] : vector<4x8x8xf32> to vector<4x8xf32>
    %206 = vector.shape_cast %205 : vector<4x8xf32> to vector<4x8x1xf32>
    %207 = vector.broadcast %206 : vector<4x8x1xf32> to vector<4x8x8xf32>
    %208 = arith.subf %204, %207 : vector<4x8x8xf32>
    %209 = math.exp %208 : vector<4x8x8xf32>
    %cst_82 = arith.constant dense<0.000000e+00> : vector<4x8xf32>
    %210 = vector.multi_reduction <add>, %209, %cst_82 [2] : vector<4x8x8xf32> to vector<4x8xf32>
    %211 = vector.shape_cast %210 : vector<4x8xf32> to vector<4x8x1xf32>
    %212 = tpu.reciprocal %211 {approx = true} : vector<4x8x1xf32> -> vector<4x8x1xf32>
    %213 = vector.broadcast %212 : vector<4x8x1xf32> to vector<4x8x8xf32>
    %214 = arith.mulf %209, %213 : vector<4x8x8xf32>
    "tpu.trace_start"() <{level = 10 : i32, message = "bqk,bkd->bqd"}> : () -> ()
    %cst_83 = arith.constant dense<0.000000e+00> : vector<4x8x16xf32>
    %215 = tpu.matmul %214, %199, %cst_83 {dimension_numbers = #tpu.dot_dimension_numbers<[2], [1], [1], [2], [0, 0, 0, 1, 1, 2], [0], [0]>} : vector<4x8x8xf32>, vector<4x8x16xf32>, vector<4x8x16xf32> -> vector<4x8x16xf32>
    "tpu.trace_stop"() : () -> ()
    %216 = vector.extract_strided_slice %215 {offsets = [0, 0, 0], sizes = [2, 8, 16], strides = [1, 1, 1]} : vector<4x8x16xf32> to vector<2x8x16xf32>
    %217 = vector.shape_cast %216 : vector<2x8x16xf32> to vector<16x16xf32>
    %218 = vector.extract_strided_slice %215 {offsets = [2, 0, 0], sizes = [2, 8, 16], strides = [1, 1, 1]} : vector<4x8x16xf32> to vector<2x8x16xf32>
    %219 = vector.shape_cast %218 : vector<2x8x16xf32> to vector<16x16xf32>
    %220 = tpu.concatenate %217, %219 in 1 : vector<16x16xf32>, vector<16x16xf32> -> vector<16x32xf32>
    %c1_84 = arith.constant 1 : index
    %c0_85 = arith.constant 0 : index
    %c0_86 = arith.constant 0 : index
    %221 = vector.load %arg6[%c1_84, %c0_85, %c0_86] : memref<2x32x32xf32, #tpu.memory_space<vmem>>, vector<1x32x32xf32>
    %222 = vector.shape_cast %221 : vector<1x32x32xf32> to vector<32x32xf32>
    %cst_87 = arith.constant dense<0.000000e+00> : vector<16x32xf32>
    %223 = tpu.matmul %220, %222, %cst_87 {dimension_numbers = #tpu.dot_dimension_numbers<[1], [0], [0], [1], [0, 0, 1, 1], [], []>} : vector<16x32xf32>, vector<32x32xf32>, vector<16x32xf32> -> vector<16x32xf32>
    %224 = arith.addf %181, %223 : vector<16x32xf32>
    %c1_88 = arith.constant 1 : index
    %c0_89 = arith.constant 0 : index
    %c0_90 = arith.constant 0 : index
    %225 = vector.load %arg7[%c1_88, %c0_89, %c0_90] : memref<2x8x32xf32, #tpu.memory_space<vmem>>, vector<1x8x32xf32>
    %226 = vector.shape_cast %225 : vector<1x8x32xf32> to vector<8x32xf32>
    %c1_91 = arith.constant 1 : index
    %c0_92 = arith.constant 0 : index
    %c0_93 = arith.constant 0 : index
    %227 = vector.load %arg8[%c1_91, %c0_92, %c0_93] : memref<2x8x32xf32, #tpu.memory_space<vmem>>, vector<1x8x32xf32>
    %228 = vector.shape_cast %227 : vector<1x8x32xf32> to vector<8x32xf32>
    %229 = vector.extract_strided_slice %224 {offsets = [0, 0], sizes = [8, 32], strides = [1, 1]} : vector<16x32xf32> to vector<8x32xf32>
    %230 = vector.shape_cast %229 : vector<8x32xf32> to vector<1x8x32xf32>
    %cst_94 = arith.constant dense<0.000000e+00> : vector<1xf32>
    %231 = vector.multi_reduction <add>, %230, %cst_94 [1, 2] : vector<1x8x32xf32> to vector<1xf32>
    %232 = vector.shape_cast %231 : vector<1xf32> to vector<1x1x1xf32>
    %233 = vector.extract %232[0, 0, 0] : f32 from vector<1x1x1xf32>
    %cst_95 = arith.constant 2.560000e+02 : f32
    %234 = arith.divf %233, %cst_95 : f32
    %235 = vector.broadcast %234 : f32 to vector<8x32xf32>
    %236 = arith.subf %229, %235 : vector<8x32xf32>
    %237 = arith.mulf %236, %236 : vector<8x32xf32>
    %238 = vector.shape_cast %237 : vector<8x32xf32> to vector<1x8x32xf32>
    %cst_96 = arith.constant dense<0.000000e+00> : vector<1xf32>
    %239 = vector.multi_reduction <add>, %238, %cst_96 [1, 2] : vector<1x8x32xf32> to vector<1xf32>
    %240 = vector.shape_cast %239 : vector<1xf32> to vector<1x1x1xf32>
    %241 = vector.extract %240[0, 0, 0] : f32 from vector<1x1x1xf32>
    %cst_97 = arith.constant 2.560000e+02 : f32
    %242 = arith.divf %241, %cst_97 : f32
    %243 = vector.broadcast %234 : f32 to vector<8x32xf32>
    %244 = arith.subf %229, %243 : vector<8x32xf32>
    %cst_98 = arith.constant 9.99999974E-6 : f32
    %245 = arith.addf %242, %cst_98 : f32
    %246 = math.rsqrt %245 : f32
    %247 = vector.broadcast %246 : f32 to vector<8x32xf32>
    %248 = arith.mulf %244, %247 : vector<8x32xf32>
    %249 = arith.mulf %248, %226 : vector<8x32xf32>
    %250 = arith.addf %249, %228 : vector<8x32xf32>
    %251 = vector.extract_strided_slice %224 {offsets = [8, 0], sizes = [8, 32], strides = [1, 1]} : vector<16x32xf32> to vector<8x32xf32>
    %252 = vector.shape_cast %251 : vector<8x32xf32> to vector<1x8x32xf32>
    %cst_99 = arith.constant dense<0.000000e+00> : vector<1xf32>
    %253 = vector.multi_reduction <add>, %252, %cst_99 [1, 2] : vector<1x8x32xf32> to vector<1xf32>
    %254 = vector.shape_cast %253 : vector<1xf32> to vector<1x1x1xf32>
    %255 = vector.extract %254[0, 0, 0] : f32 from vector<1x1x1xf32>
    %cst_100 = arith.constant 2.560000e+02 : f32
    %256 = arith.divf %255, %cst_100 : f32
    %257 = vector.broadcast %256 : f32 to vector<8x32xf32>
    %258 = arith.subf %251, %257 : vector<8x32xf32>
    %259 = arith.mulf %258, %258 : vector<8x32xf32>
    %260 = vector.shape_cast %259 : vector<8x32xf32> to vector<1x8x32xf32>
    %cst_101 = arith.constant dense<0.000000e+00> : vector<1xf32>
    %261 = vector.multi_reduction <add>, %260, %cst_101 [1, 2] : vector<1x8x32xf32> to vector<1xf32>
    %262 = vector.shape_cast %261 : vector<1xf32> to vector<1x1x1xf32>
    %263 = vector.extract %262[0, 0, 0] : f32 from vector<1x1x1xf32>
    %cst_102 = arith.constant 2.560000e+02 : f32
    %264 = arith.divf %263, %cst_102 : f32
    %265 = vector.broadcast %256 : f32 to vector<8x32xf32>
    %266 = arith.subf %251, %265 : vector<8x32xf32>
    %cst_103 = arith.constant 9.99999974E-6 : f32
    %267 = arith.addf %264, %cst_103 : f32
    %268 = math.rsqrt %267 : f32
    %269 = vector.broadcast %268 : f32 to vector<8x32xf32>
    %270 = arith.mulf %266, %269 : vector<8x32xf32>
    %271 = arith.mulf %270, %226 : vector<8x32xf32>
    %272 = arith.addf %271, %228 : vector<8x32xf32>
    %273 = tpu.concatenate %250, %272 in 0 : vector<8x32xf32>, vector<8x32xf32> -> vector<16x32xf32>
    %c1_104 = arith.constant 1 : index
    %c0_105 = arith.constant 0 : index
    %c0_106 = arith.constant 0 : index
    %274 = vector.load %arg9[%c1_104, %c0_105, %c0_106] : memref<2x32x64xf32, #tpu.memory_space<vmem>>, vector<1x32x64xf32>
    %275 = vector.shape_cast %274 : vector<1x32x64xf32> to vector<32x64xf32>
    %cst_107 = arith.constant dense<0.000000e+00> : vector<16x64xf32>
    %276 = tpu.matmul %273, %275, %cst_107 {dimension_numbers = #tpu.dot_dimension_numbers<[1], [0], [0], [1], [0, 0, 1, 1], [], []>} : vector<16x32xf32>, vector<32x64xf32>, vector<16x64xf32> -> vector<16x64xf32>
    %c1_108 = arith.constant 1 : index
    %c0_109 = arith.constant 0 : index
    %c0_110 = arith.constant 0 : index
    %277 = vector.load %arg10[%c1_108, %c0_109, %c0_110] : memref<2x1x64xf32, #tpu.memory_space<vmem>>, vector<1x1x64xf32>
    %278 = vector.shape_cast %277 : vector<1x1x64xf32> to vector<1x64xf32>
    %279 = vector.broadcast %278 : vector<1x64xf32> to vector<16x64xf32>
    %280 = arith.addf %276, %279 : vector<16x64xf32>
    %cst_111 = arith.constant 0.000000e+00 : f32
    %281 = vector.broadcast %cst_111 : f32 to vector<16x64xf32>
    %282 = arith.maximumf %280, %281 : vector<16x64xf32>
    %c1_112 = arith.constant 1 : index
    %c0_113 = arith.constant 0 : index
    %c0_114 = arith.constant 0 : index
    %283 = vector.load %arg11[%c1_112, %c0_113, %c0_114] : memref<2x64x32xf32, #tpu.memory_space<vmem>>, vector<1x64x32xf32>
    %284 = vector.shape_cast %283 : vector<1x64x32xf32> to vector<64x32xf32>
    %cst_115 = arith.constant dense<0.000000e+00> : vector<16x32xf32>
    %285 = tpu.matmul %282, %284, %cst_115 {dimension_numbers = #tpu.dot_dimension_numbers<[1], [0], [0], [1], [0, 0, 1, 1], [], []>} : vector<16x64xf32>, vector<64x32xf32>, vector<16x32xf32> -> vector<16x32xf32>
    %c1_116 = arith.constant 1 : index
    %c0_117 = arith.constant 0 : index
    %c0_118 = arith.constant 0 : index
    %286 = vector.load %arg12[%c1_116, %c0_117, %c0_118] : memref<2x1x32xf32, #tpu.memory_space<vmem>>, vector<1x1x32xf32>
    %287 = vector.shape_cast %286 : vector<1x1x32xf32> to vector<1x32xf32>
    %288 = vector.broadcast %287 : vector<1x32xf32> to vector<16x32xf32>
    %289 = arith.addf %285, %288 : vector<16x32xf32>
    %290 = arith.addf %273, %289 : vector<16x32xf32>
    %c1_119 = arith.constant 1 : index
    %c0_120 = arith.constant 0 : index
    %c0_121 = arith.constant 0 : index
    %291 = vector.load %arg13[%c1_119, %c0_120, %c0_121] : memref<2x8x32xf32, #tpu.memory_space<vmem>>, vector<1x8x32xf32>
    %292 = vector.shape_cast %291 : vector<1x8x32xf32> to vector<8x32xf32>
    %c1_122 = arith.constant 1 : index
    %c0_123 = arith.constant 0 : index
    %c0_124 = arith.constant 0 : index
    %293 = vector.load %arg14[%c1_122, %c0_123, %c0_124] : memref<2x8x32xf32, #tpu.memory_space<vmem>>, vector<1x8x32xf32>
    %294 = vector.shape_cast %293 : vector<1x8x32xf32> to vector<8x32xf32>
    %295 = vector.extract_strided_slice %290 {offsets = [0, 0], sizes = [8, 32], strides = [1, 1]} : vector<16x32xf32> to vector<8x32xf32>
    %296 = vector.shape_cast %295 : vector<8x32xf32> to vector<1x8x32xf32>
    %cst_125 = arith.constant dense<0.000000e+00> : vector<1xf32>
    %297 = vector.multi_reduction <add>, %296, %cst_125 [1, 2] : vector<1x8x32xf32> to vector<1xf32>
    %298 = vector.shape_cast %297 : vector<1xf32> to vector<1x1x1xf32>
    %299 = vector.extract %298[0, 0, 0] : f32 from vector<1x1x1xf32>
    %cst_126 = arith.constant 2.560000e+02 : f32
    %300 = arith.divf %299, %cst_126 : f32
    %301 = vector.broadcast %300 : f32 to vector<8x32xf32>
    %302 = arith.subf %295, %301 : vector<8x32xf32>
    %303 = arith.mulf %302, %302 : vector<8x32xf32>
    %304 = vector.shape_cast %303 : vector<8x32xf32> to vector<1x8x32xf32>
    %cst_127 = arith.constant dense<0.000000e+00> : vector<1xf32>
    %305 = vector.multi_reduction <add>, %304, %cst_127 [1, 2] : vector<1x8x32xf32> to vector<1xf32>
    %306 = vector.shape_cast %305 : vector<1xf32> to vector<1x1x1xf32>
    %307 = vector.extract %306[0, 0, 0] : f32 from vector<1x1x1xf32>
    %cst_128 = arith.constant 2.560000e+02 : f32
    %308 = arith.divf %307, %cst_128 : f32
    %309 = vector.broadcast %300 : f32 to vector<8x32xf32>
    %310 = arith.subf %295, %309 : vector<8x32xf32>
    %cst_129 = arith.constant 9.99999974E-6 : f32
    %311 = arith.addf %308, %cst_129 : f32
    %312 = math.rsqrt %311 : f32
    %313 = vector.broadcast %312 : f32 to vector<8x32xf32>
    %314 = arith.mulf %310, %313 : vector<8x32xf32>
    %315 = arith.mulf %314, %292 : vector<8x32xf32>
    %316 = arith.addf %315, %294 : vector<8x32xf32>
    %317 = vector.extract_strided_slice %290 {offsets = [8, 0], sizes = [8, 32], strides = [1, 1]} : vector<16x32xf32> to vector<8x32xf32>
    %318 = vector.shape_cast %317 : vector<8x32xf32> to vector<1x8x32xf32>
    %cst_130 = arith.constant dense<0.000000e+00> : vector<1xf32>
    %319 = vector.multi_reduction <add>, %318, %cst_130 [1, 2] : vector<1x8x32xf32> to vector<1xf32>
    %320 = vector.shape_cast %319 : vector<1xf32> to vector<1x1x1xf32>
    %321 = vector.extract %320[0, 0, 0] : f32 from vector<1x1x1xf32>
    %cst_131 = arith.constant 2.560000e+02 : f32
    %322 = arith.divf %321, %cst_131 : f32
    %323 = vector.broadcast %322 : f32 to vector<8x32xf32>
    %324 = arith.subf %317, %323 : vector<8x32xf32>
    %325 = arith.mulf %324, %324 : vector<8x32xf32>
    %326 = vector.shape_cast %325 : vector<8x32xf32> to vector<1x8x32xf32>
    %cst_132 = arith.constant dense<0.000000e+00> : vector<1xf32>
    %327 = vector.multi_reduction <add>, %326, %cst_132 [1, 2] : vector<1x8x32xf32> to vector<1xf32>
    %328 = vector.shape_cast %327 : vector<1xf32> to vector<1x1x1xf32>
    %329 = vector.extract %328[0, 0, 0] : f32 from vector<1x1x1xf32>
    %cst_133 = arith.constant 2.560000e+02 : f32
    %330 = arith.divf %329, %cst_133 : f32
    %331 = vector.broadcast %322 : f32 to vector<8x32xf32>
    %332 = arith.subf %317, %331 : vector<8x32xf32>
    %cst_134 = arith.constant 9.99999974E-6 : f32
    %333 = arith.addf %330, %cst_134 : f32
    %334 = math.rsqrt %333 : f32
    %335 = vector.broadcast %334 : f32 to vector<8x32xf32>
    %336 = arith.mulf %332, %335 : vector<8x32xf32>
    %337 = arith.mulf %336, %292 : vector<8x32xf32>
    %338 = arith.addf %337, %294 : vector<8x32xf32>
    %339 = tpu.concatenate %316, %338 in 0 : vector<8x32xf32>, vector<8x32xf32> -> vector<16x32xf32>
    %340 = vector.extract_strided_slice %339 {offsets = [0, 0], sizes = [1, 32], strides = [1, 1]} : vector<16x32xf32> to vector<1x32xf32>
    %341 = vector.extract_strided_slice %339 {offsets = [1, 0], sizes = [1, 32], strides = [1, 1]} : vector<16x32xf32> to vector<1x32xf32>
    %342 = vector.extract_strided_slice %339 {offsets = [2, 0], sizes = [1, 32], strides = [1, 1]} : vector<16x32xf32> to vector<1x32xf32>
    %343 = vector.extract_strided_slice %339 {offsets = [3, 0], sizes = [1, 32], strides = [1, 1]} : vector<16x32xf32> to vector<1x32xf32>
    %344 = vector.extract_strided_slice %339 {offsets = [4, 0], sizes = [1, 32], strides = [1, 1]} : vector<16x32xf32> to vector<1x32xf32>
    %345 = vector.extract_strided_slice %339 {offsets = [5, 0], sizes = [1, 32], strides = [1, 1]} : vector<16x32xf32> to vector<1x32xf32>
    %346 = vector.extract_strided_slice %339 {offsets = [6, 0], sizes = [1, 32], strides = [1, 1]} : vector<16x32xf32> to vector<1x32xf32>
    %347 = vector.extract_strided_slice %339 {offsets = [7, 0], sizes = [1, 32], strides = [1, 1]} : vector<16x32xf32> to vector<1x32xf32>
    %348 = tpu.concatenate %340, %341, %342, %343, %344, %345, %346, %347 in 1 : vector<1x32xf32>, vector<1x32xf32>, vector<1x32xf32>, vector<1x32xf32>, vector<1x32xf32>, vector<1x32xf32>, vector<1x32xf32>, vector<1x32xf32> -> vector<1x256xf32>
    %349 = vector.extract_strided_slice %339 {offsets = [8, 0], sizes = [1, 32], strides = [1, 1]} : vector<16x32xf32> to vector<1x32xf32>
    %350 = vector.extract_strided_slice %339 {offsets = [9, 0], sizes = [1, 32], strides = [1, 1]} : vector<16x32xf32> to vector<1x32xf32>
    %351 = vector.extract_strided_slice %339 {offsets = [10, 0], sizes = [1, 32], strides = [1, 1]} : vector<16x32xf32> to vector<1x32xf32>
    %352 = vector.extract_strided_slice %339 {offsets = [11, 0], sizes = [1, 32], strides = [1, 1]} : vector<16x32xf32> to vector<1x32xf32>
    %353 = vector.extract_strided_slice %339 {offsets = [12, 0], sizes = [1, 32], strides = [1, 1]} : vector<16x32xf32> to vector<1x32xf32>
    %354 = vector.extract_strided_slice %339 {offsets = [13, 0], sizes = [1, 32], strides = [1, 1]} : vector<16x32xf32> to vector<1x32xf32>
    %355 = vector.extract_strided_slice %339 {offsets = [14, 0], sizes = [1, 32], strides = [1, 1]} : vector<16x32xf32> to vector<1x32xf32>
    %356 = vector.extract_strided_slice %339 {offsets = [15, 0], sizes = [1, 32], strides = [1, 1]} : vector<16x32xf32> to vector<1x32xf32>
    %357 = tpu.concatenate %349, %350, %351, %352, %353, %354, %355, %356 in 1 : vector<1x32xf32>, vector<1x32xf32>, vector<1x32xf32>, vector<1x32xf32>, vector<1x32xf32>, vector<1x32xf32>, vector<1x32xf32>, vector<1x32xf32> -> vector<1x256xf32>
    %358 = tpu.concatenate %348, %357 in 0 : vector<1x256xf32>, vector<1x256xf32> -> vector<2x256xf32>
    %c0_135 = arith.constant 0 : index
    %c0_136 = arith.constant 0 : index
    %359 = vector.load %arg15[%c0_135, %c0_136] : memref<256x128xf32, #tpu.memory_space<vmem>>, vector<256x128xf32>
    %cst_137 = arith.constant dense<0.000000e+00> : vector<2x128xf32>
    %360 = tpu.matmul %358, %359, %cst_137 {dimension_numbers = #tpu.dot_dimension_numbers<[1], [0], [0], [1], [0, 0, 1, 1], [], []>} : vector<2x256xf32>, vector<256x128xf32>, vector<2x128xf32> -> vector<2x128xf32>
    %c0_138 = arith.constant 0 : index
    %c0_139 = arith.constant 0 : index
    %361 = vector.load %arg16[%c0_138, %c0_139] : memref<1x128xf32, #tpu.memory_space<vmem>>, vector<1x128xf32>
    %362 = vector.broadcast %361 : vector<1x128xf32> to vector<2x128xf32>
    %363 = arith.addf %360, %362 : vector<2x128xf32>
    %cst_140 = arith.constant dense<0xFF800000> : vector<2xf32>
    %364 = vector.multi_reduction <maximumf>, %363, %cst_140 [1] : vector<2x128xf32> to vector<2xf32>
    %365 = vector.shape_cast %364 : vector<2xf32> to vector<2x1xf32>
    %366 = vector.broadcast %365 : vector<2x1xf32> to vector<2x128xf32>
    %367 = arith.subf %363, %366 : vector<2x128xf32>
    %368 = math.exp %367 : vector<2x128xf32>
    %cst_141 = arith.constant dense<0.000000e+00> : vector<2xf32>
    %369 = vector.multi_reduction <add>, %368, %cst_141 [1] : vector<2x128xf32> to vector<2xf32>
    %370 = vector.shape_cast %369 : vector<2xf32> to vector<2x1xf32>
    %371 = tpu.reciprocal %370 {approx = true} : vector<2x1xf32> -> vector<2x1xf32>
    %372 = vector.broadcast %371 : vector<2x1xf32> to vector<2x128xf32>
    %373 = arith.mulf %368, %372 : vector<2x128xf32>
    %c0_142 = arith.constant 0 : index
    %c0_143 = arith.constant 0 : index
    %374 = vector.load %arg17[%c0_142, %c0_143] : memref<2x128xf32, #tpu.memory_space<vmem>>, vector<2x128xf32>
    tpu.vector_store %arg17[%c0_142, %c0_143], %373 {strides = array<i32>} : memref<2x128xf32, #tpu.memory_space<vmem>>, vector<2x128xf32>,
    return
  }
}

</mosaic_0001>

<llo_original>
// kernel: tpu_custom_call.1
$region0: #{tpu_custom_call.1}
  #allocation0 [shape = 'u32[]', space=smem, size = 0x4, offset = 0x4, fixed_abs, tag = 'smem constant byte address 0x4 - core index']
  #allocation1 [shape = 'u32[144,128]{1,0:T(1,128)}', space=vmem, size = 0x12000, scoped, tag = 'internal scratch']
  %s0 = inlined_call_operand.hbm [shape: s32[2], index: 0, kind: input, shape index: {}]
  %s1 = inlined_call_operand.hbm [shape: f32[2,8,32], index: 1, kind: input, shape index: {}]
  %s2 = inlined_call_operand.hbm [shape: f32[32,32], index: 2, kind: input, shape index: {}]
  %s3 = inlined_call_operand.vmem [shape: f32[1,32], index: 3, kind: input, shape index: {}]
  %s4 = inlined_call_operand.hbm [shape: f32[16,32], index: 4, kind: input, shape index: {}]
  %s5 = inlined_call_operand.vmem [shape: f32[2,32,96], index: 5, kind: input, shape index: {}]
  %s6 = inlined_call_operand.vmem [shape: f32[2,32,32], index: 6, kind: input, shape index: {}]
  %s7 = inlined_call_operand.vmem [shape: f32[2,8,32], index: 7, kind: input, shape index: {}]
  %s8 = inlined_call_operand.hbm [shape: f32[2,8,32], index: 8, kind: input, shape index: {}]
  %s9 = inlined_call_operand.vmem [shape: f32[2,32,64], index: 9, kind: input, shape index: {}]
  %s10 = inlined_call_operand.hbm [shape: f32[2,1,64], index: 10, kind: input, shape index: {}]
  %s11 = inlined_call_operand.vmem [shape: f32[2,64,32], index: 11, kind: input, shape index: {}]
  %s12 = inlined_call_operand.hbm [shape: f32[2,1,32], index: 12, kind: input, shape index: {}]
  %s13 = inlined_call_operand.vmem [shape: f32[2,8,32], index: 13, kind: input, shape index: {}]
  %s14 = inlined_call_operand.vmem [shape: f32[2,8,32], index: 14, kind: input, shape index: {}]
  %s15 = inlined_call_operand.hbm [shape: f32[256,128], index: 15, kind: input, shape index: {}]
  %s16 = inlined_call_operand.vmem [shape: f32[1,128], index: 16, kind: input, shape index: {}]
  %s17 = inlined_call_operand.hbm [shape: f32[2,128], index: 17, kind: output, shape index: {}]
  %s18 = sld [smem:[#allocation0]]
  $region110: #{tpu_custom_call.1} parent=0
    _
  %s20 = ssub.s32 1, %s18
  %s21 = scalar_select 0, %s20, %s18
  $region1: #{tpu_custom_call.1} parent=0
    #allocation2 [shape = 'u8[512]{0}', space=smem, size = 0x200, scoped, tag = 'input window, operand 0, single buffered']
    #allocation3 [shape = 's32[1]{0}', space=sflag, size = 0x4, scoped, tag = 'scoped memory for tpu_custom_call.1']
    #allocation4 [shape = 's32[1]{0}', space=sflag, size = 0x4, scoped, tag = 'scoped memory for tpu_custom_call.1']
    #allocation5 [shape = 's32[1]{0}', space=sflag, size = 0x4, scoped, tag = 'scoped memory for tpu_custom_call.1']
    #allocation6 [shape = 'u8[8192]{0}', space=vmem, size = 0x2000, scoped, tag = 'input window, operand 1, single buffered']
    #allocation7 [shape = 'u8[16384]{0}', space=vmem, size = 0x4000, scoped, tag = 'input window, operand 2, single buffered']
    #allocation8 [shape = 's32[1]{0}', space=sflag, size = 0x4, scoped, tag = 'scoped memory for tpu_custom_call.1']
    #allocation9 [shape = 'u8[8192]{0}', space=vmem, size = 0x2000, scoped, tag = 'input window, operand 4, single buffered']
    #allocation10 [shape = 'u8[8192]{0}', space=vmem, size = 0x2000, scoped, tag = 'input window, operand 8, single buffered']
    #allocation11 [shape = 's32[1]{0}', space=sflag, size = 0x4, scoped, tag = 'scoped memory for tpu_custom_call.1']
    #allocation12 [shape = 'u8[1024]{0}', space=vmem, size = 0x400, scoped, tag = 'input window, operand 10, single buffered']
    #allocation13 [shape = 'u8[1024]{0}', space=vmem, size = 0x400, scoped, tag = 'input window, operand 12, single buffered']
    #allocation14 [shape = 's32[1]{0}', space=sflag, size = 0x4, scoped, tag = 'scoped memory for tpu_custom_call.1']
    #allocation15 [shape = 'u8[131072]{0}', space=vmem, size = 0x20000, scoped, tag = 'input window, operand 15, single buffered']
    #allocation16 [shape = 'u8[1024]{0}', space=vmem, size = 0x400, scoped, tag = 'output window, operand 0, single buffered']
    %22 = vsyncpa [#allocation5], 0
    %23 = vsyncpa [#allocation3], 0
    %24 = vsyncpa [#allocation8], 0
    %25 = vsyncpa [#allocation11], 0
    %26 = vsyncpa [#allocation14], 0
    %27 = vsyncpa [#allocation4], 0
    // Predicated region
    $region2: #{tpu_custom_call.1} parent=1 // pred_check
      _
    $region3: #{tpu_custom_call.1} parent=1 // pred_check_branch
      %29 = sbr.rel (0) target = $region5
    $region4: #{tpu_custom_call.1} parent=1 // pred_region
      %s31 = ssub.s32 16, 16
      %32 = vsyncadd [#allocation5], %s31
      %35 = dma.hbm_to_smem %s0, 16, [#allocation2], [#allocation5]
    $region5: #{tpu_custom_call.1} parent=1 // pred_fallthru
      _
    // Predicated region
    $region6: #{tpu_custom_call.1} parent=1 // pred_check
      _
    $region7: #{tpu_custom_call.1} parent=1 // pred_check_branch
      %37 = sbr.rel (0) target = $region9
    $region8: #{tpu_custom_call.1} parent=1 // pred_region
      %s39 = ssub.s32 256, 256
      %40 = vsyncadd [#allocation3], %s39
      %s41 = sshll.u32 [#allocation6], 4
      %s42 = int_to_ptr.vmem [resolvable:$true] %s41
      %47 = dma.hbm_to_vmem [thread:$0]  %s1, 256, %s42, [#allocation3], 128, 128, 8
    $region9: #{tpu_custom_call.1} parent=1 // pred_fallthru
      _
    // Predicated region
    $region10: #{tpu_custom_call.1} parent=1 // pred_check
      _
    $region11: #{tpu_custom_call.1} parent=1 // pred_check_branch
      %49 = sbr.rel (0) target = $region13
    $region12: #{tpu_custom_call.1} parent=1 // pred_region
      %s51 = ssub.s32 512, 512
      %52 = vsyncadd [#allocation8], %s51
      %s53 = sshll.u32 [#allocation7], 4
      %s54 = int_to_ptr.vmem [resolvable:$true] %s53
      %59 = dma.hbm_to_vmem [thread:$0]  %s2, 512, %s54, [#allocation8], 128, 128, 8
    $region13: #{tpu_custom_call.1} parent=1 // pred_fallthru
      _
    // Predicated region
    $region14: #{tpu_custom_call.1} parent=1 // pred_check
      _
    $region15: #{tpu_custom_call.1} parent=1 // pred_check_branch
      %61 = sbr.rel (0) target = $region17
    $region16: #{tpu_custom_call.1} parent=1 // pred_region
      _
    $region17: #{tpu_custom_call.1} parent=1 // pred_fallthru
      _
    // Predicated region
    $region18: #{tpu_custom_call.1} parent=1 // pred_check
      _
    $region19: #{tpu_custom_call.1} parent=1 // pred_check_branch
      %63 = sbr.rel (0) target = $region21
    $region20: #{tpu_custom_call.1} parent=1 // pred_region
      %s65 = ssub.s32 256, 256
      %66 = vsyncadd [#allocation8], %s65
      %s67 = sshll.u32 [#allocation9], 4
      %s68 = int_to_ptr.vmem [resolvable:$true] %s67
      %73 = dma.hbm_to_vmem [thread:$0]  %s4, 256, %s68, [#allocation8], 128, 128, 8
    $region21: #{tpu_custom_call.1} parent=1 // pred_fallthru
      _
    // Predicated region
    $region22: #{tpu_custom_call.1} parent=1 // pred_check
      _
    $region23: #{tpu_custom_call.1} parent=1 // pred_check_branch
      %75 = sbr.rel (0) target = $region25
    $region24: #{tpu_custom_call.1} parent=1 // pred_region
      _
    $region25: #{tpu_custom_call.1} parent=1 // pred_fallthru
      _
    // Predicated region
    $region26: #{tpu_custom_call.1} parent=1 // pred_check
      _
    $region27: #{tpu_custom_call.1} parent=1 // pred_check_branch
      %77 = sbr.rel (0) target = $region29
    $region28: #{tpu_custom_call.1} parent=1 // pred_region
      _
    $region29: #{tpu_custom_call.1} parent=1 // pred_fallthru
      _
    // Predicated region
    $region30: #{tpu_custom_call.1} parent=1 // pred_check
      _
    $region31: #{tpu_custom_call.1} parent=1 // pred_check_branch
      %79 = sbr.rel (0) target = $region33
    $region32: #{tpu_custom_call.1} parent=1 // pred_region
      _
    $region33: #{tpu_custom_call.1} parent=1 // pred_fallthru
      _
    // Predicated region
    $region34: #{tpu_custom_call.1} parent=1 // pred_check
      _
    $region35: #{tpu_custom_call.1} parent=1 // pred_check_branch
      %81 = sbr.rel (0) target = $region37
    $region36: #{tpu_custom_call.1} parent=1 // pred_region
      %s83 = ssub.s32 256, 256
      %84 = vsyncadd [#allocation11], %s83
      %s85 = sshll.u32 [#allocation10], 4
      %s86 = int_to_ptr.vmem [resolvable:$true] %s85
      %91 = dma.hbm_to_vmem [thread:$0]  %s8, 256, %s86, [#allocation11], 128, 128, 8
    $region37: #{tpu_custom_call.1} parent=1 // pred_fallthru
      _
    // Predicated region
    $region38: #{tpu_custom_call.1} parent=1 // pred_check
      _
    $region39: #{tpu_custom_call.1} parent=1 // pred_check_branch
      %93 = sbr.rel (0) target = $region41
    $region40: #{tpu_custom_call.1} parent=1 // pred_region
      _
    $region41: #{tpu_custom_call.1} parent=1 // pred_fallthru
      _
    // Predicated region
    $region42: #{tpu_custom_call.1} parent=1 // pred_check
      _
    $region43: #{tpu_custom_call.1} parent=1 // pred_check_branch
      %95 = sbr.rel (0) target = $region45
    $region44: #{tpu_custom_call.1} parent=1 // pred_region
      %s97 = ssub.s32 32, 32
      %98 = vsyncadd [#allocation11], %s97
      %s99 = sshll.u32 [#allocation12], 4
      %s100 = int_to_ptr.vmem [resolvable:$true] %s99
      %105 = dma.hbm_to_vmem [thread:$0]  %s10, 32, %s100, [#allocation11], 16, 16, 1
    $region45: #{tpu_custom_call.1} parent=1 // pred_fallthru
      _
    // Predicated region
    $region46: #{tpu_custom_call.1} parent=1 // pred_check
      _
    $region47: #{tpu_custom_call.1} parent=1 // pred_check_branch
      %107 = sbr.rel (0) target = $region49
    $region48: #{tpu_custom_call.1} parent=1 // pred_region
      _
    $region49: #{tpu_custom_call.1} parent=1 // pred_fallthru
      _
    // Predicated region
    $region50: #{tpu_custom_call.1} parent=1 // pred_check
      _
    $region51: #{tpu_custom_call.1} parent=1 // pred_check_branch
      %109 = sbr.rel (0) target = $region53
    $region52: #{tpu_custom_call.1} parent=1 // pred_region
      %s111 = ssub.s32 32, 32
      %112 = vsyncadd [#allocation14], %s111
      %s113 = sshll.u32 [#allocation13], 4
      %s114 = int_to_ptr.vmem [resolvable:$true] %s113
      %119 = dma.hbm_to_vmem [thread:$0]  %s12, 32, %s114, [#allocation14], 16, 16, 1
    $region53: #{tpu_custom_call.1} parent=1 // pred_fallthru
      _
    // Predicated region
    $region54: #{tpu_custom_call.1} parent=1 // pred_check
      _
    $region55: #{tpu_custom_call.1} parent=1 // pred_check_branch
      %121 = sbr.rel (0) target = $region57
    $region56: #{tpu_custom_call.1} parent=1 // pred_region
      _
    $region57: #{tpu_custom_call.1} parent=1 // pred_fallthru
      _
    // Predicated region
    $region58: #{tpu_custom_call.1} parent=1 // pred_check
      _
    $region59: #{tpu_custom_call.1} parent=1 // pred_check_branch
      %123 = sbr.rel (0) target = $region61
    $region60: #{tpu_custom_call.1} parent=1 // pred_region
      _
    $region61: #{tpu_custom_call.1} parent=1 // pred_fallthru
      _
    // Predicated region
    $region62: #{tpu_custom_call.1} parent=1 // pred_check
      _
    $region63: #{tpu_custom_call.1} parent=1 // pred_check_branch
      %125 = sbr.rel (0) target = $region65
    $region64: #{tpu_custom_call.1} parent=1 // pred_region
      %s127 = ssub.s32 4096, 4096
      %128 = vsyncadd [#allocation14], %s127
      %s129 = sshll.u32 [#allocation15], 4
      %s130 = int_to_ptr.vmem [resolvable:$true] %s129
      %135 = dma.hbm_to_vmem [thread:$0]  %s15, 4096, %s130, [#allocation14], 128, 128, 8
    $region65: #{tpu_custom_call.1} parent=1 // pred_fallthru
      _
    // Predicated region
    $region66: #{tpu_custom_call.1} parent=1 // pred_check
      _
    $region67: #{tpu_custom_call.1} parent=1 // pred_check_branch
      %137 = sbr.rel (0) target = $region69
    $region68: #{tpu_custom_call.1} parent=1 // pred_region
      _
    $region69: #{tpu_custom_call.1} parent=1 // pred_fallthru
      _
    // Predicated region
    $region70: #{tpu_custom_call.1} parent=1 // pred_check
      _
    $region71: #{tpu_custom_call.1} parent=1 // pred_check_branch
      %139 = sbr.rel (0) target = $region73
    $region72: #{tpu_custom_call.1} parent=1 // pred_region
      %140 = dma.done [#allocation5], 16
    $region73: #{tpu_custom_call.1} parent=1 // pred_fallthru
      _
    // Predicated region
    $region74: #{tpu_custom_call.1} parent=1 // pred_check
      _
    $region75: #{tpu_custom_call.1} parent=1 // pred_check_branch
      %142 = sbr.rel (0) target = $region77
    $region76: #{tpu_custom_call.1} parent=1 // pred_region
      %143 = dma.done [#allocation3], 256
    $region77: #{tpu_custom_call.1} parent=1 // pred_fallthru
      _
    // Predicated region
    $region78: #{tpu_custom_call.1} parent=1 // pred_check
      _
    $region79: #{tpu_custom_call.1} parent=1 // pred_check_branch
      %145 = sbr.rel (0) target = $region81
    $region80: #{tpu_custom_call.1} parent=1 // pred_region
      %146 = dma.done [#allocation8], 512
    $region81: #{tpu_custom_call.1} parent=1 // pred_fallthru
      _
    // Predicated region
    $region82: #{tpu_custom_call.1} parent=1 // pred_check
      _
    $region83: #{tpu_custom_call.1} parent=1 // pred_check_branch
      %148 = sbr.rel (0) target = $region85
    $region84: #{tpu_custom_call.1} parent=1 // pred_region
      %149 = dma.done [#allocation8], 256
    $region85: #{tpu_custom_call.1} parent=1 // pred_fallthru
      _
    // Predicated region
    $region86: #{tpu_custom_call.1} parent=1 // pred_check
      _
    $region87: #{tpu_custom_call.1} parent=1 // pred_check_branch
      %151 = sbr.rel (0) target = $region89
    $region88: #{tpu_custom_call.1} parent=1 // pred_region
      %152 = dma.done [#allocation11], 256
    $region89: #{tpu_custom_call.1} parent=1 // pred_fallthru
      _
    // Predicated region
    $region90: #{tpu_custom_call.1} parent=1 // pred_check
      _
    $region91: #{tpu_custom_call.1} parent=1 // pred_check_branch
      %154 = sbr.rel (0) target = $region93
    $region92: #{tpu_custom_call.1} parent=1 // pred_region
      %155 = dma.done [#allocation11], 32
    $region93: #{tpu_custom_call.1} parent=1 // pred_fallthru
      _
    // Predicated region
    $region94: #{tpu_custom_call.1} parent=1 // pred_check
      _
    $region95: #{tpu_custom_call.1} parent=1 // pred_check_branch
      %157 = sbr.rel (0) target = $region97
    $region96: #{tpu_custom_call.1} parent=1 // pred_region
      %158 = dma.done [#allocation14], 32
    $region97: #{tpu_custom_call.1} parent=1 // pred_fallthru
      _
    // Predicated region
    $region98: #{tpu_custom_call.1} parent=1 // pred_check
      _
    $region99: #{tpu_custom_call.1} parent=1 // pred_check_branch
      %160 = sbr.rel (0) target = $region101
    $region100: #{tpu_custom_call.1} parent=1 // pred_region
      %161 = dma.done [#allocation14], 4096
    $region101: #{tpu_custom_call.1} parent=1 // pred_fallthru
      _
    %162 = sfence
    %v163 = vld [vmem:[#allocation6] sm:$0xff]
    %v164 = vld [vmem:[#allocation6 + $0x8] sm:$0xff]
    %v165 = vld [vmem:[#allocation7] sm:$0xff]
    %v166 = vld [vmem:[#allocation7 + $0x8] sm:$0xff]
    %v167 = vld [vmem:[#allocation7 + $0x10] sm:$0xff]
    %v168 = vld [vmem:[#allocation7 + $0x18] sm:$0xff]
    %v169 = vld [vmem:[%s3] sm:$0x1]
    %v171 = vlaneseq
    %v172 = vshrl.u32 %v171, 7
    %v173 = vsub.s32 0, %v172
    %v174 = vrot.slane %v169, %v173
    %vm176 = vcmask 261120
    %v178 = vsel %vm176, %v163, 0
    %v181 = vsel %vm176, %v164, 0
    %183 = vmatprep.subr.mxu0 0.0
    %184 = vmatpush1.msra.mxu0 %v165
    %185 = vmatprep.subr.mxu0 0.0
    %186 = vmatpush1.msra.mxu0 %v166
    %187 = vmatprep.subr.mxu0 0.0
    %188 = vmatpush1.msra.mxu0 %v167
    %189 = vmatprep.subr.mxu0 0.0
    %190 = vmatpush1.msra.mxu0 %v168
    %191 = vmatprep.subr.mxu0 0.0
    %192 = vmatpush1.msra.mxu0 0.0
    %193 = vmatprep.subr.mxu0 0.0
    %194 = vmatpush1.msra.mxu0 0.0
    %195 = vmatprep.subr.mxu0 0.0
    %196 = vmatpush1.msra.mxu0 0.0
    %197 = vmatprep.subr.mxu0 0.0
    %198 = vmatpush1.msra.mxu0 0.0
    %199 = vmatprep.subr.mxu0 0.0
    %200 = vmatpush1.msra.mxu0 0.0
    %201 = vmatprep.subr.mxu0 0.0
    %202 = vmatpush1.msra.mxu0 0.0
    %203 = vmatprep.subr.mxu0 0.0
    %204 = vmatpush1.msra.mxu0 0.0
    %205 = vmatprep.subr.mxu0 0.0
    %206 = vmatpush1.msra.mxu0 0.0
    %207 = vmatprep.subr.mxu0 0.0
    %208 = vmatpush1.msra.mxu0 0.0
    %209 = vmatprep.subr.mxu0 0.0
    %210 = vmatpush1.msra.mxu0 0.0
    %211 = vmatprep.subr.mxu0 0.0
    %212 = vmatpush1.msra.mxu0 0.0
    %213 = vmatprep.subr.mxu0 0.0
    %214 = vmatpush1.msra.mxu0 0.0
    %215 = vmatprep.subr.mxu0 0.0
    %216 = vmatpush1.msra.mxu0 0.0
    %217 = vmatprep.subr.mxu0 0.0
    %218 = vmatpush1.msra.mxu0 0.0
    %219 = vmatprep.subr.mxu0 0.0
    %220 = vmatpush1.msra.mxu0 0.0
    %221 = vmatprep.subr.mxu0 0.0
    %222 = vmatpush1.msra.mxu0 0.0
    %223 = vmatprep.subr.mxu0 0.0
    %224 = vmatpush1.msra.mxu0 0.0
    %225 = vmatprep.subr.mxu0 0.0
    %226 = vmatpush1.msra.mxu0 0.0
    %227 = vmatprep.subr.mxu0 0.0
    %228 = vmatpush1.msra.mxu0 0.0
    %229 = vmatprep.subr.mxu0 0.0
    %230 = vmatpush1.msra.mxu0 0.0
    %231 = vmatprep.subr.mxu0 0.0
    %232 = vmatpush1.msra.mxu0 0.0
    %233 = vmatprep.subr.mxu0 0.0
    %234 = vmatpush1.msra.mxu0 0.0
    %235 = vmatprep.subr.mxu0 0.0
    %236 = vmatpush1.msra.mxu0 0.0
    %237 = vmatprep.subr.mxu0 0.0
    %238 = vmatpush1.msra.mxu0 0.0
    %239 = vmatprep.subr.mxu0 0.0
    %240 = vmatpush1.msra.mxu0 0.0
    %241 = vmatprep.subr.mxu0 0.0
    %242 = vmatpush1.msra.mxu0 0.0
    %243 = vmatprep.subr.mxu0 0.0
    %244 = vmatpush1.msra.mxu0 0.0
    %245 = vmatprep.subr.mxu0 0.0
    %246 = vmatpush1.msra.mxu0 0.0
    %247 = vmatprep.mubr.f32.mxu0 0.0
    %248 = vmatmul.mubr.f32.gmra.mrb[0].mxu0 %v178
    %v249 = vpop.f32.mrb[0].mxu0
    %v250 = vadd.f32 %v174, %v249
    %v251 = vpop.f32.mrb[0].mxu0
    %252 = vmatprep.mubr.f32.mxu0 0.0
    %253 = vmatmul.mubr.f32.gmra.mrb[0].mxu0 %v181
    %v254 = vpop.f32.mrb[0].mxu0
    %v255 = vadd.f32 %v174, %v254
    %v256 = vpop.f32.mrb[0].mxu0
    %257 = vdwg.mxu0
    %v258 = vmax.f32 %v250, 0.0
    %v259 = vmax.f32 %v255, 0.0
    %v260 = vmul.f32 %v258, 5.656854
    %v261 = vmul.f32 %v259, 5.656854
    %v262 = vld [vmem:[#allocation9] sm:$0xff]
    %v263 = vld [vmem:[#allocation9 + $0x8] sm:$0xff]
    %v264 = vadd.f32 %v260, %v262
    %v265 = vadd.f32 %v261, %v263
    %v266 = vlaneseq
    %v267 = vand.u32 %v266, 127
    %s268 = sld [smem:[#allocation2]]
    %v269 = vstv %s268
    %s270 = sld [smem:[#allocation2 + $0x1]]
    %v271 = vstv %s270
    %vm272 = vcmp.lt.s32.totalorder %v267, %v269
    %vm273 = vcmp.lt.s32.totalorder %v267, %v271
    %v274 = vld [vmem:[%s5] sm:$0xff]
    %v275 = vld [vmem:[%s5 + $0x8] sm:$0xff]
    %v276 = vld [vmem:[%s5 + $0x10] sm:$0xff]
    %v277 = vld [vmem:[%s5 + $0x18] sm:$0xff]
    %v279 = vsel %vm176, %v264, 0
    %v282 = vsel %vm176, %v265, 0
    %284 = vmatprep.subr.mxu0 0.0
    %285 = vmatpush1.msra.mxu0 %v274
    %286 = vmatprep.subr.mxu0 0.0
    %287 = vmatpush1.msra.mxu0 %v275
    %288 = vmatprep.subr.mxu0 0.0
    %289 = vmatpush1.msra.mxu0 %v276
    %290 = vmatprep.subr.mxu0 0.0
    %291 = vmatpush1.msra.mxu0 %v277
    %292 = vmatprep.subr.mxu0 0.0
    %293 = vmatpush1.msra.mxu0 0.0
    %294 = vmatprep.subr.mxu0 0.0
    %295 = vmatpush1.msra.mxu0 0.0
    %296 = vmatprep.subr.mxu0 0.0
    %297 = vmatpush1.msra.mxu0 0.0
    %298 = vmatprep.subr.mxu0 0.0
    %299 = vmatpush1.msra.mxu0 0.0
    %300 = vmatprep.subr.mxu0 0.0
    %301 = vmatpush1.msra.mxu0 0.0
    %302 = vmatprep.subr.mxu0 0.0
    %303 = vmatpush1.msra.mxu0 0.0
    %304 = vmatprep.subr.mxu0 0.0
    %305 = vmatpush1.msra.mxu0 0.0
    %306 = vmatprep.subr.mxu0 0.0
    %307 = vmatpush1.msra.mxu0 0.0
    %308 = vmatprep.subr.mxu0 0.0
    %309 = vmatpush1.msra.mxu0 0.0
    %310 = vmatprep.subr.mxu0 0.0
    %311 = vmatpush1.msra.mxu0 0.0
    %312 = vmatprep.subr.mxu0 0.0
    %313 = vmatpush1.msra.mxu0 0.0
    %314 = vmatprep.subr.mxu0 0.0
    %315 = vmatpush1.msra.mxu0 0.0
    %316 = vmatprep.subr.mxu0 0.0
    %317 = vmatpush1.msra.mxu0 0.0
    %318 = vmatprep.subr.mxu0 0.0
    %319 = vmatpush1.msra.mxu0 0.0
    %320 = vmatprep.subr.mxu0 0.0
    %321 = vmatpush1.msra.mxu0 0.0
    %322 = vmatprep.subr.mxu0 0.0
    %323 = vmatpush1.msra.mxu0 0.0
    %324 = vmatprep.subr.mxu0 0.0
    %325 = vmatpush1.msra.mxu0 0.0
    %326 = vmatprep.subr.mxu0 0.0
    %327 = vmatpush1.msra.mxu0 0.0
    %328 = vmatprep.subr.mxu0 0.0
    %329 = vmatpush1.msra.mxu0 0.0
    %330 = vmatprep.subr.mxu0 0.0
    %331 = vmatpush1.msra.mxu0 0.0
    %332 = vmatprep.subr.mxu0 0.0
    %333 = vmatpush1.msra.mxu0 0.0
    %334 = vmatprep.subr.mxu0 0.0
    %335 = vmatpush1.msra.mxu0 0.0
    %336 = vmatprep.subr.mxu0 0.0
    %337 = vmatpush1.msra.mxu0 0.0
    %338 = vmatprep.subr.mxu0 0.0
    %339 = vmatpush1.msra.mxu0 0.0
    %340 = vmatprep.subr.mxu0 0.0
    %341 = vmatpush1.msra.mxu0 0.0
    %342 = vmatprep.subr.mxu0 0.0
    %343 = vmatpush1.msra.mxu0 0.0
    %344 = vmatprep.subr.mxu0 0.0
    %345 = vmatpush1.msra.mxu0 0.0
    %346 = vmatprep.subr.mxu0 0.0
    %347 = vmatpush1.msra.mxu0 0.0
    %348 = vmatprep.mubr.f32.mxu0 0.0
    %349 = vmatmul.mubr.f32.gmra.mrb[0].mxu0 %v279
    %v350 = vpop.f32.mrb[0].mxu0
    %v351 = vadd.f32 0.0, %v350
    %v352 = vpop.f32.mrb[0].mxu0
    %353 = vmatprep.mubr.f32.mxu0 0.0
    %354 = vmatmul.mubr.f32.gmra.mrb[0].mxu0 %v282
    %v355 = vpop.f32.mrb[0].mxu0
    %v356 = vadd.f32 0.0, %v355
    %v357 = vpop.f32.mrb[0].mxu0
    %358 = vdwg.mxu0
    %361 = vrot.lane.b32.xlu0 %v351, 112
    %v362 = vpop.permute.xlu0 %361
    %363 = vrot.lane.b32.xlu0 %v356, 112
    %v364 = vpop.permute.xlu0 %363
    %365 = vrot.lane.b32.xlu0 %v351, 96
    %v366 = vpop.permute.xlu0 %365
    %vm367 = vcmask 130048
    %v368 = vsel %vm367, %v351, 0
    %v370 = vsel %vm367, %v366, 0
    %372 = vmatprep.subr.mxu0 0.0
    %373 = vmatpush1.xpose.msra.mxu0 %v370
    %374 = vmatprep.subr.mxu0 0.0
    %375 = vmatpush1.xpose.msra.mxu0 0.0
    %376 = vmatprep.subr.mxu0 0.0
    %377 = vmatpush1.xpose.msra.mxu0 0.0
    %378 = vmatprep.subr.mxu0 0.0
    %379 = vmatpush1.xpose.msra.mxu0 0.0
    %380 = vmatprep.subr.mxu0 0.0
    %381 = vmatpush1.xpose.msra.mxu0 0.0
    %382 = vmatprep.subr.mxu0 0.0
    %383 = vmatpush1.xpose.msra.mxu0 0.0
    %384 = vmatprep.subr.mxu0 0.0
    %385 = vmatpush1.xpose.msra.mxu0 0.0
    %386 = vmatprep.subr.mxu0 0.0
    %387 = vmatpush1.xpose.msra.mxu0 0.0
    %388 = vmatprep.subr.mxu0 0.0
    %389 = vmatpush1.xpose.msra.mxu0 0.0
    %390 = vmatprep.subr.mxu0 0.0
    %391 = vmatpush1.xpose.msra.mxu0 0.0
    %392 = vmatprep.subr.mxu0 0.0
    %393 = vmatpush1.xpose.msra.mxu0 0.0
    %394 = vmatprep.subr.mxu0 0.0
    %395 = vmatpush1.xpose.msra.mxu0 0.0
    %396 = vmatprep.subr.mxu0 0.0
    %397 = vmatpush1.xpose.msra.mxu0 0.0
    %398 = vmatprep.subr.mxu0 0.0
    %399 = vmatpush1.xpose.msra.mxu0 0.0
    %400 = vmatprep.subr.mxu0 0.0
    %401 = vmatpush1.xpose.msra.mxu0 0.0
    %402 = vmatprep.subr.mxu0 0.0
    %403 = vmatpush1.xpose.msra.mxu0 0.0
    %404 = vmatprep.subr.mxu0 0.0
    %405 = vmatpush1.xpose.msra.mxu0 0.0
    %406 = vmatprep.subr.mxu0 0.0
    %407 = vmatpush1.xpose.msra.mxu0 0.0
    %408 = vmatprep.subr.mxu0 0.0
    %409 = vmatpush1.xpose.msra.mxu0 0.0
    %410 = vmatprep.subr.mxu0 0.0
    %411 = vmatpush1.xpose.msra.mxu0 0.0
    %412 = vmatprep.subr.mxu0 0.0
    %413 = vmatpush1.xpose.msra.mxu0 0.0
    %414 = vmatprep.subr.mxu0 0.0
    %415 = vmatpush1.xpose.msra.mxu0 0.0
    %416 = vmatprep.subr.mxu0 0.0
    %417 = vmatpush1.xpose.msra.mxu0 0.0
    %418 = vmatprep.subr.mxu0 0.0
    %419 = vmatpush1.xpose.msra.mxu0 0.0
    %420 = vmatprep.subr.mxu0 0.0
    %421 = vmatpush1.xpose.msra.mxu0 0.0
    %422 = vmatprep.subr.mxu0 0.0
    %423 = vmatpush1.xpose.msra.mxu0 0.0
    %424 = vmatprep.subr.mxu0 0.0
    %425 = vmatpush1.xpose.msra.mxu0 0.0
    %426 = vmatprep.subr.mxu0 0.0
    %427 = vmatpush1.xpose.msra.mxu0 0.0
    %428 = vmatprep.subr.mxu0 0.0
    %429 = vmatpush1.xpose.msra.mxu0 0.0
    %430 = vmatprep.subr.mxu0 0.0
    %431 = vmatpush1.xpose.msra.mxu0 0.0
    %432 = vmatprep.subr.mxu0 0.0
    %433 = vmatpush1.xpose.msra.mxu0 0.0
    %434 = vmatprep.subr.mxu0 0.0
    %435 = vmatpush1.xpose.msra.mxu0 0.0
    %436 = vmatprep.mubr.f32.mxu0 0.0
    %437 = vmatmul.mubr.f32.gmra.mrb[0].mxu0 %v368
    %v438 = vpop.f32.mrb[0].mxu0
    %v439 = vadd.f32 0.0, %v438
    %v440 = vpop.f32.mrb[0].mxu0
    %441 = vdwg.mxu0
    %442 = vrot.lane.b32.xlu0 %v356, 96
    %v443 = vpop.permute.xlu0 %442
    %v444 = vsel %vm367, %v356, 0
    %v446 = vsel %vm367, %v443, 0
    %448 = vmatprep.subr.mxu0 0.0
    %449 = vmatpush1.xpose.msra.mxu0 %v446
    %450 = vmatprep.subr.mxu0 0.0
    %451 = vmatpush1.xpose.msra.mxu0 0.0
    %452 = vmatprep.subr.mxu0 0.0
    %453 = vmatpush1.xpose.msra.mxu0 0.0
    %454 = vmatprep.subr.mxu0 0.0
    %455 = vmatpush1.xpose.msra.mxu0 0.0
    %456 = vmatprep.subr.mxu0 0.0
    %457 = vmatpush1.xpose.msra.mxu0 0.0
    %458 = vmatprep.subr.mxu0 0.0
    %459 = vmatpush1.xpose.msra.mxu0 0.0
    %460 = vmatprep.subr.mxu0 0.0
    %461 = vmatpush1.xpose.msra.mxu0 0.0
    %462 = vmatprep.subr.mxu0 0.0
    %463 = vmatpush1.xpose.msra.mxu0 0.0
    %464 = vmatprep.subr.mxu0 0.0
    %465 = vmatpush1.xpose.msra.mxu0 0.0
    %466 = vmatprep.subr.mxu0 0.0
    %467 = vmatpush1.xpose.msra.mxu0 0.0
    %468 = vmatprep.subr.mxu0 0.0
    %469 = vmatpush1.xpose.msra.mxu0 0.0
    %470 = vmatprep.subr.mxu0 0.0
    %471 = vmatpush1.xpose.msra.mxu0 0.0
    %472 = vmatprep.subr.mxu0 0.0
    %473 = vmatpush1.xpose.msra.mxu0 0.0
    %474 = vmatprep.subr.mxu0 0.0
    %475 = vmatpush1.xpose.msra.mxu0 0.0
    %476 = vmatprep.subr.mxu0 0.0
    %477 = vmatpush1.xpose.msra.mxu0 0.0
    %478 = vmatprep.subr.mxu0 0.0
    %479 = vmatpush1.xpose.msra.mxu0 0.0
    %480 = vmatprep.subr.mxu0 0.0
    %481 = vmatpush1.xpose.msra.mxu0 0.0
    %482 = vmatprep.subr.mxu0 0.0
    %483 = vmatpush1.xpose.msra.mxu0 0.0
    %484 = vmatprep.subr.mxu0 0.0
    %485 = vmatpush1.xpose.msra.mxu0 0.0
    %486 = vmatprep.subr.mxu0 0.0
    %487 = vmatpush1.xpose.msra.mxu0 0.0
    %488 = vmatprep.subr.mxu0 0.0
    %489 = vmatpush1.xpose.msra.mxu0 0.0
    %490 = vmatprep.subr.mxu0 0.0
    %491 = vmatpush1.xpose.msra.mxu0 0.0
    %492 = vmatprep.subr.mxu0 0.0
    %493 = vmatpush1.xpose.msra.mxu0 0.0
    %494 = vmatprep.subr.mxu0 0.0
    %495 = vmatpush1.xpose.msra.mxu0 0.0
    %496 = vmatprep.subr.mxu0 0.0
    %497 = vmatpush1.xpose.msra.mxu0 0.0
    %498 = vmatprep.subr.mxu0 0.0
    %499 = vmatpush1.xpose.msra.mxu0 0.0
    %500 = vmatprep.subr.mxu0 0.0
    %501 = vmatpush1.xpose.msra.mxu0 0.0
    %502 = vmatprep.subr.mxu0 0.0
    %503 = vmatpush1.xpose.msra.mxu0 0.0
    %504 = vmatprep.subr.mxu0 0.0
    %505 = vmatpush1.xpose.msra.mxu0 0.0
    %506 = vmatprep.subr.mxu0 0.0
    %507 = vmatpush1.xpose.msra.mxu0 0.0
    %508 = vmatprep.subr.mxu0 0.0
    %509 = vmatpush1.xpose.msra.mxu0 0.0
    %510 = vmatprep.subr.mxu0 0.0
    %511 = vmatpush1.xpose.msra.mxu0 0.0
    %512 = vmatprep.mubr.f32.mxu0 0.0
    %513 = vmatmul.mubr.f32.gmra.mrb[0].mxu0 %v444
    %v514 = vpop.f32.mrb[0].mxu0
    %v515 = vadd.f32 0.0, %v514
    %v516 = vpop.f32.mrb[0].mxu0
    %517 = vdwg.mxu0
    %518 = vrot.lane.b32.xlu0 %v362, 96
    %v519 = vpop.permute.xlu0 %518
    %v520 = vsel %vm367, %v362, 0
    %v522 = vsel %vm367, %v519, 0
    %524 = vmatprep.subr.mxu0 0.0
    %525 = vmatpush1.xpose.msra.mxu0 %v522
    %526 = vmatprep.subr.mxu0 0.0
    %527 = vmatpush1.xpose.msra.mxu0 0.0
    %528 = vmatprep.subr.mxu0 0.0
    %529 = vmatpush1.xpose.msra.mxu0 0.0
    %530 = vmatprep.subr.mxu0 0.0
    %531 = vmatpush1.xpose.msra.mxu0 0.0
    %532 = vmatprep.subr.mxu0 0.0
    %533 = vmatpush1.xpose.msra.mxu0 0.0
    %534 = vmatprep.subr.mxu0 0.0
    %535 = vmatpush1.xpose.msra.mxu0 0.0
    %536 = vmatprep.subr.mxu0 0.0
    %537 = vmatpush1.xpose.msra.mxu0 0.0
    %538 = vmatprep.subr.mxu0 0.0
    %539 = vmatpush1.xpose.msra.mxu0 0.0
    %540 = vmatprep.subr.mxu0 0.0
    %541 = vmatpush1.xpose.msra.mxu0 0.0
    %542 = vmatprep.subr.mxu0 0.0
    %543 = vmatpush1.xpose.msra.mxu0 0.0
    %544 = vmatprep.subr.mxu0 0.0
    %545 = vmatpush1.xpose.msra.mxu0 0.0
    %546 = vmatprep.subr.mxu0 0.0
    %547 = vmatpush1.xpose.msra.mxu0 0.0
    %548 = vmatprep.subr.mxu0 0.0
    %549 = vmatpush1.xpose.msra.mxu0 0.0
    %550 = vmatprep.subr.mxu0 0.0
    %551 = vmatpush1.xpose.msra.mxu0 0.0
    %552 = vmatprep.subr.mxu0 0.0
    %553 = vmatpush1.xpose.msra.mxu0 0.0
    %554 = vmatprep.subr.mxu0 0.0
    %555 = vmatpush1.xpose.msra.mxu0 0.0
    %556 = vmatprep.subr.mxu0 0.0
    %557 = vmatpush1.xpose.msra.mxu0 0.0
    %558 = vmatprep.subr.mxu0 0.0
    %559 = vmatpush1.xpose.msra.mxu0 0.0
    %560 = vmatprep.subr.mxu0 0.0
    %561 = vmatpush1.xpose.msra.mxu0 0.0
    %562 = vmatprep.subr.mxu0 0.0
    %563 = vmatpush1.xpose.msra.mxu0 0.0
    %564 = vmatprep.subr.mxu0 0.0
    %565 = vmatpush1.xpose.msra.mxu0 0.0
    %566 = vmatprep.subr.mxu0 0.0
    %567 = vmatpush1.xpose.msra.mxu0 0.0
    %568 = vmatprep.subr.mxu0 0.0
    %569 = vmatpush1.xpose.msra.mxu0 0.0
    %570 = vmatprep.subr.mxu0 0.0
    %571 = vmatpush1.xpose.msra.mxu0 0.0
    %572 = vmatprep.subr.mxu0 0.0
    %573 = vmatpush1.xpose.msra.mxu0 0.0
    %574 = vmatprep.subr.mxu0 0.0
    %575 = vmatpush1.xpose.msra.mxu0 0.0
    %576 = vmatprep.subr.mxu0 0.0
    %577 = vmatpush1.xpose.msra.mxu0 0.0
    %578 = vmatprep.subr.mxu0 0.0
    %579 = vmatpush1.xpose.msra.mxu0 0.0
    %580 = vmatprep.subr.mxu0 0.0
    %581 = vmatpush1.xpose.msra.mxu0 0.0
    %582 = vmatprep.subr.mxu0 0.0
    %583 = vmatpush1.xpose.msra.mxu0 0.0
    %584 = vmatprep.subr.mxu0 0.0
    %585 = vmatpush1.xpose.msra.mxu0 0.0
    %586 = vmatprep.subr.mxu0 0.0
    %587 = vmatpush1.xpose.msra.mxu0 0.0
    %588 = vmatprep.mubr.f32.mxu0 0.0
    %589 = vmatmul.mubr.f32.gmra.mrb[0].mxu0 %v520
    %v590 = vpop.f32.mrb[0].mxu0
    %v591 = vadd.f32 0.0, %v590
    %v592 = vpop.f32.mrb[0].mxu0
    %593 = vdwg.mxu0
    %594 = vrot.lane.b32.xlu0 %v364, 96
    %v595 = vpop.permute.xlu0 %594
    %v596 = vsel %vm367, %v364, 0
    %v598 = vsel %vm367, %v595, 0
    %600 = vmatprep.subr.mxu0 0.0
    %601 = vmatpush1.xpose.msra.mxu0 %v598
    %602 = vmatprep.subr.mxu0 0.0
    %603 = vmatpush1.xpose.msra.mxu0 0.0
    %604 = vmatprep.subr.mxu0 0.0
    %605 = vmatpush1.xpose.msra.mxu0 0.0
    %606 = vmatprep.subr.mxu0 0.0
    %607 = vmatpush1.xpose.msra.mxu0 0.0
    %608 = vmatprep.subr.mxu0 0.0
    %609 = vmatpush1.xpose.msra.mxu0 0.0
    %610 = vmatprep.subr.mxu0 0.0
    %611 = vmatpush1.xpose.msra.mxu0 0.0
    %612 = vmatprep.subr.mxu0 0.0
    %613 = vmatpush1.xpose.msra.mxu0 0.0
    %614 = vmatprep.subr.mxu0 0.0
    %615 = vmatpush1.xpose.msra.mxu0 0.0
    %616 = vmatprep.subr.mxu0 0.0
    %617 = vmatpush1.xpose.msra.mxu0 0.0
    %618 = vmatprep.subr.mxu0 0.0
    %619 = vmatpush1.xpose.msra.mxu0 0.0
    %620 = vmatprep.subr.mxu0 0.0
    %621 = vmatpush1.xpose.msra.mxu0 0.0
    %622 = vmatprep.subr.mxu0 0.0
    %623 = vmatpush1.xpose.msra.mxu0 0.0
    %624 = vmatprep.subr.mxu0 0.0
    %625 = vmatpush1.xpose.msra.mxu0 0.0
    %626 = vmatprep.subr.mxu0 0.0
    %627 = vmatpush1.xpose.msra.mxu0 0.0
    %628 = vmatprep.subr.mxu0 0.0
    %629 = vmatpush1.xpose.msra.mxu0 0.0
    %630 = vmatprep.subr.mxu0 0.0
    %631 = vmatpush1.xpose.msra.mxu0 0.0
    %632 = vmatprep.subr.mxu0 0.0
    %633 = vmatpush1.xpose.msra.mxu0 0.0
    %634 = vmatprep.subr.mxu0 0.0
    %635 = vmatpush1.xpose.msra.mxu0 0.0
    %636 = vmatprep.subr.mxu0 0.0
    %637 = vmatpush1.xpose.msra.mxu0 0.0
    %638 = vmatprep.subr.mxu0 0.0
    %639 = vmatpush1.xpose.msra.mxu0 0.0
    %640 = vmatprep.subr.mxu0 0.0
    %641 = vmatpush1.xpose.msra.mxu0 0.0
    %642 = vmatprep.subr.mxu0 0.0
    %643 = vmatpush1.xpose.msra.mxu0 0.0
    %644 = vmatprep.subr.mxu0 0.0
    %645 = vmatpush1.xpose.msra.mxu0 0.0
    %646 = vmatprep.subr.mxu0 0.0
    %647 = vmatpush1.xpose.msra.mxu0 0.0
    %648 = vmatprep.subr.mxu0 0.0
    %649 = vmatpush1.xpose.msra.mxu0 0.0
    %650 = vmatprep.subr.mxu0 0.0
    %651 = vmatpush1.xpose.msra.mxu0 0.0
    %652 = vmatprep.subr.mxu0 0.0
    %653 = vmatpush1.xpose.msra.mxu0 0.0
    %654 = vmatprep.subr.mxu0 0.0
    %655 = vmatpush1.xpose.msra.mxu0 0.0
    %656 = vmatprep.subr.mxu0 0.0
    %657 = vmatpush1.xpose.msra.mxu0 0.0
    %658 = vmatprep.subr.mxu0 0.0
    %659 = vmatpush1.xpose.msra.mxu0 0.0
    %660 = vmatprep.subr.mxu0 0.0
    %661 = vmatpush1.xpose.msra.mxu0 0.0
    %662 = vmatprep.subr.mxu0 0.0
    %663 = vmatpush1.xpose.msra.mxu0 0.0
    %664 = vmatprep.mubr.f32.mxu0 0.0
    %665 = vmatmul.mubr.f32.gmra.mrb[0].mxu0 %v596
    %v666 = vpop.f32.mrb[0].mxu0
    %v667 = vadd.f32 0.0, %v666
    %v668 = vpop.f32.mrb[0].mxu0
    %669 = vdwg.mxu0
    %v670 = vmul.f32 %v439, 0.25
    %v671 = vmul.f32 %v515, 0.25
    %v672 = vmul.f32 %v591, 0.25
    %v673 = vmul.f32 %v667, 0.25
    %v674 = vsel %vm272, %v670, -1000000.0
    %v675 = vsel %vm273, %v671, -1000000.0
    %v676 = vsel %vm272, %v672, -1000000.0
    %v677 = vsel %vm273, %v673, -1000000.0
    %vm678 = vcmask 64512
    %v679 = vsel %vm678, %v674, -inf
    %680 = vmax.xlane.f32.xlu0 %v679
    %v681 = vpop.xlane.xlu0 %680
    %v682 = vsel %vm678, %v675, -inf
    %683 = vmax.xlane.f32.xlu0 %v682
    %v684 = vpop.xlane.xlu0 %683
    %v685 = vsel %vm678, %v676, -inf
    %686 = vmax.xlane.f32.xlu0 %v685
    %v687 = vpop.xlane.xlu0 %686
    %v688 = vsel %vm678, %v677, -inf
    %689 = vmax.xlane.f32.xlu0 %v688
    %v690 = vpop.xlane.xlu0 %689
    %v691 = vsub.f32 %v674, %v681
    %v692 = vsub.f32 %v675, %v684
    %v693 = vsub.f32 %v676, %v687
    %v694 = vsub.f32 %v677, %v690
    %v695 = vmul.f32 %v691, 1.442695
    %v696 = vpow.pop %v695
    %v697 = vmul.f32 %v692, 1.442695
    %v698 = vpow.pop %v697
    %v699 = vmul.f32 %v693, 1.442695
    %v700 = vpow.pop %v699
    %v701 = vmul.f32 %v694, 1.442695
    %v702 = vpow.pop %v701
    %v703 = vsel %vm678, %v696, 0.0
    %704 = vadd.xlane.f32.xlu0 %v703
    %v705 = vpop.xlane.xlu0 %704
    %v706 = vsel %vm678, %v698, 0.0
    %707 = vadd.xlane.f32.xlu0 %v706
    %v708 = vpop.xlane.xlu0 %707
    %v709 = vsel %vm678, %v700, 0.0
    %710 = vadd.xlane.f32.xlu0 %v709
    %v711 = vpop.xlane.xlu0 %710
    %v712 = vsel %vm678, %v702, 0.0
    %713 = vadd.xlane.f32.xlu0 %v712
    %v714 = vpop.xlane.xlu0 %713
    %v715 = vrcp.pop %v705
    %v716 = vrcp.pop %v708
    %v717 = vrcp.pop %v711
    %v718 = vrcp.pop %v714
    %v719 = vmul.f32 %v696, %v715
    %v720 = vmul.f32 %v698, %v716
    %v721 = vmul.f32 %v700, %v717
    %v722 = vmul.f32 %v702, %v718
    %723 = vrot.lane.b32.xlu0 %v351, 64
    %v724 = vpop.permute.xlu0 %723
    %v727 = vsel %vm678, %v719, 0
    %729 = vmatprep.subr.mxu0 0.0
    %730 = vmatpush1.msra.mxu0 %v724
    %731 = vmatprep.subr.mxu0 0.0
    %732 = vmatpush1.msra.mxu0 0.0
    %733 = vmatprep.subr.mxu0 0.0
    %734 = vmatpush1.msra.mxu0 0.0
    %735 = vmatprep.subr.mxu0 0.0
    %736 = vmatpush1.msra.mxu0 0.0
    %737 = vmatprep.subr.mxu0 0.0
    %738 = vmatpush1.msra.mxu0 0.0
    %739 = vmatprep.subr.mxu0 0.0
    %740 = vmatpush1.msra.mxu0 0.0
    %741 = vmatprep.subr.mxu0 0.0
    %742 = vmatpush1.msra.mxu0 0.0
    %743 = vmatprep.subr.mxu0 0.0
    %744 = vmatpush1.msra.mxu0 0.0
    %745 = vmatprep.subr.mxu0 0.0
    %746 = vmatpush1.msra.mxu0 0.0
    %747 = vmatprep.subr.mxu0 0.0
    %748 = vmatpush1.msra.mxu0 0.0
    %749 = vmatprep.subr.mxu0 0.0
    %750 = vmatpush1.msra.mxu0 0.0
    %751 = vmatprep.subr.mxu0 0.0
    %752 = vmatpush1.msra.mxu0 0.0
    %753 = vmatprep.subr.mxu0 0.0
    %754 = vmatpush1.msra.mxu0 0.0
    %755 = vmatprep.subr.mxu0 0.0
    %756 = vmatpush1.msra.mxu0 0.0
    %757 = vmatprep.subr.mxu0 0.0
    %758 = vmatpush1.msra.mxu0 0.0
    %759 = vmatprep.subr.mxu0 0.0
    %760 = vmatpush1.msra.mxu0 0.0
    %761 = vmatprep.subr.mxu0 0.0
    %762 = vmatpush1.msra.mxu0 0.0
    %763 = vmatprep.subr.mxu0 0.0
    %764 = vmatpush1.msra.mxu0 0.0
    %765 = vmatprep.subr.mxu0 0.0
    %766 = vmatpush1.msra.mxu0 0.0
    %767 = vmatprep.subr.mxu0 0.0
    %768 = vmatpush1.msra.mxu0 0.0
    %769 = vmatprep.subr.mxu0 0.0
    %770 = vmatpush1.msra.mxu0 0.0
    %771 = vmatprep.subr.mxu0 0.0
    %772 = vmatpush1.msra.mxu0 0.0
    %773 = vmatprep.subr.mxu0 0.0
    %774 = vmatpush1.msra.mxu0 0.0
    %775 = vmatprep.subr.mxu0 0.0
    %776 = vmatpush1.msra.mxu0 0.0
    %777 = vmatprep.subr.mxu0 0.0
    %778 = vmatpush1.msra.mxu0 0.0
    %779 = vmatprep.subr.mxu0 0.0
    %780 = vmatpush1.msra.mxu0 0.0
    %781 = vmatprep.subr.mxu0 0.0
    %782 = vmatpush1.msra.mxu0 0.0
    %783 = vmatprep.subr.mxu0 0.0
    %784 = vmatpush1.msra.mxu0 0.0
    %785 = vmatprep.subr.mxu0 0.0
    %786 = vmatpush1.msra.mxu0 0.0
    %787 = vmatprep.subr.mxu0 0.0
    %788 = vmatpush1.msra.mxu0 0.0
    %789 = vmatprep.subr.mxu0 0.0
    %790 = vmatpush1.msra.mxu0 0.0
    %791 = vmatprep.subr.mxu0 0.0
    %792 = vmatpush1.msra.mxu0 0.0
    %793 = vmatprep.mubr.f32.mxu0 0.0
    %794 = vmatmul.mubr.f32.gmra.mrb[0].mxu0 %v727
    %v795 = vpop.f32.mrb[0].mxu0
    %v796 = vadd.f32 0.0, %v795
    %v797 = vpop.f32.mrb[0].mxu0
    %798 = vdwg.mxu0
    %799 = vrot.lane.b32.xlu0 %v356, 64
    %v800 = vpop.permute.xlu0 %799
    %v803 = vsel %vm678, %v720, 0
    %805 = vmatprep.subr.mxu0 0.0
    %806 = vmatpush1.msra.mxu0 %v800
    %807 = vmatprep.subr.mxu0 0.0
    %808 = vmatpush1.msra.mxu0 0.0
    %809 = vmatprep.subr.mxu0 0.0
    %810 = vmatpush1.msra.mxu0 0.0
    %811 = vmatprep.subr.mxu0 0.0
    %812 = vmatpush1.msra.mxu0 0.0
    %813 = vmatprep.subr.mxu0 0.0
    %814 = vmatpush1.msra.mxu0 0.0
    %815 = vmatprep.subr.mxu0 0.0
    %816 = vmatpush1.msra.mxu0 0.0
    %817 = vmatprep.subr.mxu0 0.0
    %818 = vmatpush1.msra.mxu0 0.0
    %819 = vmatprep.subr.mxu0 0.0
    %820 = vmatpush1.msra.mxu0 0.0
    %821 = vmatprep.subr.mxu0 0.0
    %822 = vmatpush1.msra.mxu0 0.0
    %823 = vmatprep.subr.mxu0 0.0
    %824 = vmatpush1.msra.mxu0 0.0
    %825 = vmatprep.subr.mxu0 0.0
    %826 = vmatpush1.msra.mxu0 0.0
    %827 = vmatprep.subr.mxu0 0.0
    %828 = vmatpush1.msra.mxu0 0.0
    %829 = vmatprep.subr.mxu0 0.0
    %830 = vmatpush1.msra.mxu0 0.0
    %831 = vmatprep.subr.mxu0 0.0
    %832 = vmatpush1.msra.mxu0 0.0
    %833 = vmatprep.subr.mxu0 0.0
    %834 = vmatpush1.msra.mxu0 0.0
    %835 = vmatprep.subr.mxu0 0.0
    %836 = vmatpush1.msra.mxu0 0.0
    %837 = vmatprep.subr.mxu0 0.0
    %838 = vmatpush1.msra.mxu0 0.0
    %839 = vmatprep.subr.mxu0 0.0
    %840 = vmatpush1.msra.mxu0 0.0
    %841 = vmatprep.subr.mxu0 0.0
    %842 = vmatpush1.msra.mxu0 0.0
    %843 = vmatprep.subr.mxu0 0.0
    %844 = vmatpush1.msra.mxu0 0.0
    %845 = vmatprep.subr.mxu0 0.0
    %846 = vmatpush1.msra.mxu0 0.0
    %847 = vmatprep.subr.mxu0 0.0
    %848 = vmatpush1.msra.mxu0 0.0
    %849 = vmatprep.subr.mxu0 0.0
    %850 = vmatpush1.msra.mxu0 0.0
    %851 = vmatprep.subr.mxu0 0.0
    %852 = vmatpush1.msra.mxu0 0.0
    %853 = vmatprep.subr.mxu0 0.0
    %854 = vmatpush1.msra.mxu0 0.0
    %855 = vmatprep.subr.mxu0 0.0
    %856 = vmatpush1.msra.mxu0 0.0
    %857 = vmatprep.subr.mxu0 0.0
    %858 = vmatpush1.msra.mxu0 0.0
    %859 = vmatprep.subr.mxu0 0.0
    %860 = vmatpush1.msra.mxu0 0.0
    %861 = vmatprep.subr.mxu0 0.0
    %862 = vmatpush1.msra.mxu0 0.0
    %863 = vmatprep.subr.mxu0 0.0
    %864 = vmatpush1.msra.mxu0 0.0
    %865 = vmatprep.subr.mxu0 0.0
    %866 = vmatpush1.msra.mxu0 0.0
    %867 = vmatprep.subr.mxu0 0.0
    %868 = vmatpush1.msra.mxu0 0.0
    %869 = vmatprep.mubr.f32.mxu0 0.0
    %870 = vmatmul.mubr.f32.gmra.mrb[0].mxu0 %v803
    %v871 = vpop.f32.mrb[0].mxu0
    %v872 = vadd.f32 0.0, %v871
    %v873 = vpop.f32.mrb[0].mxu0
    %874 = vdwg.mxu0
    %875 = vrot.lane.b32.xlu0 %v362, 64
    %v876 = vpop.permute.xlu0 %875
    %v879 = vsel %vm678, %v721, 0
    %881 = vmatprep.subr.mxu0 0.0
    %882 = vmatpush1.msra.mxu0 %v876
    %883 = vmatprep.subr.mxu0 0.0
    %884 = vmatpush1.msra.mxu0 0.0
    %885 = vmatprep.subr.mxu0 0.0
    %886 = vmatpush1.msra.mxu0 0.0
    %887 = vmatprep.subr.mxu0 0.0
    %888 = vmatpush1.msra.mxu0 0.0
    %889 = vmatprep.subr.mxu0 0.0
    %890 = vmatpush1.msra.mxu0 0.0
    %891 = vmatprep.subr.mxu0 0.0
    %892 = vmatpush1.msra.mxu0 0.0
    %893 = vmatprep.subr.mxu0 0.0
    %894 = vmatpush1.msra.mxu0 0.0
    %895 = vmatprep.subr.mxu0 0.0
    %896 = vmatpush1.msra.mxu0 0.0
    %897 = vmatprep.subr.mxu0 0.0
    %898 = vmatpush1.msra.mxu0 0.0
    %899 = vmatprep.subr.mxu0 0.0
    %900 = vmatpush1.msra.mxu0 0.0
    %901 = vmatprep.subr.mxu0 0.0
    %902 = vmatpush1.msra.mxu0 0.0
    %903 = vmatprep.subr.mxu0 0.0
    %904 = vmatpush1.msra.mxu0 0.0
    %905 = vmatprep.subr.mxu0 0.0
    %906 = vmatpush1.msra.mxu0 0.0
    %907 = vmatprep.subr.mxu0 0.0
    %908 = vmatpush1.msra.mxu0 0.0
    %909 = vmatprep.subr.mxu0 0.0
    %910 = vmatpush1.msra.mxu0 0.0
    %911 = vmatprep.subr.mxu0 0.0
    %912 = vmatpush1.msra.mxu0 0.0
    %913 = vmatprep.subr.mxu0 0.0
    %914 = vmatpush1.msra.mxu0 0.0
    %915 = vmatprep.subr.mxu0 0.0
    %916 = vmatpush1.msra.mxu0 0.0
    %917 = vmatprep.subr.mxu0 0.0
    %918 = vmatpush1.msra.mxu0 0.0
    %919 = vmatprep.subr.mxu0 0.0
    %920 = vmatpush1.msra.mxu0 0.0
    %921 = vmatprep.subr.mxu0 0.0
    %922 = vmatpush1.msra.mxu0 0.0
    %923 = vmatprep.subr.mxu0 0.0
    %924 = vmatpush1.msra.mxu0 0.0
    %925 = vmatprep.subr.mxu0 0.0
    %926 = vmatpush1.msra.mxu0 0.0
    %927 = vmatprep.subr.mxu0 0.0
    %928 = vmatpush1.msra.mxu0 0.0
    %929 = vmatprep.subr.mxu0 0.0
    %930 = vmatpush1.msra.mxu0 0.0
    %931 = vmatprep.subr.mxu0 0.0
    %932 = vmatpush1.msra.mxu0 0.0
    %933 = vmatprep.subr.mxu0 0.0
    %934 = vmatpush1.msra.mxu0 0.0
    %935 = vmatprep.subr.mxu0 0.0
    %936 = vmatpush1.msra.mxu0 0.0
    %937 = vmatprep.subr.mxu0 0.0
    %938 = vmatpush1.msra.mxu0 0.0
    %939 = vmatprep.subr.mxu0 0.0
    %940 = vmatpush1.msra.mxu0 0.0
    %941 = vmatprep.subr.mxu0 0.0
    %942 = vmatpush1.msra.mxu0 0.0
    %943 = vmatprep.subr.mxu0 0.0
    %944 = vmatpush1.msra.mxu0 0.0
    %945 = vmatprep.mubr.f32.mxu0 0.0
    %946 = vmatmul.mubr.f32.gmra.mrb[0].mxu0 %v879
    %v947 = vpop.f32.mrb[0].mxu0
    %v948 = vadd.f32 0.0, %v947
    %v949 = vpop.f32.mrb[0].mxu0
    %950 = vdwg.mxu0
    %951 = vrot.lane.b32.xlu0 %v364, 64
    %v952 = vpop.permute.xlu0 %951
    %v955 = vsel %vm678, %v722, 0
    %957 = vmatprep.subr.mxu0 0.0
    %958 = vmatpush1.msra.mxu0 %v952
    %959 = vmatprep.subr.mxu0 0.0
    %960 = vmatpush1.msra.mxu0 0.0
    %961 = vmatprep.subr.mxu0 0.0
    %962 = vmatpush1.msra.mxu0 0.0
    %963 = vmatprep.subr.mxu0 0.0
    %964 = vmatpush1.msra.mxu0 0.0
    %965 = vmatprep.subr.mxu0 0.0
    %966 = vmatpush1.msra.mxu0 0.0
    %967 = vmatprep.subr.mxu0 0.0
    %968 = vmatpush1.msra.mxu0 0.0
    %969 = vmatprep.subr.mxu0 0.0
    %970 = vmatpush1.msra.mxu0 0.0
    %971 = vmatprep.subr.mxu0 0.0
    %972 = vmatpush1.msra.mxu0 0.0
    %973 = vmatprep.subr.mxu0 0.0
    %974 = vmatpush1.msra.mxu0 0.0
    %975 = vmatprep.subr.mxu0 0.0
    %976 = vmatpush1.msra.mxu0 0.0
    %977 = vmatprep.subr.mxu0 0.0
    %978 = vmatpush1.msra.mxu0 0.0
    %979 = vmatprep.subr.mxu0 0.0
    %980 = vmatpush1.msra.mxu0 0.0
    %981 = vmatprep.subr.mxu0 0.0
    %982 = vmatpush1.msra.mxu0 0.0
    %983 = vmatprep.subr.mxu0 0.0
    %984 = vmatpush1.msra.mxu0 0.0
    %985 = vmatprep.subr.mxu0 0.0
    %986 = vmatpush1.msra.mxu0 0.0
    %987 = vmatprep.subr.mxu0 0.0
    %988 = vmatpush1.msra.mxu0 0.0
    %989 = vmatprep.subr.mxu0 0.0
    %990 = vmatpush1.msra.mxu0 0.0
    %991 = vmatprep.subr.mxu0 0.0
    %992 = vmatpush1.msra.mxu0 0.0
    %993 = vmatprep.subr.mxu0 0.0
    %994 = vmatpush1.msra.mxu0 0.0
    %995 = vmatprep.subr.mxu0 0.0
    %996 = vmatpush1.msra.mxu0 0.0
    %997 = vmatprep.subr.mxu0 0.0
    %998 = vmatpush1.msra.mxu0 0.0
    %999 = vmatprep.subr.mxu0 0.0
    %1000 = vmatpush1.msra.mxu0 0.0
    %1001 = vmatprep.subr.mxu0 0.0
    %1002 = vmatpush1.msra.mxu0 0.0
    %1003 = vmatprep.subr.mxu0 0.0
    %1004 = vmatpush1.msra.mxu0 0.0
    %1005 = vmatprep.subr.mxu0 0.0
    %1006 = vmatpush1.msra.mxu0 0.0
    %1007 = vmatprep.subr.mxu0 0.0
    %1008 = vmatpush1.msra.mxu0 0.0
    %1009 = vmatprep.subr.mxu0 0.0
    %1010 = vmatpush1.msra.mxu0 0.0
    %1011 = vmatprep.subr.mxu0 0.0
    %1012 = vmatpush1.msra.mxu0 0.0
    %1013 = vmatprep.subr.mxu0 0.0
    %1014 = vmatpush1.msra.mxu0 0.0
    %1015 = vmatprep.subr.mxu0 0.0
    %1016 = vmatpush1.msra.mxu0 0.0
    %1017 = vmatprep.subr.mxu0 0.0
    %1018 = vmatpush1.msra.mxu0 0.0
    %1019 = vmatprep.subr.mxu0 0.0
    %1020 = vmatpush1.msra.mxu0 0.0
    %1021 = vmatprep.mubr.f32.mxu0 0.0
    %1022 = vmatmul.mubr.f32.gmra.mrb[0].mxu0 %v955
    %v1023 = vpop.f32.mrb[0].mxu0
    %v1024 = vadd.f32 0.0, %v1023
    %v1025 = vpop.f32.mrb[0].mxu0
    %1026 = vdwg.mxu0
    %1029 = vrot.lane.b32.xlu0 %v948, 16
    %v1030 = vpop.permute.xlu0 %1029
    %1031 = vrot.lane.b32.xlu0 %v1024, 16
    %v1032 = vpop.permute.xlu0 %1031
    %v1035 = vsel %vm367, %v796, %v1030
    %v1036 = vsel %vm367, %v872, %v1032
    %v1037 = vld [vmem:[%s6] sm:$0xff]
    %v1038 = vld [vmem:[%s6 + $0x8] sm:$0xff]
    %v1039 = vld [vmem:[%s6 + $0x10] sm:$0xff]
    %v1040 = vld [vmem:[%s6 + $0x18] sm:$0xff]
    %v1042 = vsel %vm176, %v1035, 0
    %v1045 = vsel %vm176, %v1036, 0
    %1047 = vmatprep.subr.mxu0 0.0
    %1048 = vmatpush1.msra.mxu0 %v1037
    %1049 = vmatprep.subr.mxu0 0.0
    %1050 = vmatpush1.msra.mxu0 %v1038
    %1051 = vmatprep.subr.mxu0 0.0
    %1052 = vmatpush1.msra.mxu0 %v1039
    %1053 = vmatprep.subr.mxu0 0.0
    %1054 = vmatpush1.msra.mxu0 %v1040
    %1055 = vmatprep.subr.mxu0 0.0
    %1056 = vmatpush1.msra.mxu0 0.0
    %1057 = vmatprep.subr.mxu0 0.0
    %1058 = vmatpush1.msra.mxu0 0.0
    %1059 = vmatprep.subr.mxu0 0.0
    %1060 = vmatpush1.msra.mxu0 0.0
    %1061 = vmatprep.subr.mxu0 0.0
    %1062 = vmatpush1.msra.mxu0 0.0
    %1063 = vmatprep.subr.mxu0 0.0
    %1064 = vmatpush1.msra.mxu0 0.0
    %1065 = vmatprep.subr.mxu0 0.0
    %1066 = vmatpush1.msra.mxu0 0.0
    %1067 = vmatprep.subr.mxu0 0.0
    %1068 = vmatpush1.msra.mxu0 0.0
    %1069 = vmatprep.subr.mxu0 0.0
    %1070 = vmatpush1.msra.mxu0 0.0
    %1071 = vmatprep.subr.mxu0 0.0
    %1072 = vmatpush1.msra.mxu0 0.0
    %1073 = vmatprep.subr.mxu0 0.0
    %1074 = vmatpush1.msra.mxu0 0.0
    %1075 = vmatprep.subr.mxu0 0.0
    %1076 = vmatpush1.msra.mxu0 0.0
    %1077 = vmatprep.subr.mxu0 0.0
    %1078 = vmatpush1.msra.mxu0 0.0
    %1079 = vmatprep.subr.mxu0 0.0
    %1080 = vmatpush1.msra.mxu0 0.0
    %1081 = vmatprep.subr.mxu0 0.0
    %1082 = vmatpush1.msra.mxu0 0.0
    %1083 = vmatprep.subr.mxu0 0.0
    %1084 = vmatpush1.msra.mxu0 0.0
    %1085 = vmatprep.subr.mxu0 0.0
    %1086 = vmatpush1.msra.mxu0 0.0
    %1087 = vmatprep.subr.mxu0 0.0
    %1088 = vmatpush1.msra.mxu0 0.0
    %1089 = vmatprep.subr.mxu0 0.0
    %1090 = vmatpush1.msra.mxu0 0.0
    %1091 = vmatprep.subr.mxu0 0.0
    %1092 = vmatpush1.msra.mxu0 0.0
    %1093 = vmatprep.subr.mxu0 0.0
    %1094 = vmatpush1.msra.mxu0 0.0
    %1095 = vmatprep.subr.mxu0 0.0
    %1096 = vmatpush1.msra.mxu0 0.0
    %1097 = vmatprep.subr.mxu0 0.0
    %1098 = vmatpush1.msra.mxu0 0.0
    %1099 = vmatprep.subr.mxu0 0.0
    %1100 = vmatpush1.msra.mxu0 0.0
    %1101 = vmatprep.subr.mxu0 0.0
    %1102 = vmatpush1.msra.mxu0 0.0
    %1103 = vmatprep.subr.mxu0 0.0
    %1104 = vmatpush1.msra.mxu0 0.0
    %1105 = vmatprep.subr.mxu0 0.0
    %1106 = vmatpush1.msra.mxu0 0.0
    %1107 = vmatprep.subr.mxu0 0.0
    %1108 = vmatpush1.msra.mxu0 0.0
    %1109 = vmatprep.subr.mxu0 0.0
    %1110 = vmatpush1.msra.mxu0 0.0
    %1111 = vmatprep.mubr.f32.mxu0 0.0
    %1112 = vmatmul.mubr.f32.gmra.mrb[0].mxu0 %v1042
    %v1113 = vpop.f32.mrb[0].mxu0
    %v1114 = vadd.f32 0.0, %v1113
    %v1115 = vpop.f32.mrb[0].mxu0
    %1116 = vmatprep.mubr.f32.mxu0 0.0
    %1117 = vmatmul.mubr.f32.gmra.mrb[0].mxu0 %v1045
    %v1118 = vpop.f32.mrb[0].mxu0
    %v1119 = vadd.f32 0.0, %v1118
    %v1120 = vpop.f32.mrb[0].mxu0
    %1121 = vdwg.mxu0
    %v1122 = vadd.f32 %v264, %v1114
    %v1123 = vadd.f32 %v265, %v1119
    %v1124 = vld [vmem:[%s7] sm:$0xff]
    %v1125 = vld [vmem:[#allocation10] sm:$0xff]
    %v1126 = vsel %vm176, %v1122, 0.0
    %1127 = vadd.xlane.f32.xlu0 %v1126
    %v1128 = vpop.xlane.xlu0 %1127
    %v1129 = vrot.slane %v1128, 4
    %v1130 = vadd.f32 %v1128, %v1129
    %v1131 = vrot.slane %v1130, 2
    %v1132 = vadd.f32 %v1130, %v1131
    %v1133 = vrot.slane %v1132, 1
    %v1134 = vadd.f32 %v1132, %v1133
    %s1135 = vtos %v1134
    %v1136 = vrcp.pop 256.0
    %s1137 = vtos %v1136
    %s1138 = smul.f32 %s1135, %s1137
    %v1139 = vstv %s1138
    %v1140 = vsub.f32 %v1122, %v1139
    %v1141 = vmul.f32 %v1140, %v1140
    %v1142 = vsel %vm176, %v1141, 0.0
    %1143 = vadd.xlane.f32.xlu0 %v1142
    %v1144 = vpop.xlane.xlu0 %1143
    %v1145 = vrot.slane %v1144, 4
    %v1146 = vadd.f32 %v1144, %v1145
    %v1147 = vrot.slane %v1146, 2
    %v1148 = vadd.f32 %v1146, %v1147
    %v1149 = vrot.slane %v1148, 1
    %v1150 = vadd.f32 %v1148, %v1149
    %s1151 = vtos %v1150
    %v1152 = vrcp.pop 256.0
    %s1153 = vtos %v1152
    %s1154 = smul.f32 %s1151, %s1153
    %s1155 = sadd.f32 %s1154, 1e-05
    %v1156 = vstv %s1155
    %v1157 = vrsqrt.pop %v1156
    %s1158 = vtos %v1157
    %v1159 = vstv %s1158
    %v1160 = vmul.f32 %v1140, %v1159
    %v1161 = vmul.f32 %v1160, %v1124
    %v1162 = vadd.f32 %v1161, %v1125
    %v1163 = vsel %vm176, %v1123, 0.0
    %1164 = vadd.xlane.f32.xlu0 %v1163
    %v1165 = vpop.xlane.xlu0 %1164
    %v1166 = vrot.slane %v1165, 4
    %v1167 = vadd.f32 %v1165, %v1166
    %v1168 = vrot.slane %v1167, 2
    %v1169 = vadd.f32 %v1167, %v1168
    %v1170 = vrot.slane %v1169, 1
    %v1171 = vadd.f32 %v1169, %v1170
    %s1172 = vtos %v1171
    %v1173 = vrcp.pop 256.0
    %s1174 = vtos %v1173
    %s1175 = smul.f32 %s1172, %s1174
    %v1176 = vstv %s1175
    %v1177 = vsub.f32 %v1123, %v1176
    %v1178 = vmul.f32 %v1177, %v1177
    %v1179 = vsel %vm176, %v1178, 0.0
    %1180 = vadd.xlane.f32.xlu0 %v1179
    %v1181 = vpop.xlane.xlu0 %1180
    %v1182 = vrot.slane %v1181, 4
    %v1183 = vadd.f32 %v1181, %v1182
    %v1184 = vrot.slane %v1183, 2
    %v1185 = vadd.f32 %v1183, %v1184
    %v1186 = vrot.slane %v1185, 1
    %v1187 = vadd.f32 %v1185, %v1186
    %s1188 = vtos %v1187
    %v1189 = vrcp.pop 256.0
    %s1190 = vtos %v1189
    %s1191 = smul.f32 %s1188, %s1190
    %s1192 = sadd.f32 %s1191, 1e-05
    %v1193 = vstv %s1192
    %v1194 = vrsqrt.pop %v1193
    %s1195 = vtos %v1194
    %v1196 = vstv %s1195
    %v1197 = vmul.f32 %v1177, %v1196
    %v1198 = vmul.f32 %v1197, %v1124
    %v1199 = vadd.f32 %v1198, %v1125
    %v1200 = vld [vmem:[%s9] sm:$0xff]
    %v1201 = vld [vmem:[%s9 + $0x8] sm:$0xff]
    %v1202 = vld [vmem:[%s9 + $0x10] sm:$0xff]
    %v1203 = vld [vmem:[%s9 + $0x18] sm:$0xff]
    %v1204 = vld [vmem:[#allocation12] sm:$0x1]
    %v1206 = vlaneseq
    %v1207 = vshrl.u32 %v1206, 7
    %v1208 = vsub.s32 0, %v1207
    %v1209 = vrot.slane %v1204, %v1208
    %v1212 = vsel %vm176, %v1162, 0
    %v1215 = vsel %vm176, %v1199, 0
    %1217 = vmatprep.subr.mxu0 0.0
    %1218 = vmatpush1.msra.mxu0 %v1200
    %1219 = vmatprep.subr.mxu0 0.0
    %1220 = vmatpush1.msra.mxu0 %v1201
    %1221 = vmatprep.subr.mxu0 0.0
    %1222 = vmatpush1.msra.mxu0 %v1202
    %1223 = vmatprep.subr.mxu0 0.0
    %1224 = vmatpush1.msra.mxu0 %v1203
    %1225 = vmatprep.subr.mxu0 0.0
    %1226 = vmatpush1.msra.mxu0 0.0
    %1227 = vmatprep.subr.mxu0 0.0
    %1228 = vmatpush1.msra.mxu0 0.0
    %1229 = vmatprep.subr.mxu0 0.0
    %1230 = vmatpush1.msra.mxu0 0.0
    %1231 = vmatprep.subr.mxu0 0.0
    %1232 = vmatpush1.msra.mxu0 0.0
    %1233 = vmatprep.subr.mxu0 0.0
    %1234 = vmatpush1.msra.mxu0 0.0
    %1235 = vmatprep.subr.mxu0 0.0
    %1236 = vmatpush1.msra.mxu0 0.0
    %1237 = vmatprep.subr.mxu0 0.0
    %1238 = vmatpush1.msra.mxu0 0.0
    %1239 = vmatprep.subr.mxu0 0.0
    %1240 = vmatpush1.msra.mxu0 0.0
    %1241 = vmatprep.subr.mxu0 0.0
    %1242 = vmatpush1.msra.mxu0 0.0
    %1243 = vmatprep.subr.mxu0 0.0
    %1244 = vmatpush1.msra.mxu0 0.0
    %1245 = vmatprep.subr.mxu0 0.0
    %1246 = vmatpush1.msra.mxu0 0.0
    %1247 = vmatprep.subr.mxu0 0.0
    %1248 = vmatpush1.msra.mxu0 0.0
    %1249 = vmatprep.subr.mxu0 0.0
    %1250 = vmatpush1.msra.mxu0 0.0
    %1251 = vmatprep.subr.mxu0 0.0
    %1252 = vmatpush1.msra.mxu0 0.0
    %1253 = vmatprep.subr.mxu0 0.0
    %1254 = vmatpush1.msra.mxu0 0.0
    %1255 = vmatprep.subr.mxu0 0.0
    %1256 = vmatpush1.msra.mxu0 0.0
    %1257 = vmatprep.subr.mxu0 0.0
    %1258 = vmatpush1.msra.mxu0 0.0
    %1259 = vmatprep.subr.mxu0 0.0
    %1260 = vmatpush1.msra.mxu0 0.0
    %1261 = vmatprep.subr.mxu0 0.0
    %1262 = vmatpush1.msra.mxu0 0.0
    %1263 = vmatprep.subr.mxu0 0.0
    %1264 = vmatpush1.msra.mxu0 0.0
    %1265 = vmatprep.subr.mxu0 0.0
    %1266 = vmatpush1.msra.mxu0 0.0
    %1267 = vmatprep.subr.mxu0 0.0
    %1268 = vmatpush1.msra.mxu0 0.0
    %1269 = vmatprep.subr.mxu0 0.0
    %1270 = vmatpush1.msra.mxu0 0.0
    %1271 = vmatprep.subr.mxu0 0.0
    %1272 = vmatpush1.msra.mxu0 0.0
    %1273 = vmatprep.subr.mxu0 0.0
    %1274 = vmatpush1.msra.mxu0 0.0
    %1275 = vmatprep.subr.mxu0 0.0
    %1276 = vmatpush1.msra.mxu0 0.0
    %1277 = vmatprep.subr.mxu0 0.0
    %1278 = vmatpush1.msra.mxu0 0.0
    %1279 = vmatprep.subr.mxu0 0.0
    %1280 = vmatpush1.msra.mxu0 0.0
    %1281 = vmatprep.mubr.f32.mxu0 0.0
    %1282 = vmatmul.mubr.f32.gmra.mrb[0].mxu0 %v1212
    %v1283 = vpop.f32.mrb[0].mxu0
    %v1284 = vadd.f32 %v1209, %v1283
    %v1285 = vpop.f32.mrb[0].mxu0
    %1286 = vmatprep.mubr.f32.mxu0 0.0
    %1287 = vmatmul.mubr.f32.gmra.mrb[0].mxu0 %v1215
    %v1288 = vpop.f32.mrb[0].mxu0
    %v1289 = vadd.f32 %v1209, %v1288
    %v1290 = vpop.f32.mrb[0].mxu0
    %1291 = vdwg.mxu0
    %v1292 = vmax.f32 %v1284, 0.0
    %v1293 = vmax.f32 %v1289, 0.0
    %v1294 = vld [vmem:[%s11] sm:$0xff]
    %v1295 = vld [vmem:[%s11 + $0x8] sm:$0xff]
    %v1296 = vld [vmem:[%s11 + $0x10] sm:$0xff]
    %v1297 = vld [vmem:[%s11 + $0x18] sm:$0xff]
    %v1298 = vld [vmem:[%s11 + $0x20] sm:$0xff]
    %v1299 = vld [vmem:[%s11 + $0x28] sm:$0xff]
    %v1300 = vld [vmem:[%s11 + $0x30] sm:$0xff]
    %v1301 = vld [vmem:[%s11 + $0x38] sm:$0xff]
    %v1302 = vld [vmem:[#allocation13] sm:$0x1]
    %v1304 = vlaneseq
    %v1305 = vshrl.u32 %v1304, 7
    %v1306 = vsub.s32 0, %v1305
    %v1307 = vrot.slane %v1302, %v1306
    %vm1309 = vcmask 523264
    %v1311 = vsel %vm1309, %v1292, 0
    %v1314 = vsel %vm1309, %v1293, 0
    %1316 = vmatprep.subr.mxu0 0.0
    %1317 = vmatpush1.msra.mxu0 %v1294
    %1318 = vmatprep.subr.mxu0 0.0
    %1319 = vmatpush1.msra.mxu0 %v1295
    %1320 = vmatprep.subr.mxu0 0.0
    %1321 = vmatpush1.msra.mxu0 %v1296
    %1322 = vmatprep.subr.mxu0 0.0
    %1323 = vmatpush1.msra.mxu0 %v1297
    %1324 = vmatprep.subr.mxu0 0.0
    %1325 = vmatpush1.msra.mxu0 %v1298
    %1326 = vmatprep.subr.mxu0 0.0
    %1327 = vmatpush1.msra.mxu0 %v1299
    %1328 = vmatprep.subr.mxu0 0.0
    %1329 = vmatpush1.msra.mxu0 %v1300
    %1330 = vmatprep.subr.mxu0 0.0
    %1331 = vmatpush1.msra.mxu0 %v1301
    %1332 = vmatprep.subr.mxu0 0.0
    %1333 = vmatpush1.msra.mxu0 0.0
    %1334 = vmatprep.subr.mxu0 0.0
    %1335 = vmatpush1.msra.mxu0 0.0
    %1336 = vmatprep.subr.mxu0 0.0
    %1337 = vmatpush1.msra.mxu0 0.0
    %1338 = vmatprep.subr.mxu0 0.0
    %1339 = vmatpush1.msra.mxu0 0.0
    %1340 = vmatprep.subr.mxu0 0.0
    %1341 = vmatpush1.msra.mxu0 0.0
    %1342 = vmatprep.subr.mxu0 0.0
    %1343 = vmatpush1.msra.mxu0 0.0
    %1344 = vmatprep.subr.mxu0 0.0
    %1345 = vmatpush1.msra.mxu0 0.0
    %1346 = vmatprep.subr.mxu0 0.0
    %1347 = vmatpush1.msra.mxu0 0.0
    %1348 = vmatprep.subr.mxu0 0.0
    %1349 = vmatpush1.msra.mxu0 0.0
    %1350 = vmatprep.subr.mxu0 0.0
    %1351 = vmatpush1.msra.mxu0 0.0
    %1352 = vmatprep.subr.mxu0 0.0
    %1353 = vmatpush1.msra.mxu0 0.0
    %1354 = vmatprep.subr.mxu0 0.0
    %1355 = vmatpush1.msra.mxu0 0.0
    %1356 = vmatprep.subr.mxu0 0.0
    %1357 = vmatpush1.msra.mxu0 0.0
    %1358 = vmatprep.subr.mxu0 0.0
    %1359 = vmatpush1.msra.mxu0 0.0
    %1360 = vmatprep.subr.mxu0 0.0
    %1361 = vmatpush1.msra.mxu0 0.0
    %1362 = vmatprep.subr.mxu0 0.0
    %1363 = vmatpush1.msra.mxu0 0.0
    %1364 = vmatprep.subr.mxu0 0.0
    %1365 = vmatpush1.msra.mxu0 0.0
    %1366 = vmatprep.subr.mxu0 0.0
    %1367 = vmatpush1.msra.mxu0 0.0
    %1368 = vmatprep.subr.mxu0 0.0
    %1369 = vmatpush1.msra.mxu0 0.0
    %1370 = vmatprep.subr.mxu0 0.0
    %1371 = vmatpush1.msra.mxu0 0.0
    %1372 = vmatprep.subr.mxu0 0.0
    %1373 = vmatpush1.msra.mxu0 0.0
    %1374 = vmatprep.subr.mxu0 0.0
    %1375 = vmatpush1.msra.mxu0 0.0
    %1376 = vmatprep.subr.mxu0 0.0
    %1377 = vmatpush1.msra.mxu0 0.0
    %1378 = vmatprep.subr.mxu0 0.0
    %1379 = vmatpush1.msra.mxu0 0.0
    %1380 = vmatprep.mubr.f32.mxu0 0.0
    %1381 = vmatmul.mubr.f32.gmra.mrb[0].mxu0 %v1311
    %v1382 = vpop.f32.mrb[0].mxu0
    %v1383 = vadd.f32 %v1307, %v1382
    %v1384 = vpop.f32.mrb[0].mxu0
    %1385 = vmatprep.mubr.f32.mxu0 0.0
    %1386 = vmatmul.mubr.f32.gmra.mrb[0].mxu0 %v1314
    %v1387 = vpop.f32.mrb[0].mxu0
    %v1388 = vadd.f32 %v1307, %v1387
    %v1389 = vpop.f32.mrb[0].mxu0
    %1390 = vdwg.mxu0
    %v1391 = vadd.f32 %v1162, %v1383
    %v1392 = vadd.f32 %v1199, %v1388
    %v1393 = vld [vmem:[%s13] sm:$0xff]
    %v1394 = vld [vmem:[%s14] sm:$0xff]
    %v1395 = vsel %vm176, %v1391, 0.0
    %1396 = vadd.xlane.f32.xlu0 %v1395
    %v1397 = vpop.xlane.xlu0 %1396
    %v1398 = vrot.slane %v1397, 4
    %v1399 = vadd.f32 %v1397, %v1398
    %v1400 = vrot.slane %v1399, 2
    %v1401 = vadd.f32 %v1399, %v1400
    %v1402 = vrot.slane %v1401, 1
    %v1403 = vadd.f32 %v1401, %v1402
    %s1404 = vtos %v1403
    %v1405 = vrcp.pop 256.0
    %s1406 = vtos %v1405
    %s1407 = smul.f32 %s1404, %s1406
    %v1408 = vstv %s1407
    %v1409 = vsub.f32 %v1391, %v1408
    %v1410 = vmul.f32 %v1409, %v1409
    %v1411 = vsel %vm176, %v1410, 0.0
    %1412 = vadd.xlane.f32.xlu0 %v1411
    %v1413 = vpop.xlane.xlu0 %1412
    %v1414 = vrot.slane %v1413, 4
    %v1415 = vadd.f32 %v1413, %v1414
    %v1416 = vrot.slane %v1415, 2
    %v1417 = vadd.f32 %v1415, %v1416
    %v1418 = vrot.slane %v1417, 1
    %v1419 = vadd.f32 %v1417, %v1418
    %s1420 = vtos %v1419
    %v1421 = vrcp.pop 256.0
    %s1422 = vtos %v1421
    %s1423 = smul.f32 %s1420, %s1422
    %s1424 = sadd.f32 %s1423, 1e-05
    %v1425 = vstv %s1424
    %v1426 = vrsqrt.pop %v1425
    %s1427 = vtos %v1426
    %v1428 = vstv %s1427
    %v1429 = vmul.f32 %v1409, %v1428
    %v1430 = vmul.f32 %v1429, %v1393
    %v1431 = vadd.f32 %v1430, %v1394
    %v1432 = vsel %vm176, %v1392, 0.0
    %1433 = vadd.xlane.f32.xlu0 %v1432
    %v1434 = vpop.xlane.xlu0 %1433
    %v1435 = vrot.slane %v1434, 4
    %v1436 = vadd.f32 %v1434, %v1435
    %v1437 = vrot.slane %v1436, 2
    %v1438 = vadd.f32 %v1436, %v1437
    %v1439 = vrot.slane %v1438, 1
    %v1440 = vadd.f32 %v1438, %v1439
    %s1441 = vtos %v1440
    %v1442 = vrcp.pop 256.0
    %s1443 = vtos %v1442
    %s1444 = smul.f32 %s1441, %s1443
    %v1445 = vstv %s1444
    %v1446 = vsub.f32 %v1392, %v1445
    %v1447 = vmul.f32 %v1446, %v1446
    %v1448 = vsel %vm176, %v1447, 0.0
    %1449 = vadd.xlane.f32.xlu0 %v1448
    %v1450 = vpop.xlane.xlu0 %1449
    %v1451 = vrot.slane %v1450, 4
    %v1452 = vadd.f32 %v1450, %v1451
    %v1453 = vrot.slane %v1452, 2
    %v1454 = vadd.f32 %v1452, %v1453
    %v1455 = vrot.slane %v1454, 1
    %v1456 = vadd.f32 %v1454, %v1455
    %s1457 = vtos %v1456
    %v1458 = vrcp.pop 256.0
    %s1459 = vtos %v1458
    %s1460 = smul.f32 %s1457, %s1459
    %s1461 = sadd.f32 %s1460, 1e-05
    %v1462 = vstv %s1461
    %v1463 = vrsqrt.pop %v1462
    %s1464 = vtos %v1463
    %v1465 = vstv %s1464
    %v1466 = vmul.f32 %v1446, %v1465
    %v1467 = vmul.f32 %v1466, %v1393
    %v1468 = vadd.f32 %v1467, %v1394
    %s1469 = scalar_lea.vmem %s5, 32
    %v1470 = vld [vmem:[%s1469] sm:$0xff]
    %v1471 = vld [vmem:[%s1469 + $0x8] sm:$0xff]
    %v1472 = vld [vmem:[%s1469 + $0x10] sm:$0xff]
    %v1473 = vld [vmem:[%s1469 + $0x18] sm:$0xff]
    %v1475 = vsel %vm176, %v1431, 0
    %v1478 = vsel %vm176, %v1468, 0
    %1480 = vmatprep.subr.mxu0 0.0
    %1481 = vmatpush1.msra.mxu0 %v1470
    %1482 = vmatprep.subr.mxu0 0.0
    %1483 = vmatpush1.msra.mxu0 %v1471
    %1484 = vmatprep.subr.mxu0 0.0
    %1485 = vmatpush1.msra.mxu0 %v1472
    %1486 = vmatprep.subr.mxu0 0.0
    %1487 = vmatpush1.msra.mxu0 %v1473
    %1488 = vmatprep.subr.mxu0 0.0
    %1489 = vmatpush1.msra.mxu0 0.0
    %1490 = vmatprep.subr.mxu0 0.0
    %1491 = vmatpush1.msra.mxu0 0.0
    %1492 = vmatprep.subr.mxu0 0.0
    %1493 = vmatpush1.msra.mxu0 0.0
    %1494 = vmatprep.subr.mxu0 0.0
    %1495 = vmatpush1.msra.mxu0 0.0
    %1496 = vmatprep.subr.mxu0 0.0
    %1497 = vmatpush1.msra.mxu0 0.0
    %1498 = vmatprep.subr.mxu0 0.0
    %1499 = vmatpush1.msra.mxu0 0.0
    %1500 = vmatprep.subr.mxu0 0.0
    %1501 = vmatpush1.msra.mxu0 0.0
    %1502 = vmatprep.subr.mxu0 0.0
    %1503 = vmatpush1.msra.mxu0 0.0
    %1504 = vmatprep.subr.mxu0 0.0
    %1505 = vmatpush1.msra.mxu0 0.0
    %1506 = vmatprep.subr.mxu0 0.0
    %1507 = vmatpush1.msra.mxu0 0.0
    %1508 = vmatprep.subr.mxu0 0.0
    %1509 = vmatpush1.msra.mxu0 0.0
    %1510 = vmatprep.subr.mxu0 0.0
    %1511 = vmatpush1.msra.mxu0 0.0
    %1512 = vmatprep.subr.mxu0 0.0
    %1513 = vmatpush1.msra.mxu0 0.0
    %1514 = vmatprep.subr.mxu0 0.0
    %1515 = vmatpush1.msra.mxu0 0.0
    %1516 = vmatprep.subr.mxu0 0.0
    %1517 = vmatpush1.msra.mxu0 0.0
    %1518 = vmatprep.subr.mxu0 0.0
    %1519 = vmatpush1.msra.mxu0 0.0
    %1520 = vmatprep.subr.mxu0 0.0
    %1521 = vmatpush1.msra.mxu0 0.0
    %1522 = vmatprep.subr.mxu0 0.0
    %1523 = vmatpush1.msra.mxu0 0.0
    %1524 = vmatprep.subr.mxu0 0.0
    %1525 = vmatpush1.msra.mxu0 0.0
    %1526 = vmatprep.subr.mxu0 0.0
    %1527 = vmatpush1.msra.mxu0 0.0
    %1528 = vmatprep.subr.mxu0 0.0
    %1529 = vmatpush1.msra.mxu0 0.0
    %1530 = vmatprep.subr.mxu0 0.0
    %1531 = vmatpush1.msra.mxu0 0.0
    %1532 = vmatprep.subr.mxu0 0.0
    %1533 = vmatpush1.msra.mxu0 0.0
    %1534 = vmatprep.subr.mxu0 0.0
    %1535 = vmatpush1.msra.mxu0 0.0
    %1536 = vmatprep.subr.mxu0 0.0
    %1537 = vmatpush1.msra.mxu0 0.0
    %1538 = vmatprep.subr.mxu0 0.0
    %1539 = vmatpush1.msra.mxu0 0.0
    %1540 = vmatprep.subr.mxu0 0.0
    %1541 = vmatpush1.msra.mxu0 0.0
    %1542 = vmatprep.subr.mxu0 0.0
    %1543 = vmatpush1.msra.mxu0 0.0
    %1544 = vmatprep.mubr.f32.mxu0 0.0
    %1545 = vmatmul.mubr.f32.gmra.mrb[0].mxu0 %v1475
    %v1546 = vpop.f32.mrb[0].mxu0
    %v1547 = vadd.f32 0.0, %v1546
    %v1548 = vpop.f32.mrb[0].mxu0
    %1549 = vmatprep.mubr.f32.mxu0 0.0
    %1550 = vmatmul.mubr.f32.gmra.mrb[0].mxu0 %v1478
    %v1551 = vpop.f32.mrb[0].mxu0
    %v1552 = vadd.f32 0.0, %v1551
    %v1553 = vpop.f32.mrb[0].mxu0
    %1554 = vdwg.mxu0
    %1557 = vrot.lane.b32.xlu0 %v1547, 112
    %v1558 = vpop.permute.xlu0 %1557
    %1559 = vrot.lane.b32.xlu0 %v1552, 112
    %v1560 = vpop.permute.xlu0 %1559
    %1561 = vrot.lane.b32.xlu0 %v1547, 96
    %v1562 = vpop.permute.xlu0 %1561
    %v1563 = vsel %vm367, %v1547, 0
    %v1565 = vsel %vm367, %v1562, 0
    %1567 = vmatprep.subr.mxu0 0.0
    %1568 = vmatpush1.xpose.msra.mxu0 %v1565
    %1569 = vmatprep.subr.mxu0 0.0
    %1570 = vmatpush1.xpose.msra.mxu0 0.0
    %1571 = vmatprep.subr.mxu0 0.0
    %1572 = vmatpush1.xpose.msra.mxu0 0.0
    %1573 = vmatprep.subr.mxu0 0.0
    %1574 = vmatpush1.xpose.msra.mxu0 0.0
    %1575 = vmatprep.subr.mxu0 0.0
    %1576 = vmatpush1.xpose.msra.mxu0 0.0
    %1577 = vmatprep.subr.mxu0 0.0
    %1578 = vmatpush1.xpose.msra.mxu0 0.0
    %1579 = vmatprep.subr.mxu0 0.0
    %1580 = vmatpush1.xpose.msra.mxu0 0.0
    %1581 = vmatprep.subr.mxu0 0.0
    %1582 = vmatpush1.xpose.msra.mxu0 0.0
    %1583 = vmatprep.subr.mxu0 0.0
    %1584 = vmatpush1.xpose.msra.mxu0 0.0
    %1585 = vmatprep.subr.mxu0 0.0
    %1586 = vmatpush1.xpose.msra.mxu0 0.0
    %1587 = vmatprep.subr.mxu0 0.0
    %1588 = vmatpush1.xpose.msra.mxu0 0.0
    %1589 = vmatprep.subr.mxu0 0.0
    %1590 = vmatpush1.xpose.msra.mxu0 0.0
    %1591 = vmatprep.subr.mxu0 0.0
    %1592 = vmatpush1.xpose.msra.mxu0 0.0
    %1593 = vmatprep.subr.mxu0 0.0
    %1594 = vmatpush1.xpose.msra.mxu0 0.0
    %1595 = vmatprep.subr.mxu0 0.0
    %1596 = vmatpush1.xpose.msra.mxu0 0.0
    %1597 = vmatprep.subr.mxu0 0.0
    %1598 = vmatpush1.xpose.msra.mxu0 0.0
    %1599 = vmatprep.subr.mxu0 0.0
    %1600 = vmatpush1.xpose.msra.mxu0 0.0
    %1601 = vmatprep.subr.mxu0 0.0
    %1602 = vmatpush1.xpose.msra.mxu0 0.0
    %1603 = vmatprep.subr.mxu0 0.0
    %1604 = vmatpush1.xpose.msra.mxu0 0.0
    %1605 = vmatprep.subr.mxu0 0.0
    %1606 = vmatpush1.xpose.msra.mxu0 0.0
    %1607 = vmatprep.subr.mxu0 0.0
    %1608 = vmatpush1.xpose.msra.mxu0 0.0
    %1609 = vmatprep.subr.mxu0 0.0
    %1610 = vmatpush1.xpose.msra.mxu0 0.0
    %1611 = vmatprep.subr.mxu0 0.0
    %1612 = vmatpush1.xpose.msra.mxu0 0.0
    %1613 = vmatprep.subr.mxu0 0.0
    %1614 = vmatpush1.xpose.msra.mxu0 0.0
    %1615 = vmatprep.subr.mxu0 0.0
    %1616 = vmatpush1.xpose.msra.mxu0 0.0
    %1617 = vmatprep.subr.mxu0 0.0
    %1618 = vmatpush1.xpose.msra.mxu0 0.0
    %1619 = vmatprep.subr.mxu0 0.0
    %1620 = vmatpush1.xpose.msra.mxu0 0.0
    %1621 = vmatprep.subr.mxu0 0.0
    %1622 = vmatpush1.xpose.msra.mxu0 0.0
    %1623 = vmatprep.subr.mxu0 0.0
    %1624 = vmatpush1.xpose.msra.mxu0 0.0
    %1625 = vmatprep.subr.mxu0 0.0
    %1626 = vmatpush1.xpose.msra.mxu0 0.0
    %1627 = vmatprep.subr.mxu0 0.0
    %1628 = vmatpush1.xpose.msra.mxu0 0.0
    %1629 = vmatprep.subr.mxu0 0.0
    %1630 = vmatpush1.xpose.msra.mxu0 0.0
    %1631 = vmatprep.mubr.f32.mxu0 0.0
    %1632 = vmatmul.mubr.f32.gmra.mrb[0].mxu0 %v1563
    %v1633 = vpop.f32.mrb[0].mxu0
    %v1634 = vadd.f32 0.0, %v1633
    %v1635 = vpop.f32.mrb[0].mxu0
    %1636 = vdwg.mxu0
    %1637 = vrot.lane.b32.xlu0 %v1552, 96
    %v1638 = vpop.permute.xlu0 %1637
    %v1639 = vsel %vm367, %v1552, 0
    %v1641 = vsel %vm367, %v1638, 0
    %1643 = vmatprep.subr.mxu0 0.0
    %1644 = vmatpush1.xpose.msra.mxu0 %v1641
    %1645 = vmatprep.subr.mxu0 0.0
    %1646 = vmatpush1.xpose.msra.mxu0 0.0
    %1647 = vmatprep.subr.mxu0 0.0
    %1648 = vmatpush1.xpose.msra.mxu0 0.0
    %1649 = vmatprep.subr.mxu0 0.0
    %1650 = vmatpush1.xpose.msra.mxu0 0.0
    %1651 = vmatprep.subr.mxu0 0.0
    %1652 = vmatpush1.xpose.msra.mxu0 0.0
    %1653 = vmatprep.subr.mxu0 0.0
    %1654 = vmatpush1.xpose.msra.mxu0 0.0
    %1655 = vmatprep.subr.mxu0 0.0
    %1656 = vmatpush1.xpose.msra.mxu0 0.0
    %1657 = vmatprep.subr.mxu0 0.0
    %1658 = vmatpush1.xpose.msra.mxu0 0.0
    %1659 = vmatprep.subr.mxu0 0.0
    %1660 = vmatpush1.xpose.msra.mxu0 0.0
    %1661 = vmatprep.subr.mxu0 0.0
    %1662 = vmatpush1.xpose.msra.mxu0 0.0
    %1663 = vmatprep.subr.mxu0 0.0
    %1664 = vmatpush1.xpose.msra.mxu0 0.0
    %1665 = vmatprep.subr.mxu0 0.0
    %1666 = vmatpush1.xpose.msra.mxu0 0.0
    %1667 = vmatprep.subr.mxu0 0.0
    %1668 = vmatpush1.xpose.msra.mxu0 0.0
    %1669 = vmatprep.subr.mxu0 0.0
    %1670 = vmatpush1.xpose.msra.mxu0 0.0
    %1671 = vmatprep.subr.mxu0 0.0
    %1672 = vmatpush1.xpose.msra.mxu0 0.0
    %1673 = vmatprep.subr.mxu0 0.0
    %1674 = vmatpush1.xpose.msra.mxu0 0.0
    %1675 = vmatprep.subr.mxu0 0.0
    %1676 = vmatpush1.xpose.msra.mxu0 0.0
    %1677 = vmatprep.subr.mxu0 0.0
    %1678 = vmatpush1.xpose.msra.mxu0 0.0
    %1679 = vmatprep.subr.mxu0 0.0
    %1680 = vmatpush1.xpose.msra.mxu0 0.0
    %1681 = vmatprep.subr.mxu0 0.0
    %1682 = vmatpush1.xpose.msra.mxu0 0.0
    %1683 = vmatprep.subr.mxu0 0.0
    %1684 = vmatpush1.xpose.msra.mxu0 0.0
    %1685 = vmatprep.subr.mxu0 0.0
    %1686 = vmatpush1.xpose.msra.mxu0 0.0
    %1687 = vmatprep.subr.mxu0 0.0
    %1688 = vmatpush1.xpose.msra.mxu0 0.0
    %1689 = vmatprep.subr.mxu0 0.0
    %1690 = vmatpush1.xpose.msra.mxu0 0.0
    %1691 = vmatprep.subr.mxu0 0.0
    %1692 = vmatpush1.xpose.msra.mxu0 0.0
    %1693 = vmatprep.subr.mxu0 0.0
    %1694 = vmatpush1.xpose.msra.mxu0 0.0
    %1695 = vmatprep.subr.mxu0 0.0
    %1696 = vmatpush1.xpose.msra.mxu0 0.0
    %1697 = vmatprep.subr.mxu0 0.0
    %1698 = vmatpush1.xpose.msra.mxu0 0.0
    %1699 = vmatprep.subr.mxu0 0.0
    %1700 = vmatpush1.xpose.msra.mxu0 0.0
    %1701 = vmatprep.subr.mxu0 0.0
    %1702 = vmatpush1.xpose.msra.mxu0 0.0
    %1703 = vmatprep.subr.mxu0 0.0
    %1704 = vmatpush1.xpose.msra.mxu0 0.0
    %1705 = vmatprep.subr.mxu0 0.0
    %1706 = vmatpush1.xpose.msra.mxu0 0.0
    %1707 = vmatprep.mubr.f32.mxu0 0.0
    %1708 = vmatmul.mubr.f32.gmra.mrb[0].mxu0 %v1639
    %v1709 = vpop.f32.mrb[0].mxu0
    %v1710 = vadd.f32 0.0, %v1709
    %v1711 = vpop.f32.mrb[0].mxu0
    %1712 = vdwg.mxu0
    %1713 = vrot.lane.b32.xlu0 %v1558, 96
    %v1714 = vpop.permute.xlu0 %1713
    %v1715 = vsel %vm367, %v1558, 0
    %v1717 = vsel %vm367, %v1714, 0
    %1719 = vmatprep.subr.mxu0 0.0
    %1720 = vmatpush1.xpose.msra.mxu0 %v1717
    %1721 = vmatprep.subr.mxu0 0.0
    %1722 = vmatpush1.xpose.msra.mxu0 0.0
    %1723 = vmatprep.subr.mxu0 0.0
    %1724 = vmatpush1.xpose.msra.mxu0 0.0
    %1725 = vmatprep.subr.mxu0 0.0
    %1726 = vmatpush1.xpose.msra.mxu0 0.0
    %1727 = vmatprep.subr.mxu0 0.0
    %1728 = vmatpush1.xpose.msra.mxu0 0.0
    %1729 = vmatprep.subr.mxu0 0.0
    %1730 = vmatpush1.xpose.msra.mxu0 0.0
    %1731 = vmatprep.subr.mxu0 0.0
    %1732 = vmatpush1.xpose.msra.mxu0 0.0
    %1733 = vmatprep.subr.mxu0 0.0
    %1734 = vmatpush1.xpose.msra.mxu0 0.0
    %1735 = vmatprep.subr.mxu0 0.0
    %1736 = vmatpush1.xpose.msra.mxu0 0.0
    %1737 = vmatprep.subr.mxu0 0.0
    %1738 = vmatpush1.xpose.msra.mxu0 0.0
    %1739 = vmatprep.subr.mxu0 0.0
    %1740 = vmatpush1.xpose.msra.mxu0 0.0
    %1741 = vmatprep.subr.mxu0 0.0
    %1742 = vmatpush1.xpose.msra.mxu0 0.0
    %1743 = vmatprep.subr.mxu0 0.0
    %1744 = vmatpush1.xpose.msra.mxu0 0.0
    %1745 = vmatprep.subr.mxu0 0.0
    %1746 = vmatpush1.xpose.msra.mxu0 0.0
    %1747 = vmatprep.subr.mxu0 0.0
    %1748 = vmatpush1.xpose.msra.mxu0 0.0
    %1749 = vmatprep.subr.mxu0 0.0
    %1750 = vmatpush1.xpose.msra.mxu0 0.0
    %1751 = vmatprep.subr.mxu0 0.0
    %1752 = vmatpush1.xpose.msra.mxu0 0.0
    %1753 = vmatprep.subr.mxu0 0.0
    %1754 = vmatpush1.xpose.msra.mxu0 0.0
    %1755 = vmatprep.subr.mxu0 0.0
    %1756 = vmatpush1.xpose.msra.mxu0 0.0
    %1757 = vmatprep.subr.mxu0 0.0
    %1758 = vmatpush1.xpose.msra.mxu0 0.0
    %1759 = vmatprep.subr.mxu0 0.0
    %1760 = vmatpush1.xpose.msra.mxu0 0.0
    %1761 = vmatprep.subr.mxu0 0.0
    %1762 = vmatpush1.xpose.msra.mxu0 0.0
    %1763 = vmatprep.subr.mxu0 0.0
    %1764 = vmatpush1.xpose.msra.mxu0 0.0
    %1765 = vmatprep.subr.mxu0 0.0
    %1766 = vmatpush1.xpose.msra.mxu0 0.0
    %1767 = vmatprep.subr.mxu0 0.0
    %1768 = vmatpush1.xpose.msra.mxu0 0.0
    %1769 = vmatprep.subr.mxu0 0.0
    %1770 = vmatpush1.xpose.msra.mxu0 0.0
    %1771 = vmatprep.subr.mxu0 0.0
    %1772 = vmatpush1.xpose.msra.mxu0 0.0
    %1773 = vmatprep.subr.mxu0 0.0
    %1774 = vmatpush1.xpose.msra.mxu0 0.0
    %1775 = vmatprep.subr.mxu0 0.0
    %1776 = vmatpush1.xpose.msra.mxu0 0.0
    %1777 = vmatprep.subr.mxu0 0.0
    %1778 = vmatpush1.xpose.msra.mxu0 0.0
    %1779 = vmatprep.subr.mxu0 0.0
    %1780 = vmatpush1.xpose.msra.mxu0 0.0
    %1781 = vmatprep.subr.mxu0 0.0
    %1782 = vmatpush1.xpose.msra.mxu0 0.0
    %1783 = vmatprep.mubr.f32.mxu0 0.0
    %1784 = vmatmul.mubr.f32.gmra.mrb[0].mxu0 %v1715
    %v1785 = vpop.f32.mrb[0].mxu0
    %v1786 = vadd.f32 0.0, %v1785
    %v1787 = vpop.f32.mrb[0].mxu0
    %1788 = vdwg.mxu0
    %1789 = vrot.lane.b32.xlu0 %v1560, 96
    %v1790 = vpop.permute.xlu0 %1789
    %v1791 = vsel %vm367, %v1560, 0
    %v1793 = vsel %vm367, %v1790, 0
    %1795 = vmatprep.subr.mxu0 0.0
    %1796 = vmatpush1.xpose.msra.mxu0 %v1793
    %1797 = vmatprep.subr.mxu0 0.0
    %1798 = vmatpush1.xpose.msra.mxu0 0.0
    %1799 = vmatprep.subr.mxu0 0.0
    %1800 = vmatpush1.xpose.msra.mxu0 0.0
    %1801 = vmatprep.subr.mxu0 0.0
    %1802 = vmatpush1.xpose.msra.mxu0 0.0
    %1803 = vmatprep.subr.mxu0 0.0
    %1804 = vmatpush1.xpose.msra.mxu0 0.0
    %1805 = vmatprep.subr.mxu0 0.0
    %1806 = vmatpush1.xpose.msra.mxu0 0.0
    %1807 = vmatprep.subr.mxu0 0.0
    %1808 = vmatpush1.xpose.msra.mxu0 0.0
    %1809 = vmatprep.subr.mxu0 0.0
    %1810 = vmatpush1.xpose.msra.mxu0 0.0
    %1811 = vmatprep.subr.mxu0 0.0
    %1812 = vmatpush1.xpose.msra.mxu0 0.0
    %1813 = vmatprep.subr.mxu0 0.0
    %1814 = vmatpush1.xpose.msra.mxu0 0.0
    %1815 = vmatprep.subr.mxu0 0.0
    %1816 = vmatpush1.xpose.msra.mxu0 0.0
    %1817 = vmatprep.subr.mxu0 0.0
    %1818 = vmatpush1.xpose.msra.mxu0 0.0
    %1819 = vmatprep.subr.mxu0 0.0
    %1820 = vmatpush1.xpose.msra.mxu0 0.0
    %1821 = vmatprep.subr.mxu0 0.0
    %1822 = vmatpush1.xpose.msra.mxu0 0.0
    %1823 = vmatprep.subr.mxu0 0.0
    %1824 = vmatpush1.xpose.msra.mxu0 0.0
    %1825 = vmatprep.subr.mxu0 0.0
    %1826 = vmatpush1.xpose.msra.mxu0 0.0
    %1827 = vmatprep.subr.mxu0 0.0
    %1828 = vmatpush1.xpose.msra.mxu0 0.0
    %1829 = vmatprep.subr.mxu0 0.0
    %1830 = vmatpush1.xpose.msra.mxu0 0.0
    %1831 = vmatprep.subr.mxu0 0.0
    %1832 = vmatpush1.xpose.msra.mxu0 0.0
    %1833 = vmatprep.subr.mxu0 0.0
    %1834 = vmatpush1.xpose.msra.mxu0 0.0
    %1835 = vmatprep.subr.mxu0 0.0
    %1836 = vmatpush1.xpose.msra.mxu0 0.0
    %1837 = vmatprep.subr.mxu0 0.0
    %1838 = vmatpush1.xpose.msra.mxu0 0.0
    %1839 = vmatprep.subr.mxu0 0.0
    %1840 = vmatpush1.xpose.msra.mxu0 0.0
    %1841 = vmatprep.subr.mxu0 0.0
    %1842 = vmatpush1.xpose.msra.mxu0 0.0
    %1843 = vmatprep.subr.mxu0 0.0
    %1844 = vmatpush1.xpose.msra.mxu0 0.0
    %1845 = vmatprep.subr.mxu0 0.0
    %1846 = vmatpush1.xpose.msra.mxu0 0.0
    %1847 = vmatprep.subr.mxu0 0.0
    %1848 = vmatpush1.xpose.msra.mxu0 0.0
    %1849 = vmatprep.subr.mxu0 0.0
    %1850 = vmatpush1.xpose.msra.mxu0 0.0
    %1851 = vmatprep.subr.mxu0 0.0
    %1852 = vmatpush1.xpose.msra.mxu0 0.0
    %1853 = vmatprep.subr.mxu0 0.0
    %1854 = vmatpush1.xpose.msra.mxu0 0.0
    %1855 = vmatprep.subr.mxu0 0.0
    %1856 = vmatpush1.xpose.msra.mxu0 0.0
    %1857 = vmatprep.subr.mxu0 0.0
    %1858 = vmatpush1.xpose.msra.mxu0 0.0
    %1859 = vmatprep.mubr.f32.mxu0 0.0
    %1860 = vmatmul.mubr.f32.gmra.mrb[0].mxu0 %v1791
    %v1861 = vpop.f32.mrb[0].mxu0
    %v1862 = vadd.f32 0.0, %v1861
    %v1863 = vpop.f32.mrb[0].mxu0
    %1864 = vdwg.mxu0
    %v1865 = vmul.f32 %v1634, 0.25
    %v1866 = vmul.f32 %v1710, 0.25
    %v1867 = vmul.f32 %v1786, 0.25
    %v1868 = vmul.f32 %v1862, 0.25
    %v1869 = vsel %vm272, %v1865, -1000000.0
    %v1870 = vsel %vm273, %v1866, -1000000.0
    %v1871 = vsel %vm272, %v1867, -1000000.0
    %v1872 = vsel %vm273, %v1868, -1000000.0
    %v1873 = vsel %vm678, %v1869, -inf
    %1874 = vmax.xlane.f32.xlu0 %v1873
    %v1875 = vpop.xlane.xlu0 %1874
    %v1876 = vsel %vm678, %v1870, -inf
    %1877 = vmax.xlane.f32.xlu0 %v1876
    %v1878 = vpop.xlane.xlu0 %1877
    %v1879 = vsel %vm678, %v1871, -inf
    %1880 = vmax.xlane.f32.xlu0 %v1879
    %v1881 = vpop.xlane.xlu0 %1880
    %v1882 = vsel %vm678, %v1872, -inf
    %1883 = vmax.xlane.f32.xlu0 %v1882
    %v1884 = vpop.xlane.xlu0 %1883
    %v1885 = vsub.f32 %v1869, %v1875
    %v1886 = vsub.f32 %v1870, %v1878
    %v1887 = vsub.f32 %v1871, %v1881
    %v1888 = vsub.f32 %v1872, %v1884
    %v1889 = vmul.f32 %v1885, 1.442695
    %v1890 = vpow.pop %v1889
    %v1891 = vmul.f32 %v1886, 1.442695
    %v1892 = vpow.pop %v1891
    %v1893 = vmul.f32 %v1887, 1.442695
    %v1894 = vpow.pop %v1893
    %v1895 = vmul.f32 %v1888, 1.442695
    %v1896 = vpow.pop %v1895
    %v1897 = vsel %vm678, %v1890, 0.0
    %1898 = vadd.xlane.f32.xlu0 %v1897
    %v1899 = vpop.xlane.xlu0 %1898
    %v1900 = vsel %vm678, %v1892, 0.0
    %1901 = vadd.xlane.f32.xlu0 %v1900
    %v1902 = vpop.xlane.xlu0 %1901
    %v1903 = vsel %vm678, %v1894, 0.0
    %1904 = vadd.xlane.f32.xlu0 %v1903
    %v1905 = vpop.xlane.xlu0 %1904
    %v1906 = vsel %vm678, %v1896, 0.0
    %1907 = vadd.xlane.f32.xlu0 %v1906
    %v1908 = vpop.xlane.xlu0 %1907
    %v1909 = vrcp.pop %v1899
    %v1910 = vrcp.pop %v1902
    %v1911 = vrcp.pop %v1905
    %v1912 = vrcp.pop %v1908
    %v1913 = vmul.f32 %v1890, %v1909
    %v1914 = vmul.f32 %v1892, %v1910
    %v1915 = vmul.f32 %v1894, %v1911
    %v1916 = vmul.f32 %v1896, %v1912
    %1917 = vrot.lane.b32.xlu0 %v1547, 64
    %v1918 = vpop.permute.xlu0 %1917
    %v1921 = vsel %vm678, %v1913, 0
    %1923 = vmatprep.subr.mxu0 0.0
    %1924 = vmatpush1.msra.mxu0 %v1918
    %1925 = vmatprep.subr.mxu0 0.0
    %1926 = vmatpush1.msra.mxu0 0.0
    %1927 = vmatprep.subr.mxu0 0.0
    %1928 = vmatpush1.msra.mxu0 0.0
    %1929 = vmatprep.subr.mxu0 0.0
    %1930 = vmatpush1.msra.mxu0 0.0
    %1931 = vmatprep.subr.mxu0 0.0
    %1932 = vmatpush1.msra.mxu0 0.0
    %1933 = vmatprep.subr.mxu0 0.0
    %1934 = vmatpush1.msra.mxu0 0.0
    %1935 = vmatprep.subr.mxu0 0.0
    %1936 = vmatpush1.msra.mxu0 0.0
    %1937 = vmatprep.subr.mxu0 0.0
    %1938 = vmatpush1.msra.mxu0 0.0
    %1939 = vmatprep.subr.mxu0 0.0
    %1940 = vmatpush1.msra.mxu0 0.0
    %1941 = vmatprep.subr.mxu0 0.0
    %1942 = vmatpush1.msra.mxu0 0.0
    %1943 = vmatprep.subr.mxu0 0.0
    %1944 = vmatpush1.msra.mxu0 0.0
    %1945 = vmatprep.subr.mxu0 0.0
    %1946 = vmatpush1.msra.mxu0 0.0
    %1947 = vmatprep.subr.mxu0 0.0
    %1948 = vmatpush1.msra.mxu0 0.0
    %1949 = vmatprep.subr.mxu0 0.0
    %1950 = vmatpush1.msra.mxu0 0.0
    %1951 = vmatprep.subr.mxu0 0.0
    %1952 = vmatpush1.msra.mxu0 0.0
    %1953 = vmatprep.subr.mxu0 0.0
    %1954 = vmatpush1.msra.mxu0 0.0
    %1955 = vmatprep.subr.mxu0 0.0
    %1956 = vmatpush1.msra.mxu0 0.0
    %1957 = vmatprep.subr.mxu0 0.0
    %1958 = vmatpush1.msra.mxu0 0.0
    %1959 = vmatprep.subr.mxu0 0.0
    %1960 = vmatpush1.msra.mxu0 0.0
    %1961 = vmatprep.subr.mxu0 0.0
    %1962 = vmatpush1.msra.mxu0 0.0
    %1963 = vmatprep.subr.mxu0 0.0
    %1964 = vmatpush1.msra.mxu0 0.0
    %1965 = vmatprep.subr.mxu0 0.0
    %1966 = vmatpush1.msra.mxu0 0.0
    %1967 = vmatprep.subr.mxu0 0.0
    %1968 = vmatpush1.msra.mxu0 0.0
    %1969 = vmatprep.subr.mxu0 0.0
    %1970 = vmatpush1.msra.mxu0 0.0
    %1971 = vmatprep.subr.mxu0 0.0
    %1972 = vmatpush1.msra.mxu0 0.0
    %1973 = vmatprep.subr.mxu0 0.0
    %1974 = vmatpush1.msra.mxu0 0.0
    %1975 = vmatprep.subr.mxu0 0.0
    %1976 = vmatpush1.msra.mxu0 0.0
    %1977 = vmatprep.subr.mxu0 0.0
    %1978 = vmatpush1.msra.mxu0 0.0
    %1979 = vmatprep.subr.mxu0 0.0
    %1980 = vmatpush1.msra.mxu0 0.0
    %1981 = vmatprep.subr.mxu0 0.0
    %1982 = vmatpush1.msra.mxu0 0.0
    %1983 = vmatprep.subr.mxu0 0.0
    %1984 = vmatpush1.msra.mxu0 0.0
    %1985 = vmatprep.subr.mxu0 0.0
    %1986 = vmatpush1.msra.mxu0 0.0
    %1987 = vmatprep.mubr.f32.mxu0 0.0
    %1988 = vmatmul.mubr.f32.gmra.mrb[0].mxu0 %v1921
    %v1989 = vpop.f32.mrb[0].mxu0
    %v1990 = vadd.f32 0.0, %v1989
    %v1991 = vpop.f32.mrb[0].mxu0
    %1992 = vdwg.mxu0
    %1993 = vrot.lane.b32.xlu0 %v1552, 64
    %v1994 = vpop.permute.xlu0 %1993
    %v1997 = vsel %vm678, %v1914, 0
    %1999 = vmatprep.subr.mxu0 0.0
    %2000 = vmatpush1.msra.mxu0 %v1994
    %2001 = vmatprep.subr.mxu0 0.0
    %2002 = vmatpush1.msra.mxu0 0.0
    %2003 = vmatprep.subr.mxu0 0.0
    %2004 = vmatpush1.msra.mxu0 0.0
    %2005 = vmatprep.subr.mxu0 0.0
    %2006 = vmatpush1.msra.mxu0 0.0
    %2007 = vmatprep.subr.mxu0 0.0
    %2008 = vmatpush1.msra.mxu0 0.0
    %2009 = vmatprep.subr.mxu0 0.0
    %2010 = vmatpush1.msra.mxu0 0.0
    %2011 = vmatprep.subr.mxu0 0.0
    %2012 = vmatpush1.msra.mxu0 0.0
    %2013 = vmatprep.subr.mxu0 0.0
    %2014 = vmatpush1.msra.mxu0 0.0
    %2015 = vmatprep.subr.mxu0 0.0
    %2016 = vmatpush1.msra.mxu0 0.0
    %2017 = vmatprep.subr.mxu0 0.0
    %2018 = vmatpush1.msra.mxu0 0.0
    %2019 = vmatprep.subr.mxu0 0.0
    %2020 = vmatpush1.msra.mxu0 0.0
    %2021 = vmatprep.subr.mxu0 0.0
    %2022 = vmatpush1.msra.mxu0 0.0
    %2023 = vmatprep.subr.mxu0 0.0
    %2024 = vmatpush1.msra.mxu0 0.0
    %2025 = vmatprep.subr.mxu0 0.0
    %2026 = vmatpush1.msra.mxu0 0.0
    %2027 = vmatprep.subr.mxu0 0.0
    %2028 = vmatpush1.msra.mxu0 0.0
    %2029 = vmatprep.subr.mxu0 0.0
    %2030 = vmatpush1.msra.mxu0 0.0
    %2031 = vmatprep.subr.mxu0 0.0
    %2032 = vmatpush1.msra.mxu0 0.0
    %2033 = vmatprep.subr.mxu0 0.0
    %2034 = vmatpush1.msra.mxu0 0.0
    %2035 = vmatprep.subr.mxu0 0.0
    %2036 = vmatpush1.msra.mxu0 0.0
    %2037 = vmatprep.subr.mxu0 0.0
    %2038 = vmatpush1.msra.mxu0 0.0
    %2039 = vmatprep.subr.mxu0 0.0
    %2040 = vmatpush1.msra.mxu0 0.0
    %2041 = vmatprep.subr.mxu0 0.0
    %2042 = vmatpush1.msra.mxu0 0.0
    %2043 = vmatprep.subr.mxu0 0.0
    %2044 = vmatpush1.msra.mxu0 0.0
    %2045 = vmatprep.subr.mxu0 0.0
    %2046 = vmatpush1.msra.mxu0 0.0
    %2047 = vmatprep.subr.mxu0 0.0
    %2048 = vmatpush1.msra.mxu0 0.0
    %2049 = vmatprep.subr.mxu0 0.0
    %2050 = vmatpush1.msra.mxu0 0.0
    %2051 = vmatprep.subr.mxu0 0.0
    %2052 = vmatpush1.msra.mxu0 0.0
    %2053 = vmatprep.subr.mxu0 0.0
    %2054 = vmatpush1.msra.mxu0 0.0
    %2055 = vmatprep.subr.mxu0 0.0
    %2056 = vmatpush1.msra.mxu0 0.0
    %2057 = vmatprep.subr.mxu0 0.0
    %2058 = vmatpush1.msra.mxu0 0.0
    %2059 = vmatprep.subr.mxu0 0.0
    %2060 = vmatpush1.msra.mxu0 0.0
    %2061 = vmatprep.subr.mxu0 0.0
    %2062 = vmatpush1.msra.mxu0 0.0
    %2063 = vmatprep.mubr.f32.mxu0 0.0
    %2064 = vmatmul.mubr.f32.gmra.mrb[0].mxu0 %v1997
    %v2065 = vpop.f32.mrb[0].mxu0
    %v2066 = vadd.f32 0.0, %v2065
    %v2067 = vpop.f32.mrb[0].mxu0
    %2068 = vdwg.mxu0
    %2069 = vrot.lane.b32.xlu0 %v1558, 64
    %v2070 = vpop.permute.xlu0 %2069
    %v2073 = vsel %vm678, %v1915, 0
    %2075 = vmatprep.subr.mxu0 0.0
    %2076 = vmatpush1.msra.mxu0 %v2070
    %2077 = vmatprep.subr.mxu0 0.0
    %2078 = vmatpush1.msra.mxu0 0.0
    %2079 = vmatprep.subr.mxu0 0.0
    %2080 = vmatpush1.msra.mxu0 0.0
    %2081 = vmatprep.subr.mxu0 0.0
    %2082 = vmatpush1.msra.mxu0 0.0
    %2083 = vmatprep.subr.mxu0 0.0
    %2084 = vmatpush1.msra.mxu0 0.0
    %2085 = vmatprep.subr.mxu0 0.0
    %2086 = vmatpush1.msra.mxu0 0.0
    %2087 = vmatprep.subr.mxu0 0.0
    %2088 = vmatpush1.msra.mxu0 0.0
    %2089 = vmatprep.subr.mxu0 0.0
    %2090 = vmatpush1.msra.mxu0 0.0
    %2091 = vmatprep.subr.mxu0 0.0
    %2092 = vmatpush1.msra.mxu0 0.0
    %2093 = vmatprep.subr.mxu0 0.0
    %2094 = vmatpush1.msra.mxu0 0.0
    %2095 = vmatprep.subr.mxu0 0.0
    %2096 = vmatpush1.msra.mxu0 0.0
    %2097 = vmatprep.subr.mxu0 0.0
    %2098 = vmatpush1.msra.mxu0 0.0
    %2099 = vmatprep.subr.mxu0 0.0
    %2100 = vmatpush1.msra.mxu0 0.0
    %2101 = vmatprep.subr.mxu0 0.0
    %2102 = vmatpush1.msra.mxu0 0.0
    %2103 = vmatprep.subr.mxu0 0.0
    %2104 = vmatpush1.msra.mxu0 0.0
    %2105 = vmatprep.subr.mxu0 0.0
    %2106 = vmatpush1.msra.mxu0 0.0
    %2107 = vmatprep.subr.mxu0 0.0
    %2108 = vmatpush1.msra.mxu0 0.0
    %2109 = vmatprep.subr.mxu0 0.0
    %2110 = vmatpush1.msra.mxu0 0.0
    %2111 = vmatprep.subr.mxu0 0.0
    %2112 = vmatpush1.msra.mxu0 0.0
    %2113 = vmatprep.subr.mxu0 0.0
    %2114 = vmatpush1.msra.mxu0 0.0
    %2115 = vmatprep.subr.mxu0 0.0
    %2116 = vmatpush1.msra.mxu0 0.0
    %2117 = vmatprep.subr.mxu0 0.0
    %2118 = vmatpush1.msra.mxu0 0.0
    %2119 = vmatprep.subr.mxu0 0.0
    %2120 = vmatpush1.msra.mxu0 0.0
    %2121 = vmatprep.subr.mxu0 0.0
    %2122 = vmatpush1.msra.mxu0 0.0
    %2123 = vmatprep.subr.mxu0 0.0
    %2124 = vmatpush1.msra.mxu0 0.0
    %2125 = vmatprep.subr.mxu0 0.0
    %2126 = vmatpush1.msra.mxu0 0.0
    %2127 = vmatprep.subr.mxu0 0.0
    %2128 = vmatpush1.msra.mxu0 0.0
    %2129 = vmatprep.subr.mxu0 0.0
    %2130 = vmatpush1.msra.mxu0 0.0
    %2131 = vmatprep.subr.mxu0 0.0
    %2132 = vmatpush1.msra.mxu0 0.0
    %2133 = vmatprep.subr.mxu0 0.0
    %2134 = vmatpush1.msra.mxu0 0.0
    %2135 = vmatprep.subr.mxu0 0.0
    %2136 = vmatpush1.msra.mxu0 0.0
    %2137 = vmatprep.subr.mxu0 0.0
    %2138 = vmatpush1.msra.mxu0 0.0
    %2139 = vmatprep.mubr.f32.mxu0 0.0
    %2140 = vmatmul.mubr.f32.gmra.mrb[0].mxu0 %v2073
    %v2141 = vpop.f32.mrb[0].mxu0
    %v2142 = vadd.f32 0.0, %v2141
    %v2143 = vpop.f32.mrb[0].mxu0
    %2144 = vdwg.mxu0
    %2145 = vrot.lane.b32.xlu0 %v1560, 64
    %v2146 = vpop.permute.xlu0 %2145
    %v2149 = vsel %vm678, %v1916, 0
    %2151 = vmatprep.subr.mxu0 0.0
    %2152 = vmatpush1.msra.mxu0 %v2146
    %2153 = vmatprep.subr.mxu0 0.0
    %2154 = vmatpush1.msra.mxu0 0.0
    %2155 = vmatprep.subr.mxu0 0.0
    %2156 = vmatpush1.msra.mxu0 0.0
    %2157 = vmatprep.subr.mxu0 0.0
    %2158 = vmatpush1.msra.mxu0 0.0
    %2159 = vmatprep.subr.mxu0 0.0
    %2160 = vmatpush1.msra.mxu0 0.0
    %2161 = vmatprep.subr.mxu0 0.0
    %2162 = vmatpush1.msra.mxu0 0.0
    %2163 = vmatprep.subr.mxu0 0.0
    %2164 = vmatpush1.msra.mxu0 0.0
    %2165 = vmatprep.subr.mxu0 0.0
    %2166 = vmatpush1.msra.mxu0 0.0
    %2167 = vmatprep.subr.mxu0 0.0
    %2168 = vmatpush1.msra.mxu0 0.0
    %2169 = vmatprep.subr.mxu0 0.0
    %2170 = vmatpush1.msra.mxu0 0.0
    %2171 = vmatprep.subr.mxu0 0.0
    %2172 = vmatpush1.msra.mxu0 0.0
    %2173 = vmatprep.subr.mxu0 0.0
    %2174 = vmatpush1.msra.mxu0 0.0
    %2175 = vmatprep.subr.mxu0 0.0
    %2176 = vmatpush1.msra.mxu0 0.0
    %2177 = vmatprep.subr.mxu0 0.0
    %2178 = vmatpush1.msra.mxu0 0.0
    %2179 = vmatprep.subr.mxu0 0.0
    %2180 = vmatpush1.msra.mxu0 0.0
    %2181 = vmatprep.subr.mxu0 0.0
    %2182 = vmatpush1.msra.mxu0 0.0
    %2183 = vmatprep.subr.mxu0 0.0
    %2184 = vmatpush1.msra.mxu0 0.0
    %2185 = vmatprep.subr.mxu0 0.0
    %2186 = vmatpush1.msra.mxu0 0.0
    %2187 = vmatprep.subr.mxu0 0.0
    %2188 = vmatpush1.msra.mxu0 0.0
    %2189 = vmatprep.subr.mxu0 0.0
    %2190 = vmatpush1.msra.mxu0 0.0
    %2191 = vmatprep.subr.mxu0 0.0
    %2192 = vmatpush1.msra.mxu0 0.0
    %2193 = vmatprep.subr.mxu0 0.0
    %2194 = vmatpush1.msra.mxu0 0.0
    %2195 = vmatprep.subr.mxu0 0.0
    %2196 = vmatpush1.msra.mxu0 0.0
    %2197 = vmatprep.subr.mxu0 0.0
    %2198 = vmatpush1.msra.mxu0 0.0
    %2199 = vmatprep.subr.mxu0 0.0
    %2200 = vmatpush1.msra.mxu0 0.0
    %2201 = vmatprep.subr.mxu0 0.0
    %2202 = vmatpush1.msra.mxu0 0.0
    %2203 = vmatprep.subr.mxu0 0.0
    %2204 = vmatpush1.msra.mxu0 0.0
    %2205 = vmatprep.subr.mxu0 0.0
    %2206 = vmatpush1.msra.mxu0 0.0
    %2207 = vmatprep.subr.mxu0 0.0
    %2208 = vmatpush1.msra.mxu0 0.0
    %2209 = vmatprep.subr.mxu0 0.0
    %2210 = vmatpush1.msra.mxu0 0.0
    %2211 = vmatprep.subr.mxu0 0.0
    %2212 = vmatpush1.msra.mxu0 0.0
    %2213 = vmatprep.subr.mxu0 0.0
    %2214 = vmatpush1.msra.mxu0 0.0
    %2215 = vmatprep.mubr.f32.mxu0 0.0
    %2216 = vmatmul.mubr.f32.gmra.mrb[0].mxu0 %v2149
    %v2217 = vpop.f32.mrb[0].mxu0
    %v2218 = vadd.f32 0.0, %v2217
    %v2219 = vpop.f32.mrb[0].mxu0
    %2220 = vdwg.mxu0
    %2223 = vrot.lane.b32.xlu0 %v2142, 16
    %v2224 = vpop.permute.xlu0 %2223
    %2225 = vrot.lane.b32.xlu0 %v2218, 16
    %v2226 = vpop.permute.xlu0 %2225
    %v2229 = vsel %vm367, %v1990, %v2224
    %v2230 = vsel %vm367, %v2066, %v2226
    %s2231 = scalar_lea.vmem %s6, 32
    %v2232 = vld [vmem:[%s2231] sm:$0xff]
    %v2233 = vld [vmem:[%s2231 + $0x8] sm:$0xff]
    %v2234 = vld [vmem:[%s2231 + $0x10] sm:$0xff]
    %v2235 = vld [vmem:[%s2231 + $0x18] sm:$0xff]
    %v2237 = vsel %vm176, %v2229, 0
    %v2240 = vsel %vm176, %v2230, 0
    %2242 = vmatprep.subr.mxu0 0.0
    %2243 = vmatpush1.msra.mxu0 %v2232
    %2244 = vmatprep.subr.mxu0 0.0
    %2245 = vmatpush1.msra.mxu0 %v2233
    %2246 = vmatprep.subr.mxu0 0.0
    %2247 = vmatpush1.msra.mxu0 %v2234
    %2248 = vmatprep.subr.mxu0 0.0
    %2249 = vmatpush1.msra.mxu0 %v2235
    %2250 = vmatprep.subr.mxu0 0.0
    %2251 = vmatpush1.msra.mxu0 0.0
    %2252 = vmatprep.subr.mxu0 0.0
    %2253 = vmatpush1.msra.mxu0 0.0
    %2254 = vmatprep.subr.mxu0 0.0
    %2255 = vmatpush1.msra.mxu0 0.0
    %2256 = vmatprep.subr.mxu0 0.0
    %2257 = vmatpush1.msra.mxu0 0.0
    %2258 = vmatprep.subr.mxu0 0.0
    %2259 = vmatpush1.msra.mxu0 0.0
    %2260 = vmatprep.subr.mxu0 0.0
    %2261 = vmatpush1.msra.mxu0 0.0
    %2262 = vmatprep.subr.mxu0 0.0
    %2263 = vmatpush1.msra.mxu0 0.0
    %2264 = vmatprep.subr.mxu0 0.0
    %2265 = vmatpush1.msra.mxu0 0.0
    %2266 = vmatprep.subr.mxu0 0.0
    %2267 = vmatpush1.msra.mxu0 0.0
    %2268 = vmatprep.subr.mxu0 0.0
    %2269 = vmatpush1.msra.mxu0 0.0
    %2270 = vmatprep.subr.mxu0 0.0
    %2271 = vmatpush1.msra.mxu0 0.0
    %2272 = vmatprep.subr.mxu0 0.0
    %2273 = vmatpush1.msra.mxu0 0.0
    %2274 = vmatprep.subr.mxu0 0.0
    %2275 = vmatpush1.msra.mxu0 0.0
    %2276 = vmatprep.subr.mxu0 0.0
    %2277 = vmatpush1.msra.mxu0 0.0
    %2278 = vmatprep.subr.mxu0 0.0
    %2279 = vmatpush1.msra.mxu0 0.0
    %2280 = vmatprep.subr.mxu0 0.0
    %2281 = vmatpush1.msra.mxu0 0.0
    %2282 = vmatprep.subr.mxu0 0.0
    %2283 = vmatpush1.msra.mxu0 0.0
    %2284 = vmatprep.subr.mxu0 0.0
    %2285 = vmatpush1.msra.mxu0 0.0
    %2286 = vmatprep.subr.mxu0 0.0
    %2287 = vmatpush1.msra.mxu0 0.0
    %2288 = vmatprep.subr.mxu0 0.0
    %2289 = vmatpush1.msra.mxu0 0.0
    %2290 = vmatprep.subr.mxu0 0.0
    %2291 = vmatpush1.msra.mxu0 0.0
    %2292 = vmatprep.subr.mxu0 0.0
    %2293 = vmatpush1.msra.mxu0 0.0
    %2294 = vmatprep.subr.mxu0 0.0
    %2295 = vmatpush1.msra.mxu0 0.0
    %2296 = vmatprep.subr.mxu0 0.0
    %2297 = vmatpush1.msra.mxu0 0.0
    %2298 = vmatprep.subr.mxu0 0.0
    %2299 = vmatpush1.msra.mxu0 0.0
    %2300 = vmatprep.subr.mxu0 0.0
    %2301 = vmatpush1.msra.mxu0 0.0
    %2302 = vmatprep.subr.mxu0 0.0
    %2303 = vmatpush1.msra.mxu0 0.0
    %2304 = vmatprep.subr.mxu0 0.0
    %2305 = vmatpush1.msra.mxu0 0.0
    %2306 = vmatprep.mubr.f32.mxu0 0.0
    %2307 = vmatmul.mubr.f32.gmra.mrb[0].mxu0 %v2237
    %v2308 = vpop.f32.mrb[0].mxu0
    %v2309 = vadd.f32 0.0, %v2308
    %v2310 = vpop.f32.mrb[0].mxu0
    %2311 = vmatprep.mubr.f32.mxu0 0.0
    %2312 = vmatmul.mubr.f32.gmra.mrb[0].mxu0 %v2240
    %v2313 = vpop.f32.mrb[0].mxu0
    %v2314 = vadd.f32 0.0, %v2313
    %v2315 = vpop.f32.mrb[0].mxu0
    %2316 = vdwg.mxu0
    %v2317 = vadd.f32 %v1431, %v2309
    %v2318 = vadd.f32 %v1468, %v2314
    %s2319 = scalar_lea.vmem %s7, 8
    %v2320 = vld [vmem:[%s2319] sm:$0xff]
    %s2321 = scalar_lea.vmem [#allocation10], 8
    %v2322 = vld [vmem:[%s2321] sm:$0xff]
    %v2323 = vsel %vm176, %v2317, 0.0
    %2324 = vadd.xlane.f32.xlu0 %v2323
    %v2325 = vpop.xlane.xlu0 %2324
    %v2326 = vrot.slane %v2325, 4
    %v2327 = vadd.f32 %v2325, %v2326
    %v2328 = vrot.slane %v2327, 2
    %v2329 = vadd.f32 %v2327, %v2328
    %v2330 = vrot.slane %v2329, 1
    %v2331 = vadd.f32 %v2329, %v2330
    %s2332 = vtos %v2331
    %v2333 = vrcp.pop 256.0
    %s2334 = vtos %v2333
    %s2335 = smul.f32 %s2332, %s2334
    %v2336 = vstv %s2335
    %v2337 = vsub.f32 %v2317, %v2336
    %v2338 = vmul.f32 %v2337, %v2337
    %v2339 = vsel %vm176, %v2338, 0.0
    %2340 = vadd.xlane.f32.xlu0 %v2339
    %v2341 = vpop.xlane.xlu0 %2340
    %v2342 = vrot.slane %v2341, 4
    %v2343 = vadd.f32 %v2341, %v2342
    %v2344 = vrot.slane %v2343, 2
    %v2345 = vadd.f32 %v2343, %v2344
    %v2346 = vrot.slane %v2345, 1
    %v2347 = vadd.f32 %v2345, %v2346
    %s2348 = vtos %v2347
    %v2349 = vrcp.pop 256.0
    %s2350 = vtos %v2349
    %s2351 = smul.f32 %s2348, %s2350
    %s2352 = sadd.f32 %s2351, 1e-05
    %v2353 = vstv %s2352
    %v2354 = vrsqrt.pop %v2353
    %s2355 = vtos %v2354
    %v2356 = vstv %s2355
    %v2357 = vmul.f32 %v2337, %v2356
    %v2358 = vmul.f32 %v2357, %v2320
    %v2359 = vadd.f32 %v2358, %v2322
    %v2360 = vsel %vm176, %v2318, 0.0
    %2361 = vadd.xlane.f32.xlu0 %v2360
    %v2362 = vpop.xlane.xlu0 %2361
    %v2363 = vrot.slane %v2362, 4
    %v2364 = vadd.f32 %v2362, %v2363
    %v2365 = vrot.slane %v2364, 2
    %v2366 = vadd.f32 %v2364, %v2365
    %v2367 = vrot.slane %v2366, 1
    %v2368 = vadd.f32 %v2366, %v2367
    %s2369 = vtos %v2368
    %v2370 = vrcp.pop 256.0
    %s2371 = vtos %v2370
    %s2372 = smul.f32 %s2369, %s2371
    %v2373 = vstv %s2372
    %v2374 = vsub.f32 %v2318, %v2373
    %v2375 = vmul.f32 %v2374, %v2374
    %v2376 = vsel %vm176, %v2375, 0.0
    %2377 = vadd.xlane.f32.xlu0 %v2376
    %v2378 = vpop.xlane.xlu0 %2377
    %v2379 = vrot.slane %v2378, 4
    %v2380 = vadd.f32 %v2378, %v2379
    %v2381 = vrot.slane %v2380, 2
    %v2382 = vadd.f32 %v2380, %v2381
    %v2383 = vrot.slane %v2382, 1
    %v2384 = vadd.f32 %v2382, %v2383
    %s2385 = vtos %v2384
    %v2386 = vrcp.pop 256.0
    %s2387 = vtos %v2386
    %s2388 = smul.f32 %s2385, %s2387
    %s2389 = sadd.f32 %s2388, 1e-05
    %v2390 = vstv %s2389
    %v2391 = vrsqrt.pop %v2390
    %s2392 = vtos %v2391
    %v2393 = vstv %s2392
    %v2394 = vmul.f32 %v2374, %v2393
    %v2395 = vmul.f32 %v2394, %v2320
    %v2396 = vadd.f32 %v2395, %v2322
    %s2397 = scalar_lea.vmem %s9, 32
    %v2398 = vld [vmem:[%s2397] sm:$0xff]
    %v2399 = vld [vmem:[%s2397 + $0x8] sm:$0xff]
    %v2400 = vld [vmem:[%s2397 + $0x10] sm:$0xff]
    %v2401 = vld [vmem:[%s2397 + $0x18] sm:$0xff]
    %s2402 = scalar_lea.vmem [#allocation12], 1
    %v2403 = vld [vmem:[%s2402] sm:$0x1]
    %v2405 = vlaneseq
    %v2406 = vshrl.u32 %v2405, 7
    %v2407 = vsub.s32 0, %v2406
    %v2408 = vrot.slane %v2403, %v2407
    %v2411 = vsel %vm176, %v2359, 0
    %v2414 = vsel %vm176, %v2396, 0
    %2416 = vmatprep.subr.mxu0 0.0
    %2417 = vmatpush1.msra.mxu0 %v2398
    %2418 = vmatprep.subr.mxu0 0.0
    %2419 = vmatpush1.msra.mxu0 %v2399
    %2420 = vmatprep.subr.mxu0 0.0
    %2421 = vmatpush1.msra.mxu0 %v2400
    %2422 = vmatprep.subr.mxu0 0.0
    %2423 = vmatpush1.msra.mxu0 %v2401
    %2424 = vmatprep.subr.mxu0 0.0
    %2425 = vmatpush1.msra.mxu0 0.0
    %2426 = vmatprep.subr.mxu0 0.0
    %2427 = vmatpush1.msra.mxu0 0.0
    %2428 = vmatprep.subr.mxu0 0.0
    %2429 = vmatpush1.msra.mxu0 0.0
    %2430 = vmatprep.subr.mxu0 0.0
    %2431 = vmatpush1.msra.mxu0 0.0
    %2432 = vmatprep.subr.mxu0 0.0
    %2433 = vmatpush1.msra.mxu0 0.0
    %2434 = vmatprep.subr.mxu0 0.0
    %2435 = vmatpush1.msra.mxu0 0.0
    %2436 = vmatprep.subr.mxu0 0.0
    %2437 = vmatpush1.msra.mxu0 0.0
    %2438 = vmatprep.subr.mxu0 0.0
    %2439 = vmatpush1.msra.mxu0 0.0
    %2440 = vmatprep.subr.mxu0 0.0
    %2441 = vmatpush1.msra.mxu0 0.0
    %2442 = vmatprep.subr.mxu0 0.0
    %2443 = vmatpush1.msra.mxu0 0.0
    %2444 = vmatprep.subr.mxu0 0.0
    %2445 = vmatpush1.msra.mxu0 0.0
    %2446 = vmatprep.subr.mxu0 0.0
    %2447 = vmatpush1.msra.mxu0 0.0
    %2448 = vmatprep.subr.mxu0 0.0
    %2449 = vmatpush1.msra.mxu0 0.0
    %2450 = vmatprep.subr.mxu0 0.0
    %2451 = vmatpush1.msra.mxu0 0.0
    %2452 = vmatprep.subr.mxu0 0.0
    %2453 = vmatpush1.msra.mxu0 0.0
    %2454 = vmatprep.subr.mxu0 0.0
    %2455 = vmatpush1.msra.mxu0 0.0
    %2456 = vmatprep.subr.mxu0 0.0
    %2457 = vmatpush1.msra.mxu0 0.0
    %2458 = vmatprep.subr.mxu0 0.0
    %2459 = vmatpush1.msra.mxu0 0.0
    %2460 = vmatprep.subr.mxu0 0.0
    %2461 = vmatpush1.msra.mxu0 0.0
    %2462 = vmatprep.subr.mxu0 0.0
    %2463 = vmatpush1.msra.mxu0 0.0
    %2464 = vmatprep.subr.mxu0 0.0
    %2465 = vmatpush1.msra.mxu0 0.0
    %2466 = vmatprep.subr.mxu0 0.0
    %2467 = vmatpush1.msra.mxu0 0.0
    %2468 = vmatprep.subr.mxu0 0.0
    %2469 = vmatpush1.msra.mxu0 0.0
    %2470 = vmatprep.subr.mxu0 0.0
    %2471 = vmatpush1.msra.mxu0 0.0
    %2472 = vmatprep.subr.mxu0 0.0
    %2473 = vmatpush1.msra.mxu0 0.0
    %2474 = vmatprep.subr.mxu0 0.0
    %2475 = vmatpush1.msra.mxu0 0.0
    %2476 = vmatprep.subr.mxu0 0.0
    %2477 = vmatpush1.msra.mxu0 0.0
    %2478 = vmatprep.subr.mxu0 0.0
    %2479 = vmatpush1.msra.mxu0 0.0
    %2480 = vmatprep.mubr.f32.mxu0 0.0
    %2481 = vmatmul.mubr.f32.gmra.mrb[0].mxu0 %v2411
    %v2482 = vpop.f32.mrb[0].mxu0
    %v2483 = vadd.f32 %v2408, %v2482
    %v2484 = vpop.f32.mrb[0].mxu0
    %2485 = vmatprep.mubr.f32.mxu0 0.0
    %2486 = vmatmul.mubr.f32.gmra.mrb[0].mxu0 %v2414
    %v2487 = vpop.f32.mrb[0].mxu0
    %v2488 = vadd.f32 %v2408, %v2487
    %v2489 = vpop.f32.mrb[0].mxu0
    %2490 = vdwg.mxu0
    %v2491 = vmax.f32 %v2483, 0.0
    %v2492 = vmax.f32 %v2488, 0.0
    %s2493 = scalar_lea.vmem %s11, 64
    %v2494 = vld [vmem:[%s2493] sm:$0xff]
    %v2495 = vld [vmem:[%s2493 + $0x8] sm:$0xff]
    %v2496 = vld [vmem:[%s2493 + $0x10] sm:$0xff]
    %v2497 = vld [vmem:[%s2493 + $0x18] sm:$0xff]
    %v2498 = vld [vmem:[%s2493 + $0x20] sm:$0xff]
    %v2499 = vld [vmem:[%s2493 + $0x28] sm:$0xff]
    %v2500 = vld [vmem:[%s2493 + $0x30] sm:$0xff]
    %v2501 = vld [vmem:[%s2493 + $0x38] sm:$0xff]
    %s2502 = scalar_lea.vmem [#allocation13], 1
    %v2503 = vld [vmem:[%s2502] sm:$0x1]
    %v2505 = vlaneseq
    %v2506 = vshrl.u32 %v2505, 7
    %v2507 = vsub.s32 0, %v2506
    %v2508 = vrot.slane %v2503, %v2507
    %v2511 = vsel %vm1309, %v2491, 0
    %v2514 = vsel %vm1309, %v2492, 0
    %2516 = vmatprep.subr.mxu0 0.0
    %2517 = vmatpush1.msra.mxu0 %v2494
    %2518 = vmatprep.subr.mxu0 0.0
    %2519 = vmatpush1.msra.mxu0 %v2495
    %2520 = vmatprep.subr.mxu0 0.0
    %2521 = vmatpush1.msra.mxu0 %v2496
    %2522 = vmatprep.subr.mxu0 0.0
    %2523 = vmatpush1.msra.mxu0 %v2497
    %2524 = vmatprep.subr.mxu0 0.0
    %2525 = vmatpush1.msra.mxu0 %v2498
    %2526 = vmatprep.subr.mxu0 0.0
    %2527 = vmatpush1.msra.mxu0 %v2499
    %2528 = vmatprep.subr.mxu0 0.0
    %2529 = vmatpush1.msra.mxu0 %v2500
    %2530 = vmatprep.subr.mxu0 0.0
    %2531 = vmatpush1.msra.mxu0 %v2501
    %2532 = vmatprep.subr.mxu0 0.0
    %2533 = vmatpush1.msra.mxu0 0.0
    %2534 = vmatprep.subr.mxu0 0.0
    %2535 = vmatpush1.msra.mxu0 0.0
    %2536 = vmatprep.subr.mxu0 0.0
    %2537 = vmatpush1.msra.mxu0 0.0
    %2538 = vmatprep.subr.mxu0 0.0
    %2539 = vmatpush1.msra.mxu0 0.0
    %2540 = vmatprep.subr.mxu0 0.0
    %2541 = vmatpush1.msra.mxu0 0.0
    %2542 = vmatprep.subr.mxu0 0.0
    %2543 = vmatpush1.msra.mxu0 0.0
    %2544 = vmatprep.subr.mxu0 0.0
    %2545 = vmatpush1.msra.mxu0 0.0
    %2546 = vmatprep.subr.mxu0 0.0
    %2547 = vmatpush1.msra.mxu0 0.0
    %2548 = vmatprep.subr.mxu0 0.0
    %2549 = vmatpush1.msra.mxu0 0.0
    %2550 = vmatprep.subr.mxu0 0.0
    %2551 = vmatpush1.msra.mxu0 0.0
    %2552 = vmatprep.subr.mxu0 0.0
    %2553 = vmatpush1.msra.mxu0 0.0
    %2554 = vmatprep.subr.mxu0 0.0
    %2555 = vmatpush1.msra.mxu0 0.0
    %2556 = vmatprep.subr.mxu0 0.0
    %2557 = vmatpush1.msra.mxu0 0.0
    %2558 = vmatprep.subr.mxu0 0.0
    %2559 = vmatpush1.msra.mxu0 0.0
    %2560 = vmatprep.subr.mxu0 0.0
    %2561 = vmatpush1.msra.mxu0 0.0
    %2562 = vmatprep.subr.mxu0 0.0
    %2563 = vmatpush1.msra.mxu0 0.0
    %2564 = vmatprep.subr.mxu0 0.0
    %2565 = vmatpush1.msra.mxu0 0.0
    %2566 = vmatprep.subr.mxu0 0.0
    %2567 = vmatpush1.msra.mxu0 0.0
    %2568 = vmatprep.subr.mxu0 0.0
    %2569 = vmatpush1.msra.mxu0 0.0
    %2570 = vmatprep.subr.mxu0 0.0
    %2571 = vmatpush1.msra.mxu0 0.0
    %2572 = vmatprep.subr.mxu0 0.0
    %2573 = vmatpush1.msra.mxu0 0.0
    %2574 = vmatprep.subr.mxu0 0.0
    %2575 = vmatpush1.msra.mxu0 0.0
    %2576 = vmatprep.subr.mxu0 0.0
    %2577 = vmatpush1.msra.mxu0 0.0
    %2578 = vmatprep.subr.mxu0 0.0
    %2579 = vmatpush1.msra.mxu0 0.0
    %2580 = vmatprep.mubr.f32.mxu0 0.0
    %2581 = vmatmul.mubr.f32.gmra.mrb[0].mxu0 %v2511
    %v2582 = vpop.f32.mrb[0].mxu0
    %v2583 = vadd.f32 %v2508, %v2582
    %v2584 = vpop.f32.mrb[0].mxu0
    %2585 = vmatprep.mubr.f32.mxu0 0.0
    %2586 = vmatmul.mubr.f32.gmra.mrb[0].mxu0 %v2514
    %v2587 = vpop.f32.mrb[0].mxu0
    %v2588 = vadd.f32 %v2508, %v2587
    %v2589 = vpop.f32.mrb[0].mxu0
    %2590 = vdwg.mxu0
    %v2591 = vadd.f32 %v2359, %v2583
    %v2592 = vadd.f32 %v2396, %v2588
    %s2593 = scalar_lea.vmem %s13, 8
    %v2594 = vld [vmem:[%s2593] sm:$0xff]
    %s2595 = scalar_lea.vmem %s14, 8
    %v2596 = vld [vmem:[%s2595] sm:$0xff]
    %v2597 = vsel %vm176, %v2591, 0.0
    %2598 = vadd.xlane.f32.xlu0 %v2597
    %v2599 = vpop.xlane.xlu0 %2598
    %v2600 = vrot.slane %v2599, 4
    %v2601 = vadd.f32 %v2599, %v2600
    %v2602 = vrot.slane %v2601, 2
    %v2603 = vadd.f32 %v2601, %v2602
    %v2604 = vrot.slane %v2603, 1
    %v2605 = vadd.f32 %v2603, %v2604
    %s2606 = vtos %v2605
    %v2607 = vrcp.pop 256.0
    %s2608 = vtos %v2607
    %s2609 = smul.f32 %s2606, %s2608
    %v2610 = vstv %s2609
    %v2611 = vsub.f32 %v2591, %v2610
    %v2612 = vmul.f32 %v2611, %v2611
    %v2613 = vsel %vm176, %v2612, 0.0
    %2614 = vadd.xlane.f32.xlu0 %v2613
    %v2615 = vpop.xlane.xlu0 %2614
    %v2616 = vrot.slane %v2615, 4
    %v2617 = vadd.f32 %v2615, %v2616
    %v2618 = vrot.slane %v2617, 2
    %v2619 = vadd.f32 %v2617, %v2618
    %v2620 = vrot.slane %v2619, 1
    %v2621 = vadd.f32 %v2619, %v2620
    %s2622 = vtos %v2621
    %v2623 = vrcp.pop 256.0
    %s2624 = vtos %v2623
    %s2625 = smul.f32 %s2622, %s2624
    %s2626 = sadd.f32 %s2625, 1e-05
    %v2627 = vstv %s2626
    %v2628 = vrsqrt.pop %v2627
    %s2629 = vtos %v2628
    %v2630 = vstv %s2629
    %v2631 = vmul.f32 %v2611, %v2630
    %v2632 = vmul.f32 %v2631, %v2594
    %v2633 = vadd.f32 %v2632, %v2596
    %v2634 = vsel %vm176, %v2592, 0.0
    %2635 = vadd.xlane.f32.xlu0 %v2634
    %v2636 = vpop.xlane.xlu0 %2635
    %v2637 = vrot.slane %v2636, 4
    %v2638 = vadd.f32 %v2636, %v2637
    %v2639 = vrot.slane %v2638, 2
    %v2640 = vadd.f32 %v2638, %v2639
    %v2641 = vrot.slane %v2640, 1
    %v2642 = vadd.f32 %v2640, %v2641
    %s2643 = vtos %v2642
    %v2644 = vrcp.pop 256.0
    %s2645 = vtos %v2644
    %s2646 = smul.f32 %s2643, %s2645
    %v2647 = vstv %s2646
    %v2648 = vsub.f32 %v2592, %v2647
    %v2649 = vmul.f32 %v2648, %v2648
    %v2650 = vsel %vm176, %v2649, 0.0
    %2651 = vadd.xlane.f32.xlu0 %v2650
    %v2652 = vpop.xlane.xlu0 %2651
    %v2653 = vrot.slane %v2652, 4
    %v2654 = vadd.f32 %v2652, %v2653
    %v2655 = vrot.slane %v2654, 2
    %v2656 = vadd.f32 %v2654, %v2655
    %v2657 = vrot.slane %v2656, 1
    %v2658 = vadd.f32 %v2656, %v2657
    %s2659 = vtos %v2658
    %v2660 = vrcp.pop 256.0
    %s2661 = vtos %v2660
    %s2662 = smul.f32 %s2659, %s2661
    %s2663 = sadd.f32 %s2662, 1e-05
    %v2664 = vstv %s2663
    %v2665 = vrsqrt.pop %v2664
    %s2666 = vtos %v2665
    %v2667 = vstv %s2666
    %v2668 = vmul.f32 %v2648, %v2667
    %v2669 = vmul.f32 %v2668, %v2594
    %v2670 = vadd.f32 %v2669, %v2596
    %v2672 = vrot.slane %v2633, 1
    %2673 = vrot.lane.b32.xlu0 %v2672, 32
    %v2674 = vpop.permute.xlu0 %2673
    %v2676 = vrot.slane %v2633, 2
    %2677 = vrot.lane.b32.xlu0 %v2676, 64
    %v2678 = vpop.permute.xlu0 %2677
    %v2680 = vrot.slane %v2633, 3
    %2681 = vrot.lane.b32.xlu0 %v2680, 96
    %v2682 = vpop.permute.xlu0 %2681
    %v2684 = vrot.slane %v2633, 4
    %v2686 = vrot.slane %v2633, 5
    %2687 = vrot.lane.b32.xlu0 %v2686, 32
    %v2688 = vpop.permute.xlu0 %2687
    %v2690 = vrot.slane %v2633, 6
    %2691 = vrot.lane.b32.xlu0 %v2690, 64
    %v2692 = vpop.permute.xlu0 %2691
    %v2694 = vrot.slane %v2633, 7
    %2695 = vrot.lane.b32.xlu0 %v2694, 96
    %v2696 = vpop.permute.xlu0 %2695
    %v2698 = vsel %vm176, %v2633, %v2674
    %v2699 = vsel %vm1309, %v2698, %v2678
    %vm2700 = vcmask 785408
    %v2701 = vsel %vm2700, %v2699, %v2682
    %v2702 = vsel %vm176, %v2684, %v2688
    %v2703 = vsel %vm1309, %v2702, %v2692
    %v2704 = vsel %vm2700, %v2703, %v2696
    %v2706 = vrot.slane %v2670, 1
    %2707 = vrot.lane.b32.xlu0 %v2706, 32
    %v2708 = vpop.permute.xlu0 %2707
    %v2710 = vrot.slane %v2670, 2
    %2711 = vrot.lane.b32.xlu0 %v2710, 64
    %v2712 = vpop.permute.xlu0 %2711
    %v2714 = vrot.slane %v2670, 3
    %2715 = vrot.lane.b32.xlu0 %v2714, 96
    %v2716 = vpop.permute.xlu0 %2715
    %v2718 = vrot.slane %v2670, 4
    %v2720 = vrot.slane %v2670, 5
    %2721 = vrot.lane.b32.xlu0 %v2720, 32
    %v2722 = vpop.permute.xlu0 %2721
    %v2724 = vrot.slane %v2670, 6
    %2725 = vrot.lane.b32.xlu0 %v2724, 64
    %v2726 = vpop.permute.xlu0 %2725
    %v2728 = vrot.slane %v2670, 7
    %2729 = vrot.lane.b32.xlu0 %v2728, 96
    %v2730 = vpop.permute.xlu0 %2729
    %v2732 = vsel %vm176, %v2670, %v2708
    %v2733 = vsel %vm1309, %v2732, %v2712
    %v2734 = vsel %vm2700, %v2733, %v2716
    %v2735 = vsel %vm176, %v2718, %v2722
    %v2736 = vsel %vm1309, %v2735, %v2726
    %v2737 = vsel %vm2700, %v2736, %v2730
    %v2740 = vrot.slane %v2734, 7
    %v2741 = vrot.slane %v2737, 7
    %vm2744 = vcmask 1040384
    %v2745 = vsel %vm2744, %v2701, %v2740
    %v2746 = vsel %vm2744, %v2704, %v2741
    %v2747 = vld [vmem:[#allocation15] sm:$0xff]
    %v2748 = vld [vmem:[#allocation15 + $0x8] sm:$0xff]
    %v2749 = vld [vmem:[#allocation15 + $0x10] sm:$0xff]
    %v2750 = vld [vmem:[#allocation15 + $0x18] sm:$0xff]
    %v2751 = vld [vmem:[#allocation15 + $0x20] sm:$0xff]
    %v2752 = vld [vmem:[#allocation15 + $0x28] sm:$0xff]
    %v2753 = vld [vmem:[#allocation15 + $0x30] sm:$0xff]
    %v2754 = vld [vmem:[#allocation15 + $0x38] sm:$0xff]
    %v2755 = vld [vmem:[#allocation15 + $0x40] sm:$0xff]
    %v2756 = vld [vmem:[#allocation15 + $0x48] sm:$0xff]
    %v2757 = vld [vmem:[#allocation15 + $0x50] sm:$0xff]
    %v2758 = vld [vmem:[#allocation15 + $0x58] sm:$0xff]
    %v2759 = vld [vmem:[#allocation15 + $0x60] sm:$0xff]
    %v2760 = vld [vmem:[#allocation15 + $0x68] sm:$0xff]
    %v2761 = vld [vmem:[#allocation15 + $0x70] sm:$0xff]
    %v2762 = vld [vmem:[#allocation15 + $0x78] sm:$0xff]
    %v2763 = vld [vmem:[#allocation15 + $0x80] sm:$0xff]
    %v2764 = vld [vmem:[#allocation15 + $0x88] sm:$0xff]
    %v2765 = vld [vmem:[#allocation15 + $0x90] sm:$0xff]
    %v2766 = vld [vmem:[#allocation15 + $0x98] sm:$0xff]
    %v2767 = vld [vmem:[#allocation15 + $0xa0] sm:$0xff]
    %v2768 = vld [vmem:[#allocation15 + $0xa8] sm:$0xff]
    %v2769 = vld [vmem:[#allocation15 + $0xb0] sm:$0xff]
    %v2770 = vld [vmem:[#allocation15 + $0xb8] sm:$0xff]
    %v2771 = vld [vmem:[#allocation15 + $0xc0] sm:$0xff]
    %v2772 = vld [vmem:[#allocation15 + $0xc8] sm:$0xff]
    %v2773 = vld [vmem:[#allocation15 + $0xd0] sm:$0xff]
    %v2774 = vld [vmem:[#allocation15 + $0xd8] sm:$0xff]
    %v2775 = vld [vmem:[#allocation15 + $0xe0] sm:$0xff]
    %v2776 = vld [vmem:[#allocation15 + $0xe8] sm:$0xff]
    %v2777 = vld [vmem:[#allocation15 + $0xf0] sm:$0xff]
    %v2778 = vld [vmem:[#allocation15 + $0xf8] sm:$0xff]
    %v2779 = vld [vmem:[%s16] sm:$0x1]
    %v2781 = vlaneseq
    %v2782 = vshrl.u32 %v2781, 7
    %v2783 = vsub.s32 0, %v2782
    %v2784 = vrot.slane %v2779, %v2783
    %2786 = vmatprep.subr.mxu0 0.0
    %2787 = vmatpush1.msra.mxu0 %v2747
    %2788 = vmatprep.subr.mxu0 0.0
    %2789 = vmatpush1.msra.mxu0 %v2748
    %2790 = vmatprep.subr.mxu0 0.0
    %2791 = vmatpush1.msra.mxu0 %v2749
    %2792 = vmatprep.subr.mxu0 0.0
    %2793 = vmatpush1.msra.mxu0 %v2750
    %2794 = vmatprep.subr.mxu0 0.0
    %2795 = vmatpush1.msra.mxu0 %v2751
    %2796 = vmatprep.subr.mxu0 0.0
    %2797 = vmatpush1.msra.mxu0 %v2752
    %2798 = vmatprep.subr.mxu0 0.0
    %2799 = vmatpush1.msra.mxu0 %v2753
    %2800 = vmatprep.subr.mxu0 0.0
    %2801 = vmatpush1.msra.mxu0 %v2754
    %2802 = vmatprep.subr.mxu0 0.0
    %2803 = vmatpush1.msra.mxu0 %v2755
    %2804 = vmatprep.subr.mxu0 0.0
    %2805 = vmatpush1.msra.mxu0 %v2756
    %2806 = vmatprep.subr.mxu0 0.0
    %2807 = vmatpush1.msra.mxu0 %v2757
    %2808 = vmatprep.subr.mxu0 0.0
    %2809 = vmatpush1.msra.mxu0 %v2758
    %2810 = vmatprep.subr.mxu0 0.0
    %2811 = vmatpush1.msra.mxu0 %v2759
    %2812 = vmatprep.subr.mxu0 0.0
    %2813 = vmatpush1.msra.mxu0 %v2760
    %2814 = vmatprep.subr.mxu0 0.0
    %2815 = vmatpush1.msra.mxu0 %v2761
    %2816 = vmatprep.subr.mxu0 0.0
    %2817 = vmatpush1.msra.mxu0 %v2762
    %2818 = vmatprep.subr.mxu0 0.0
    %2819 = vmatpush1.msra.mxu0 %v2763
    %2820 = vmatprep.subr.mxu0 0.0
    %2821 = vmatpush1.msra.mxu0 %v2764
    %2822 = vmatprep.subr.mxu0 0.0
    %2823 = vmatpush1.msra.mxu0 %v2765
    %2824 = vmatprep.subr.mxu0 0.0
    %2825 = vmatpush1.msra.mxu0 %v2766
    %2826 = vmatprep.subr.mxu0 0.0
    %2827 = vmatpush1.msra.mxu0 %v2767
    %2828 = vmatprep.subr.mxu0 0.0
    %2829 = vmatpush1.msra.mxu0 %v2768
    %2830 = vmatprep.subr.mxu0 0.0
    %2831 = vmatpush1.msra.mxu0 %v2769
    %2832 = vmatprep.subr.mxu0 0.0
    %2833 = vmatpush1.msra.mxu0 %v2770
    %2834 = vmatprep.subr.mxu0 0.0
    %2835 = vmatpush1.msra.mxu0 %v2771
    %2836 = vmatprep.subr.mxu0 0.0
    %2837 = vmatpush1.msra.mxu0 %v2772
    %2838 = vmatprep.subr.mxu0 0.0
    %2839 = vmatpush1.msra.mxu0 %v2773
    %2840 = vmatprep.subr.mxu0 0.0
    %2841 = vmatpush1.msra.mxu0 %v2774
    %2842 = vmatprep.subr.mxu0 0.0
    %2843 = vmatpush1.msra.mxu0 %v2775
    %2844 = vmatprep.subr.mxu0 0.0
    %2845 = vmatpush1.msra.mxu0 %v2776
    %2846 = vmatprep.subr.mxu0 0.0
    %2847 = vmatpush1.msra.mxu0 %v2777
    %2848 = vmatprep.subr.mxu0 0.0
    %2849 = vmatpush1.msra.mxu0 %v2778
    %2850 = vmatprep.mubr.f32.mxu0 %v2746
    %2851 = vmatmul.mubr.f32.gmra.mrb[0].mxu0 %v2745
    %v2852 = vpop.f32.mrb[0].mxu0
    %v2853 = vadd.f32 %v2784, %v2852
    %v2854 = vpop.f32.mrb[0].mxu0
    %2855 = vdwg.mxu0
    %vm2856 = vcmask 1041408
    %v2857 = vsel %vm2856, %v2853, -inf
    %2858 = vmax.xlane.f32.xlu0 %v2857
    %v2859 = vpop.xlane.xlu0 %2858
    %v2860 = vsub.f32 %v2853, %v2859
    %v2861 = vmul.f32 %v2860, 1.442695
    %v2862 = vpow.pop %v2861
    %v2863 = vsel %vm2856, %v2862, 0.0
    %2864 = vadd.xlane.f32.xlu0 %v2863
    %v2865 = vpop.xlane.xlu0 %2864
    %v2866 = vrcp.pop %v2865
    %v2867 = vmul.f32 %v2862, %v2866
    %2868 = vst [vmem:[#allocation16] sm:$0x3] %v2867
    // Predicated region
    $region102: #{tpu_custom_call.1} parent=1 // pred_check
      _
    $region103: #{tpu_custom_call.1} parent=1 // pred_check_branch
      %2870 = sbr.rel (0) target = $region105
    $region104: #{tpu_custom_call.1} parent=1 // pred_region
      %s2872 = ssub.s32 32, 32
      %2873 = vsyncadd [#allocation4], %s2872
      %s2875 = sshll.u32 [#allocation16], 4
      %s2876 = int_to_ptr.vmem [resolvable:$true] %s2875
      %2878 = dma.vmem_to_hbm [thread:$0]  %s2876, 32, %s17, [#allocation4]
    $region105: #{tpu_custom_call.1} parent=1 // pred_fallthru
      _
    // Predicated region
    $region106: #{tpu_custom_call.1} parent=1 // pred_check
      _
    $region107: #{tpu_custom_call.1} parent=1 // pred_check_branch
      %2880 = sbr.rel (0) target = $region109
    $region108: #{tpu_custom_call.1} parent=1 // pred_region
      %2881 = dma.done [#allocation4], 32
    $region109: #{tpu_custom_call.1} parent=1 // pred_fallthru
      _
    %2882 = vsyncpa [#allocation3], 1
    %2883 = vsyncpa [#allocation8], 1
    %2884 = vsyncpa [#allocation11], 1
    %2885 = vsyncpa [#allocation14], 1
    %2886 = vsyncpa [#allocation4], 1
    %2887 = vsyncpa [#allocation5], 1

</llo_original>
